<compile_context>
chip_gen: v7x
topology: tpu7x:2x2x1
jax: 0.10.0
libtpu: 0.0.40
codegen_flags: <defaults>
</compile_context>

<pallas_src>
import functools

import jax
import jax.numpy as jnp
from jax.experimental import pallas as pl
from jax.experimental.pallas import tpu as pltpu

IN_FEAT = 784    # 28*28, unpadded (full last dim of x -> legal block width)
HID = 1024       # 1000 -> 1024 (lane multiple)
N_OUT = 128      # classes (10) -> 128 lane-dense output slab


def fused_mlp_kernel(x_ref, w1_ref, b1_ref, w2_ref, b2_ref, w3_ref, b3_ref,
                     o_ref):
    x = x_ref[...]                                    # (TM, 784) f32

    # Layer 1: (TM, 784) @ (784, 1024) + bias, ReLU
    h = jnp.dot(x.astype(jnp.bfloat16), w1_ref[...],
                preferred_element_type=jnp.float32)
    h = jnp.maximum(h + b1_ref[...], 0.0)

    # Layer 2: (TM, 1024) @ (1024, 1024) + bias, ReLU
    h = jnp.dot(h.astype(jnp.bfloat16), w2_ref[...],
                preferred_element_type=jnp.float32)
    h = jnp.maximum(h + b2_ref[...], 0.0)

    # Layer 3 (classifier; trailing ReLU kept to match the PyTorch module)
    y = jnp.dot(h.astype(jnp.bfloat16), w3_ref[...],
                preferred_element_type=jnp.float32)
    y = jnp.maximum(y + b3_ref[...], 0.0)

    o_ref[...] = y.astype(o_ref.dtype)


@functools.partial(jax.jit, static_argnames=("classes",))
def mlp_forward(x, params, classes=10):
    """Fused forward pass. x: (B, 1, 28, 28) (or any (B, ..., total=784))."""
    (w1, b1), (w2, b2), (w3, b3) = params
    B = x.shape[0]
    x = x.reshape(B, -1).astype(jnp.float32)          # torch: x.flatten(1)
    assert x.shape[1] == IN_FEAT

    # Batch tiling:
    #  B <= 256          -> single full-batch block
    #  256 < B <= 512    -> TM=256 (>= 2 grid steps, keeps both v7x TCs busy)
    #  B > 512           -> TM=512 (amortize per-step overhead)
    if B <= 256:
        tm = B
    elif B <= 512:
        tm = 256
    else:
        tm = 512
    bp = pl.cdiv(B, tm) * tm
    if bp != B:
        x = jnp.pad(x, ((0, bp - B), (0, 0)))

    const = lambda i: (0, 0)   # grid-resident blocks: DMA'd once, kept in VMEM

    grid_spec = pltpu.PrefetchScalarGridSpec(
        num_scalar_prefetch=0,
        grid=(bp // tm,),
        in_specs=[
            pl.BlockSpec((tm, IN_FEAT), lambda i: (i, 0)),   # activations
            pl.BlockSpec((IN_FEAT, HID), const),             # w1 (resident)
            pl.BlockSpec((1, HID), const),                   # b1
            pl.BlockSpec((HID, HID), const),                 # w2
            pl.BlockSpec((1, HID), const),                   # b2
            pl.BlockSpec((HID, N_OUT), const),               # w3
            pl.BlockSpec((1, N_OUT), const),                 # b3
        ],
        out_specs=pl.BlockSpec((tm, N_OUT), lambda i: (i, 0)),
    )

    out = pl.pallas_call(
        fused_mlp_kernel,
        out_shape=jax.ShapeDtypeStruct((bp, N_OUT), jnp.float32),
        grid_spec=grid_spec,
        compiler_params=pltpu.CompilerParams(
            dimension_semantics=("parallel",),
            vmem_limit_bytes=32 * 1024 * 1024,
        ),
    )(x, w1, b1, w2, b2, w3, b3)

    return out[:B, :classes]


def init_params(key, classes=10):
    """Synthetic nn.Linear-style params, stored transposed (in, out), padded to
    lane-aligned output shapes, weights in bf16 / biases in f32."""
    dims = [(784, 1000, IN_FEAT, HID),     # layer 1 (K stays unpadded: 784)
            (1000, 1000, HID, HID),        # layer 2
            (1000, classes, HID, N_OUT)]   # layer 3
    params = []
    for fan_in, fan_out, k_pad, n_pad in dims:
        key, kw, kb = jax.random.split(key, 3)
        bound = 1.0 / jnp.sqrt(fan_in)
        w = jax.random.uniform(kw, (fan_in, fan_out), jnp.float32,
                               minval=-bound, maxval=bound)
        b = jax.random.uniform(kb, (fan_out,), jnp.float32,
                               minval=-bound, maxval=bound)
        w_pad = jnp.zeros((k_pad, n_pad), jnp.float32).at[:fan_in, :fan_out].set(w)
        b_pad = jnp.zeros((1, n_pad), jnp.float32).at[0, :fan_out].set(b)
        params.append((w_pad.astype(jnp.bfloat16), b_pad))
    return params


def mlp_reference(x, params, classes=10):
    """Pure-JAX reference using the same bf16 weights / bf16 activations."""
    h = x.reshape(x.shape[0], -1).astype(jnp.float32)
    for w, b in params:
        h = jnp.dot(h.astype(jnp.bfloat16), w,
                    preferred_element_type=jnp.float32) + b
        h = jnp.maximum(h, 0.0)
    return h[:, :classes]


if __name__ == "__main__":
    key = jax.random.PRNGKey(0)
    kx, kp = jax.random.split(key)
    # (B, 1, 28, 28) -> 784 features after flatten(1).
    x = jax.random.normal(kx, (2, 1, 28, 28), jnp.float32)
    params = init_params(kp, classes=10)

    out = mlp_forward(x, params, classes=10)
    jax.block_until_ready(out)

    ref = mlp_reference(x, params, classes=10)
    assert out.shape == (2, 10), out.shape
    assert jnp.allclose(out, ref, atol=2e-2, rtol=2e-2), (
        float(jnp.max(jnp.abs(out - ref))))

    print("KERNEL_OK")
</pallas_src>

<mosaic_0001>
module attributes {stable_mosaic.version = 11 : i64} {
  func.func @fused_mlp_kernel(%arg0: i32, %arg1: memref<2x784xf32, #tpu.memory_space<vmem>>, %arg2: memref<784x1024xbf16, #tpu.memory_space<vmem>>, %arg3: memref<1x1024xf32, #tpu.memory_space<vmem>>, %arg4: memref<1024x1024xbf16, #tpu.memory_space<vmem>>, %arg5: memref<1x1024xf32, #tpu.memory_space<vmem>>, %arg6: memref<1024x128xbf16, #tpu.memory_space<vmem>>, %arg7: memref<1x128xf32, #tpu.memory_space<vmem>>, %arg8: memref<2x128xf32, #tpu.memory_space<vmem>>) attributes {dimension_semantics = [#tpu.dimension_semantics<parallel>], iteration_bounds = array<i64: 1>, scalar_prefetch = 0 : i64, scratch_operands = 0 : i64, tpu.core_type = #tpu.core_type<tc>, window_params = [{transform_indices = @transform_0, window_bounds = array<i64: 2, 784>}, {pipeline_mode = #tpu.pipeline_mode<synchronous>, transform_indices = @transform_1, window_bounds = array<i64: 784, 1024>}, {pipeline_mode = #tpu.pipeline_mode<synchronous>, transform_indices = @transform_2, window_bounds = array<i64: 1, 1024>}, {pipeline_mode = #tpu.pipeline_mode<synchronous>, transform_indices = @transform_3, window_bounds = array<i64: 1024, 1024>}, {pipeline_mode = #tpu.pipeline_mode<synchronous>, transform_indices = @transform_4, window_bounds = array<i64: 1, 1024>}, {pipeline_mode = #tpu.pipeline_mode<synchronous>, transform_indices = @transform_5, window_bounds = array<i64: 1024, 128>}, {pipeline_mode = #tpu.pipeline_mode<synchronous>, transform_indices = @transform_6, window_bounds = array<i64: 1, 128>}, {transform_indices = @transform_7, window_bounds = array<i64: 2, 128>}]} {
    %c0 = arith.constant 0 : index
    %c0_0 = arith.constant 0 : index
    %0 = vector.load %arg1[%c0, %c0_0] : memref<2x784xf32, #tpu.memory_space<vmem>>, vector<2x784xf32>
    %1 = arith.truncf %0 : vector<2x784xf32> to vector<2x784xbf16>
    %c0_1 = arith.constant 0 : index
    %c0_2 = arith.constant 0 : index
    %2 = vector.load %arg2[%c0_1, %c0_2] : memref<784x1024xbf16, #tpu.memory_space<vmem>>, vector<784x1024xbf16>
    %cst = arith.constant dense<0.000000e+00> : vector<2x1024xf32>
    %3 = tpu.matmul %1, %2, %cst {dimension_numbers = #tpu.dot_dimension_numbers<[1], [0], [0], [1], [0, 0, 1, 1], [], []>} : vector<2x784xbf16>, vector<784x1024xbf16>, vector<2x1024xf32> -> vector<2x1024xf32>
    %c0_3 = arith.constant 0 : index
    %c0_4 = arith.constant 0 : index
    %4 = vector.load %arg3[%c0_3, %c0_4] : memref<1x1024xf32, #tpu.memory_space<vmem>>, vector<1x1024xf32>
    %5 = vector.broadcast %4 : vector<1x1024xf32> to vector<2x1024xf32>
    %6 = arith.addf %3, %5 : vector<2x1024xf32>
    %cst_5 = arith.constant 0.000000e+00 : f32
    %7 = vector.broadcast %cst_5 : f32 to vector<2x1024xf32>
    %8 = arith.maximumf %6, %7 : vector<2x1024xf32>
    %9 = arith.truncf %8 : vector<2x1024xf32> to vector<2x1024xbf16>
    %c0_6 = arith.constant 0 : index
    %c0_7 = arith.constant 0 : index
    %10 = vector.load %arg4[%c0_6, %c0_7] : memref<1024x1024xbf16, #tpu.memory_space<vmem>>, vector<1024x1024xbf16>
    %cst_8 = arith.constant dense<0.000000e+00> : vector<2x1024xf32>
    %11 = tpu.matmul %9, %10, %cst_8 {dimension_numbers = #tpu.dot_dimension_numbers<[1], [0], [0], [1], [0, 0, 1, 1], [], []>} : vector<2x1024xbf16>, vector<1024x1024xbf16>, vector<2x1024xf32> -> vector<2x1024xf32>
    %c0_9 = arith.constant 0 : index
    %c0_10 = arith.constant 0 : index
    %12 = vector.load %arg5[%c0_9, %c0_10] : memref<1x1024xf32, #tpu.memory_space<vmem>>, vector<1x1024xf32>
    %13 = vector.broadcast %12 : vector<1x1024xf32> to vector<2x1024xf32>
    %14 = arith.addf %11, %13 : vector<2x1024xf32>
    %cst_11 = arith.constant 0.000000e+00 : f32
    %15 = vector.broadcast %cst_11 : f32 to vector<2x1024xf32>
    %16 = arith.maximumf %14, %15 : vector<2x1024xf32>
    %17 = arith.truncf %16 : vector<2x1024xf32> to vector<2x1024xbf16>
    %c0_12 = arith.constant 0 : index
    %c0_13 = arith.constant 0 : index
    %18 = vector.load %arg6[%c0_12, %c0_13] : memref<1024x128xbf16, #tpu.memory_space<vmem>>, vector<1024x128xbf16>
    %cst_14 = arith.constant dense<0.000000e+00> : vector<2x128xf32>
    %19 = tpu.matmul %17, %18, %cst_14 {dimension_numbers = #tpu.dot_dimension_numbers<[1], [0], [0], [1], [0, 0, 1, 1], [], []>} : vector<2x1024xbf16>, vector<1024x128xbf16>, vector<2x128xf32> -> vector<2x128xf32>
    %c0_15 = arith.constant 0 : index
    %c0_16 = arith.constant 0 : index
    %20 = vector.load %arg7[%c0_15, %c0_16] : memref<1x128xf32, #tpu.memory_space<vmem>>, vector<1x128xf32>
    %21 = vector.broadcast %20 : vector<1x128xf32> to vector<2x128xf32>
    %22 = arith.addf %19, %21 : vector<2x128xf32>
    %cst_17 = arith.constant 0.000000e+00 : f32
    %23 = vector.broadcast %cst_17 : f32 to vector<2x128xf32>
    %24 = arith.maximumf %22, %23 : vector<2x128xf32>
    %c0_18 = arith.constant 0 : index
    %c0_19 = arith.constant 0 : index
    %25 = vector.load %arg8[%c0_18, %c0_19] : memref<2x128xf32, #tpu.memory_space<vmem>>, vector<2x128xf32>
    tpu.vector_store %arg8[%c0_18, %c0_19], %24 {strides = array<i32>} : memref<2x128xf32, #tpu.memory_space<vmem>>, vector<2x128xf32>,
    return
  }
  func.func @transform_0(%arg0: i32) -> (i32, i32) {
    %c0_i32 = arith.constant 0 : i32
    %c0_i32_0 = arith.constant 0 : i32
    return %arg0, %c0_i32 : i32, i32
  }
  func.func @transform_1(%arg0: i32) -> (i32, i32) {
    %c0_i32 = arith.constant 0 : i32
    %c0_i32_0 = arith.constant 0 : i32
    %c0_i32_1 = arith.constant 0 : i32
    return %c0_i32, %c0_i32_0 : i32, i32
  }
  func.func @transform_2(%arg0: i32) -> (i32, i32) {
    %c0_i32 = arith.constant 0 : i32
    %c0_i32_0 = arith.constant 0 : i32
    %c0_i32_1 = arith.constant 0 : i32
    return %c0_i32, %c0_i32_0 : i32, i32
  }
  func.func @transform_3(%arg0: i32) -> (i32, i32) {
    %c0_i32 = arith.constant 0 : i32
    %c0_i32_0 = arith.constant 0 : i32
    %c0_i32_1 = arith.constant 0 : i32
    return %c0_i32, %c0_i32_0 : i32, i32
  }
  func.func @transform_4(%arg0: i32) -> (i32, i32) {
    %c0_i32 = arith.constant 0 : i32
    %c0_i32_0 = arith.constant 0 : i32
    %c0_i32_1 = arith.constant 0 : i32
    return %c0_i32, %c0_i32_0 : i32, i32
  }
  func.func @transform_5(%arg0: i32) -> (i32, i32) {
    %c0_i32 = arith.constant 0 : i32
    %c0_i32_0 = arith.constant 0 : i32
    %c0_i32_1 = arith.constant 0 : i32
    return %c0_i32, %c0_i32_0 : i32, i32
  }
  func.func @transform_6(%arg0: i32) -> (i32, i32) {
    %c0_i32 = arith.constant 0 : i32
    %c0_i32_0 = arith.constant 0 : i32
    %c0_i32_1 = arith.constant 0 : i32
    return %c0_i32, %c0_i32_0 : i32, i32
  }
  func.func @transform_7(%arg0: i32) -> (i32, i32) {
    %c0_i32 = arith.constant 0 : i32
    %c0_i32_0 = arith.constant 0 : i32
    return %arg0, %c0_i32 : i32, i32
  }
}

</mosaic_0001>

<llo_original>
// kernel: mlp_forward.1
$region0: #{mlp_forward.1}
  #allocation0 [shape = 'u32[]', space=smem, size = 0x4, offset = 0x4, fixed_abs, tag = 'smem constant byte address 0x4 - core index']
  #allocation1 [shape = 'u32[144,128]{1,0:T(1,128)}', space=vmem, size = 0x12000, scoped, tag = 'internal scratch']
  %s0 = inlined_call_operand.vmem [shape: f32[2,784], index: 0, kind: input, shape index: {}]
  %s1 = inlined_call_operand.hbm [shape: bf16[784,1024], index: 1, kind: input, shape index: {}]
  %s2 = inlined_call_operand.hbm [shape: f32[1,1024], index: 2, kind: input, shape index: {}]
  %s3 = inlined_call_operand.hbm [shape: bf16[1024,1024], index: 3, kind: input, shape index: {}]
  %s4 = inlined_call_operand.hbm [shape: f32[1,1024], index: 4, kind: input, shape index: {}]
  %s5 = inlined_call_operand.hbm [shape: bf16[1024,128], index: 5, kind: input, shape index: {}]
  %s6 = inlined_call_operand.hbm [shape: f32[1,128], index: 6, kind: input, shape index: {}]
  %s7 = inlined_call_operand.hbm [shape: f32[2,128], index: 7, kind: output, shape index: {}]
  %s8 = sld [smem:[#allocation0]]
  $region62: #{mlp_forward.1} parent=0
    _
  %s10 = ssub.s32 1, %s8
  %s11 = scalar_select 0, %s10, %s8
  $region1: #{mlp_forward.1} parent=0
    #allocation2 [shape = 'u8[1605632]{0}', space=vmem, size = 0x188000, scoped, tag = 'input window, operand 1, single buffered']
    #allocation3 [shape = 's32[1]{0}', space=sflag, size = 0x4, scoped, tag = 'scoped memory for mlp_forward.1']
    #allocation4 [shape = 's32[1]{0}', space=sflag, size = 0x4, scoped, tag = 'scoped memory for mlp_forward.1']
    #allocation5 [shape = 'u8[4096]{0}', space=vmem, size = 0x1000, scoped, tag = 'input window, operand 2, single buffered']
    #allocation6 [shape = 's32[1]{0}', space=sflag, size = 0x4, scoped, tag = 'scoped memory for mlp_forward.1']
    #allocation7 [shape = 'u8[2097152]{0}', space=vmem, size = 0x200000, scoped, tag = 'input window, operand 3, single buffered']
    #allocation8 [shape = 'u8[4096]{0}', space=vmem, size = 0x1000, scoped, tag = 'input window, operand 4, single buffered']
    #allocation9 [shape = 's32[1]{0}', space=sflag, size = 0x4, scoped, tag = 'scoped memory for mlp_forward.1']
    #allocation10 [shape = 'u8[262144]{0}', space=vmem, size = 0x40000, scoped, tag = 'input window, operand 5, single buffered']
    #allocation11 [shape = 'u8[512]{0}', space=vmem, size = 0x400, scoped, tag = 'input window, operand 6, single buffered']
    #allocation12 [shape = 's32[1]{0}', space=sflag, size = 0x4, scoped, tag = 'scoped memory for mlp_forward.1']
    #allocation13 [shape = 'u8[1024]{0}', space=vmem, size = 0x400, scoped, tag = 'output window, operand 0, single buffered']
    %12 = vsyncpa [#allocation3], 0
    %13 = vsyncpa [#allocation6], 0
    %14 = vsyncpa [#allocation9], 0
    %15 = vsyncpa [#allocation12], 0
    %16 = vsyncpa [#allocation4], 0
    // Predicated region
    $region2: #{mlp_forward.1} parent=1 // pred_check
      _
    $region3: #{mlp_forward.1} parent=1 // pred_check_branch
      %18 = sbr.rel (0) target = $region5
    $region4: #{mlp_forward.1} parent=1 // pred_region
      _
    $region5: #{mlp_forward.1} parent=1 // pred_fallthru
      _
    // Predicated region
    $region6: #{mlp_forward.1} parent=1 // pred_check
      _
    $region7: #{mlp_forward.1} parent=1 // pred_check_branch
      %20 = sbr.rel (0) target = $region9
    $region8: #{mlp_forward.1} parent=1 // pred_region
      %s22 = ssub.s32 50176, 50176
      %23 = vsyncadd [#allocation3], %s22
      %s24 = sshll.u32 [#allocation2], 4
      %s25 = int_to_ptr.vmem [resolvable:$true] %s24
      %30 = dma.hbm_to_vmem [thread:$0]  %s1, 50176, %s25, [#allocation3], 512, 512, 32
    $region9: #{mlp_forward.1} parent=1 // pred_fallthru
      _
    // Predicated region
    $region10: #{mlp_forward.1} parent=1 // pred_check
      _
    $region11: #{mlp_forward.1} parent=1 // pred_check_branch
      %32 = sbr.rel (0) target = $region13
    $region12: #{mlp_forward.1} parent=1 // pred_region
      %s34 = ssub.s32 128, 128
      %35 = vsyncadd [#allocation6], %s34
      %s37 = sshll.u32 [#allocation5], 4
      %s38 = int_to_ptr.vmem [resolvable:$true] %s37
      %40 = dma.hbm_to_vmem [thread:$0]  %s2, 128, %s38, [#allocation6]
    $region13: #{mlp_forward.1} parent=1 // pred_fallthru
      _
    // Predicated region
    $region14: #{mlp_forward.1} parent=1 // pred_check
      _
    $region15: #{mlp_forward.1} parent=1 // pred_check_branch
      %42 = sbr.rel (0) target = $region17
    $region16: #{mlp_forward.1} parent=1 // pred_region
      %s44 = ssub.s32 65536, 65536
      %45 = vsyncadd [#allocation6], %s44
      %s46 = sshll.u32 [#allocation7], 4
      %s47 = int_to_ptr.vmem [resolvable:$true] %s46
      %52 = dma.hbm_to_vmem [thread:$0]  %s3, 65536, %s47, [#allocation6], 512, 512, 32
    $region17: #{mlp_forward.1} parent=1 // pred_fallthru
      _
    // Predicated region
    $region18: #{mlp_forward.1} parent=1 // pred_check
      _
    $region19: #{mlp_forward.1} parent=1 // pred_check_branch
      %54 = sbr.rel (0) target = $region21
    $region20: #{mlp_forward.1} parent=1 // pred_region
      %s56 = ssub.s32 128, 128
      %57 = vsyncadd [#allocation9], %s56
      %s59 = sshll.u32 [#allocation8], 4
      %s60 = int_to_ptr.vmem [resolvable:$true] %s59
      %62 = dma.hbm_to_vmem [thread:$0]  %s4, 128, %s60, [#allocation9]
    $region21: #{mlp_forward.1} parent=1 // pred_fallthru
      _
    // Predicated region
    $region22: #{mlp_forward.1} parent=1 // pred_check
      _
    $region23: #{mlp_forward.1} parent=1 // pred_check_branch
      %64 = sbr.rel (0) target = $region25
    $region24: #{mlp_forward.1} parent=1 // pred_region
      %s66 = ssub.s32 8192, 8192
      %67 = vsyncadd [#allocation9], %s66
      %s68 = sshll.u32 [#allocation10], 4
      %s69 = int_to_ptr.vmem [resolvable:$true] %s68
      %74 = dma.hbm_to_vmem [thread:$0]  %s5, 8192, %s69, [#allocation9], 64, 64, 4
    $region25: #{mlp_forward.1} parent=1 // pred_fallthru
      _
    // Predicated region
    $region26: #{mlp_forward.1} parent=1 // pred_check
      _
    $region27: #{mlp_forward.1} parent=1 // pred_check_branch
      %76 = sbr.rel (0) target = $region29
    $region28: #{mlp_forward.1} parent=1 // pred_region
      %s78 = ssub.s32 16, 16
      %79 = vsyncadd [#allocation12], %s78
      %s81 = sshll.u32 [#allocation11], 4
      %s82 = int_to_ptr.vmem [resolvable:$true] %s81
      %84 = dma.hbm_to_vmem [thread:$0]  %s6, 16, %s82, [#allocation12]
    $region29: #{mlp_forward.1} parent=1 // pred_fallthru
      _
    // Predicated region
    $region30: #{mlp_forward.1} parent=1 // pred_check
      _
    $region31: #{mlp_forward.1} parent=1 // pred_check_branch
      %86 = sbr.rel (0) target = $region33
    $region32: #{mlp_forward.1} parent=1 // pred_region
      %87 = dma.done [#allocation3], 50176
    $region33: #{mlp_forward.1} parent=1 // pred_fallthru
      _
    // Predicated region
    $region34: #{mlp_forward.1} parent=1 // pred_check
      _
    $region35: #{mlp_forward.1} parent=1 // pred_check_branch
      %89 = sbr.rel (0) target = $region37
    $region36: #{mlp_forward.1} parent=1 // pred_region
      %90 = dma.done [#allocation6], 128
    $region37: #{mlp_forward.1} parent=1 // pred_fallthru
      _
    // Predicated region
    $region38: #{mlp_forward.1} parent=1 // pred_check
      _
    $region39: #{mlp_forward.1} parent=1 // pred_check_branch
      %92 = sbr.rel (0) target = $region41
    $region40: #{mlp_forward.1} parent=1 // pred_region
      %93 = dma.done [#allocation6], 65536
    $region41: #{mlp_forward.1} parent=1 // pred_fallthru
      _
    // Predicated region
    $region42: #{mlp_forward.1} parent=1 // pred_check
      _
    $region43: #{mlp_forward.1} parent=1 // pred_check_branch
      %95 = sbr.rel (0) target = $region45
    $region44: #{mlp_forward.1} parent=1 // pred_region
      %96 = dma.done [#allocation9], 128
    $region45: #{mlp_forward.1} parent=1 // pred_fallthru
      _
    // Predicated region
    $region46: #{mlp_forward.1} parent=1 // pred_check
      _
    $region47: #{mlp_forward.1} parent=1 // pred_check_branch
      %98 = sbr.rel (0) target = $region49
    $region48: #{mlp_forward.1} parent=1 // pred_region
      %99 = dma.done [#allocation9], 8192
    $region49: #{mlp_forward.1} parent=1 // pred_fallthru
      _
    // Predicated region
    $region50: #{mlp_forward.1} parent=1 // pred_check
      _
    $region51: #{mlp_forward.1} parent=1 // pred_check_branch
      %101 = sbr.rel (0) target = $region53
    $region52: #{mlp_forward.1} parent=1 // pred_region
      %102 = dma.done [#allocation12], 16
    $region53: #{mlp_forward.1} parent=1 // pred_fallthru
      _
    %v104 = vld [vmem:[%s0] sm:$0xff]
    %v105 = vld [vmem:[%s0 + $0x8] sm:$0x3f]
    %v108 = vcombine.high %v104, %v104
    %v110 = vunpack.c.l.s4 1983009808
    %v111 = vunpack.c.0.s8 %v110
    %v112 = vlaneseq
    %v113 = vshrl.u32 %v112, 7
    %v114 = vsub.s32 %v111, %v113
    %v115 = vrot.slane %v104, %v114
    %v117 = vunpack.c.l.s4 1983009808
    %v118 = vunpack.c.0.s8 %v117
    %v119 = vlaneseq
    %v120 = vshrl.u32 %v119, 7
    %v121 = vsub.s32 %v118, %v120
    %v122 = vrot.slane %v108, %v121
    %v123 = vcombine.high %v115, %v115
    %v124 = vcombine.high %v122, %v122
    %v125 = vcombine.high %v105, %v105
    %v127 = vunpack.c.l.s4 1983009808
    %v128 = vunpack.c.0.s8 %v127
    %v129 = vlaneseq
    %v130 = vshrl.u32 %v129, 7
    %v131 = vsub.s32 %v128, %v130
    %v132 = vrot.slane %v105, %v131
    %v134 = vunpack.c.l.s4 1983009808
    %v135 = vunpack.c.0.s8 %v134
    %v136 = vlaneseq
    %v137 = vshrl.u32 %v136, 7
    %v138 = vsub.s32 %v135, %v137
    %v139 = vrot.slane %v125, %v138
    %v140 = vcombine.high %v132, %v132
    %v148 = vpack.c.bf16 %v115, %v115
    %v149 = vpack.c.bf16 %v123, %v123
    %v150 = vpack.c.bf16 %v122, %v122
    %v151 = vpack.c.bf16 %v124, %v124
    %v152 = vpack.c.bf16 %v132, %v132
    %v153 = vpack.c.bf16 %v140, %v140
    %v154 = vpack.c.bf16 %v139, %v139
    %v155 = vld [vmem:[#allocation2] sm:$0xff]
    %v156 = vld [vmem:[#allocation2 + $0x8] sm:$0xff]
    %v157 = vld [vmem:[#allocation2 + $0x10] sm:$0xff]
    %v158 = vld [vmem:[#allocation2 + $0x18] sm:$0xff]
    %v159 = vld [vmem:[#allocation2 + $0x20] sm:$0xff]
    %v160 = vld [vmem:[#allocation2 + $0x28] sm:$0xff]
    %v161 = vld [vmem:[#allocation2 + $0x30] sm:$0xff]
    %v162 = vld [vmem:[#allocation2 + $0x38] sm:$0xff]
    %v163 = vld [vmem:[#allocation2 + $0x40] sm:$0xff]
    %v164 = vld [vmem:[#allocation2 + $0x48] sm:$0xff]
    %v165 = vld [vmem:[#allocation2 + $0x50] sm:$0xff]
    %v166 = vld [vmem:[#allocation2 + $0x58] sm:$0xff]
    %v167 = vld [vmem:[#allocation2 + $0x60] sm:$0xff]
    %v168 = vld [vmem:[#allocation2 + $0x68] sm:$0xff]
    %v169 = vld [vmem:[#allocation2 + $0x70] sm:$0xff]
    %v170 = vld [vmem:[#allocation2 + $0x78] sm:$0xff]
    %v171 = vld [vmem:[#allocation2 + $0x80] sm:$0xff]
    %v172 = vld [vmem:[#allocation2 + $0x88] sm:$0xff]
    %v173 = vld [vmem:[#allocation2 + $0x90] sm:$0xff]
    %v174 = vld [vmem:[#allocation2 + $0x98] sm:$0xff]
    %v175 = vld [vmem:[#allocation2 + $0xa0] sm:$0xff]
    %v176 = vld [vmem:[#allocation2 + $0xa8] sm:$0xff]
    %v177 = vld [vmem:[#allocation2 + $0xb0] sm:$0xff]
    %v178 = vld [vmem:[#allocation2 + $0xb8] sm:$0xff]
    %v179 = vld [vmem:[#allocation2 + $0xc0] sm:$0xff]
    %v180 = vld [vmem:[#allocation2 + $0xc8] sm:$0xff]
    %v181 = vld [vmem:[#allocation2 + $0xd0] sm:$0xff]
    %v182 = vld [vmem:[#allocation2 + $0xd8] sm:$0xff]
    %v183 = vld [vmem:[#allocation2 + $0xe0] sm:$0xff]
    %v184 = vld [vmem:[#allocation2 + $0xe8] sm:$0xff]
    %v185 = vld [vmem:[#allocation2 + $0xf0] sm:$0xff]
    %v186 = vld [vmem:[#allocation2 + $0xf8] sm:$0xff]
    %v187 = vld [vmem:[#allocation2 + $0x100] sm:$0xff]
    %v188 = vld [vmem:[#allocation2 + $0x108] sm:$0xff]
    %v189 = vld [vmem:[#allocation2 + $0x110] sm:$0xff]
    %v190 = vld [vmem:[#allocation2 + $0x118] sm:$0xff]
    %v191 = vld [vmem:[#allocation2 + $0x120] sm:$0xff]
    %v192 = vld [vmem:[#allocation2 + $0x128] sm:$0xff]
    %v193 = vld [vmem:[#allocation2 + $0x130] sm:$0xff]
    %v194 = vld [vmem:[#allocation2 + $0x138] sm:$0xff]
    %v195 = vld [vmem:[#allocation2 + $0x140] sm:$0xff]
    %v196 = vld [vmem:[#allocation2 + $0x148] sm:$0xff]
    %v197 = vld [vmem:[#allocation2 + $0x150] sm:$0xff]
    %v198 = vld [vmem:[#allocation2 + $0x158] sm:$0xff]
    %v199 = vld [vmem:[#allocation2 + $0x160] sm:$0xff]
    %v200 = vld [vmem:[#allocation2 + $0x168] sm:$0xff]
    %v201 = vld [vmem:[#allocation2 + $0x170] sm:$0xff]
    %v202 = vld [vmem:[#allocation2 + $0x178] sm:$0xff]
    %v203 = vld [vmem:[#allocation2 + $0x180] sm:$0xff]
    %v204 = vld [vmem:[#allocation2 + $0x188] sm:$0xff]
    %v205 = vld [vmem:[#allocation2 + $0x190] sm:$0xff]
    %v206 = vld [vmem:[#allocation2 + $0x198] sm:$0xff]
    %v207 = vld [vmem:[#allocation2 + $0x1a0] sm:$0xff]
    %v208 = vld [vmem:[#allocation2 + $0x1a8] sm:$0xff]
    %v209 = vld [vmem:[#allocation2 + $0x1b0] sm:$0xff]
    %v210 = vld [vmem:[#allocation2 + $0x1b8] sm:$0xff]
    %v211 = vld [vmem:[#allocation2 + $0x1c0] sm:$0xff]
    %v212 = vld [vmem:[#allocation2 + $0x1c8] sm:$0xff]
    %v213 = vld [vmem:[#allocation2 + $0x1d0] sm:$0xff]
    %v214 = vld [vmem:[#allocation2 + $0x1d8] sm:$0xff]
    %v215 = vld [vmem:[#allocation2 + $0x1e0] sm:$0xff]
    %v216 = vld [vmem:[#allocation2 + $0x1e8] sm:$0xff]
    %v217 = vld [vmem:[#allocation2 + $0x1f0] sm:$0xff]
    %v218 = vld [vmem:[#allocation2 + $0x1f8] sm:$0xff]
    %v219 = vld [vmem:[#allocation2 + $0x200] sm:$0xff]
    %v220 = vld [vmem:[#allocation2 + $0x208] sm:$0xff]
    %v221 = vld [vmem:[#allocation2 + $0x210] sm:$0xff]
    %v222 = vld [vmem:[#allocation2 + $0x218] sm:$0xff]
    %v223 = vld [vmem:[#allocation2 + $0x220] sm:$0xff]
    %v224 = vld [vmem:[#allocation2 + $0x228] sm:$0xff]
    %v225 = vld [vmem:[#allocation2 + $0x230] sm:$0xff]
    %v226 = vld [vmem:[#allocation2 + $0x238] sm:$0xff]
    %v227 = vld [vmem:[#allocation2 + $0x240] sm:$0xff]
    %v228 = vld [vmem:[#allocation2 + $0x248] sm:$0xff]
    %v229 = vld [vmem:[#allocation2 + $0x250] sm:$0xff]
    %v230 = vld [vmem:[#allocation2 + $0x258] sm:$0xff]
    %v231 = vld [vmem:[#allocation2 + $0x260] sm:$0xff]
    %v232 = vld [vmem:[#allocation2 + $0x268] sm:$0xff]
    %v233 = vld [vmem:[#allocation2 + $0x270] sm:$0xff]
    %v234 = vld [vmem:[#allocation2 + $0x278] sm:$0xff]
    %v235 = vld [vmem:[#allocation2 + $0x280] sm:$0xff]
    %v236 = vld [vmem:[#allocation2 + $0x288] sm:$0xff]
    %v237 = vld [vmem:[#allocation2 + $0x290] sm:$0xff]
    %v238 = vld [vmem:[#allocation2 + $0x298] sm:$0xff]
    %v239 = vld [vmem:[#allocation2 + $0x2a0] sm:$0xff]
    %v240 = vld [vmem:[#allocation2 + $0x2a8] sm:$0xff]
    %v241 = vld [vmem:[#allocation2 + $0x2b0] sm:$0xff]
    %v242 = vld [vmem:[#allocation2 + $0x2b8] sm:$0xff]
    %v243 = vld [vmem:[#allocation2 + $0x2c0] sm:$0xff]
    %v244 = vld [vmem:[#allocation2 + $0x2c8] sm:$0xff]
    %v245 = vld [vmem:[#allocation2 + $0x2d0] sm:$0xff]
    %v246 = vld [vmem:[#allocation2 + $0x2d8] sm:$0xff]
    %v247 = vld [vmem:[#allocation2 + $0x2e0] sm:$0xff]
    %v248 = vld [vmem:[#allocation2 + $0x2e8] sm:$0xff]
    %v249 = vld [vmem:[#allocation2 + $0x2f0] sm:$0xff]
    %v250 = vld [vmem:[#allocation2 + $0x2f8] sm:$0xff]
    %v251 = vld [vmem:[#allocation2 + $0x300] sm:$0xff]
    %v252 = vld [vmem:[#allocation2 + $0x308] sm:$0xff]
    %v253 = vld [vmem:[#allocation2 + $0x310] sm:$0xff]
    %v254 = vld [vmem:[#allocation2 + $0x318] sm:$0xff]
    %v255 = vld [vmem:[#allocation2 + $0x320] sm:$0xff]
    %v256 = vld [vmem:[#allocation2 + $0x328] sm:$0xff]
    %v257 = vld [vmem:[#allocation2 + $0x330] sm:$0xff]
    %v258 = vld [vmem:[#allocation2 + $0x338] sm:$0xff]
    %v259 = vld [vmem:[#allocation2 + $0x340] sm:$0xff]
    %v260 = vld [vmem:[#allocation2 + $0x348] sm:$0xff]
    %v261 = vld [vmem:[#allocation2 + $0x350] sm:$0xff]
    %v262 = vld [vmem:[#allocation2 + $0x358] sm:$0xff]
    %v263 = vld [vmem:[#allocation2 + $0x360] sm:$0xff]
    %v264 = vld [vmem:[#allocation2 + $0x368] sm:$0xff]
    %v265 = vld [vmem:[#allocation2 + $0x370] sm:$0xff]
    %v266 = vld [vmem:[#allocation2 + $0x378] sm:$0xff]
    %v267 = vld [vmem:[#allocation2 + $0x380] sm:$0xff]
    %v268 = vld [vmem:[#allocation2 + $0x388] sm:$0xff]
    %v269 = vld [vmem:[#allocation2 + $0x390] sm:$0xff]
    %v270 = vld [vmem:[#allocation2 + $0x398] sm:$0xff]
    %v271 = vld [vmem:[#allocation2 + $0x3a0] sm:$0xff]
    %v272 = vld [vmem:[#allocation2 + $0x3a8] sm:$0xff]
    %v273 = vld [vmem:[#allocation2 + $0x3b0] sm:$0xff]
    %v274 = vld [vmem:[#allocation2 + $0x3b8] sm:$0xff]
    %v275 = vld [vmem:[#allocation2 + $0x3c0] sm:$0xff]
    %v276 = vld [vmem:[#allocation2 + $0x3c8] sm:$0xff]
    %v277 = vld [vmem:[#allocation2 + $0x3d0] sm:$0xff]
    %v278 = vld [vmem:[#allocation2 + $0x3d8] sm:$0xff]
    %v279 = vld [vmem:[#allocation2 + $0x3e0] sm:$0xff]
    %v280 = vld [vmem:[#allocation2 + $0x3e8] sm:$0xff]
    %v281 = vld [vmem:[#allocation2 + $0x3f0] sm:$0xff]
    %v282 = vld [vmem:[#allocation2 + $0x3f8] sm:$0xff]
    %v283 = vld [vmem:[#allocation2 + $0x400] sm:$0xff]
    %v284 = vld [vmem:[#allocation2 + $0x408] sm:$0xff]
    %v285 = vld [vmem:[#allocation2 + $0x410] sm:$0xff]
    %v286 = vld [vmem:[#allocation2 + $0x418] sm:$0xff]
    %v287 = vld [vmem:[#allocation2 + $0x420] sm:$0xff]
    %v288 = vld [vmem:[#allocation2 + $0x428] sm:$0xff]
    %v289 = vld [vmem:[#allocation2 + $0x430] sm:$0xff]
    %v290 = vld [vmem:[#allocation2 + $0x438] sm:$0xff]
    %v291 = vld [vmem:[#allocation2 + $0x440] sm:$0xff]
    %v292 = vld [vmem:[#allocation2 + $0x448] sm:$0xff]
    %v293 = vld [vmem:[#allocation2 + $0x450] sm:$0xff]
    %v294 = vld [vmem:[#allocation2 + $0x458] sm:$0xff]
    %v295 = vld [vmem:[#allocation2 + $0x460] sm:$0xff]
    %v296 = vld [vmem:[#allocation2 + $0x468] sm:$0xff]
    %v297 = vld [vmem:[#allocation2 + $0x470] sm:$0xff]
    %v298 = vld [vmem:[#allocation2 + $0x478] sm:$0xff]
    %v299 = vld [vmem:[#allocation2 + $0x480] sm:$0xff]
    %v300 = vld [vmem:[#allocation2 + $0x488] sm:$0xff]
    %v301 = vld [vmem:[#allocation2 + $0x490] sm:$0xff]
    %v302 = vld [vmem:[#allocation2 + $0x498] sm:$0xff]
    %v303 = vld [vmem:[#allocation2 + $0x4a0] sm:$0xff]
    %v304 = vld [vmem:[#allocation2 + $0x4a8] sm:$0xff]
    %v305 = vld [vmem:[#allocation2 + $0x4b0] sm:$0xff]
    %v306 = vld [vmem:[#allocation2 + $0x4b8] sm:$0xff]
    %v307 = vld [vmem:[#allocation2 + $0x4c0] sm:$0xff]
    %v308 = vld [vmem:[#allocation2 + $0x4c8] sm:$0xff]
    %v309 = vld [vmem:[#allocation2 + $0x4d0] sm:$0xff]
    %v310 = vld [vmem:[#allocation2 + $0x4d8] sm:$0xff]
    %v311 = vld [vmem:[#allocation2 + $0x4e0] sm:$0xff]
    %v312 = vld [vmem:[#allocation2 + $0x4e8] sm:$0xff]
    %v313 = vld [vmem:[#allocation2 + $0x4f0] sm:$0xff]
    %v314 = vld [vmem:[#allocation2 + $0x4f8] sm:$0xff]
    %v315 = vld [vmem:[#allocation2 + $0x500] sm:$0xff]
    %v316 = vld [vmem:[#allocation2 + $0x508] sm:$0xff]
    %v317 = vld [vmem:[#allocation2 + $0x510] sm:$0xff]
    %v318 = vld [vmem:[#allocation2 + $0x518] sm:$0xff]
    %v319 = vld [vmem:[#allocation2 + $0x520] sm:$0xff]
    %v320 = vld [vmem:[#allocation2 + $0x528] sm:$0xff]
    %v321 = vld [vmem:[#allocation2 + $0x530] sm:$0xff]
    %v322 = vld [vmem:[#allocation2 + $0x538] sm:$0xff]
    %v323 = vld [vmem:[#allocation2 + $0x540] sm:$0xff]
    %v324 = vld [vmem:[#allocation2 + $0x548] sm:$0xff]
    %v325 = vld [vmem:[#allocation2 + $0x550] sm:$0xff]
    %v326 = vld [vmem:[#allocation2 + $0x558] sm:$0xff]
    %v327 = vld [vmem:[#allocation2 + $0x560] sm:$0xff]
    %v328 = vld [vmem:[#allocation2 + $0x568] sm:$0xff]
    %v329 = vld [vmem:[#allocation2 + $0x570] sm:$0xff]
    %v330 = vld [vmem:[#allocation2 + $0x578] sm:$0xff]
    %v331 = vld [vmem:[#allocation2 + $0x580] sm:$0xff]
    %v332 = vld [vmem:[#allocation2 + $0x588] sm:$0xff]
    %v333 = vld [vmem:[#allocation2 + $0x590] sm:$0xff]
    %v334 = vld [vmem:[#allocation2 + $0x598] sm:$0xff]
    %v335 = vld [vmem:[#allocation2 + $0x5a0] sm:$0xff]
    %v336 = vld [vmem:[#allocation2 + $0x5a8] sm:$0xff]
    %v337 = vld [vmem:[#allocation2 + $0x5b0] sm:$0xff]
    %v338 = vld [vmem:[#allocation2 + $0x5b8] sm:$0xff]
    %v339 = vld [vmem:[#allocation2 + $0x5c0] sm:$0xff]
    %v340 = vld [vmem:[#allocation2 + $0x5c8] sm:$0xff]
    %v341 = vld [vmem:[#allocation2 + $0x5d0] sm:$0xff]
    %v342 = vld [vmem:[#allocation2 + $0x5d8] sm:$0xff]
    %v343 = vld [vmem:[#allocation2 + $0x5e0] sm:$0xff]
    %v344 = vld [vmem:[#allocation2 + $0x5e8] sm:$0xff]
    %v345 = vld [vmem:[#allocation2 + $0x5f0] sm:$0xff]
    %v346 = vld [vmem:[#allocation2 + $0x5f8] sm:$0xff]
    %v347 = vld [vmem:[#allocation2 + $0x600] sm:$0xff]
    %v348 = vld [vmem:[#allocation2 + $0x608] sm:$0xff]
    %v349 = vld [vmem:[#allocation2 + $0x610] sm:$0xff]
    %v350 = vld [vmem:[#allocation2 + $0x618] sm:$0xff]
    %v351 = vld [vmem:[#allocation2 + $0x620] sm:$0xff]
    %v352 = vld [vmem:[#allocation2 + $0x628] sm:$0xff]
    %v353 = vld [vmem:[#allocation2 + $0x630] sm:$0xff]
    %v354 = vld [vmem:[#allocation2 + $0x638] sm:$0xff]
    %v355 = vld [vmem:[#allocation2 + $0x640] sm:$0xff]
    %v356 = vld [vmem:[#allocation2 + $0x648] sm:$0xff]
    %v357 = vld [vmem:[#allocation2 + $0x650] sm:$0xff]
    %v358 = vld [vmem:[#allocation2 + $0x658] sm:$0xff]
    %v359 = vld [vmem:[#allocation2 + $0x660] sm:$0xff]
    %v360 = vld [vmem:[#allocation2 + $0x668] sm:$0xff]
    %v361 = vld [vmem:[#allocation2 + $0x670] sm:$0xff]
    %v362 = vld [vmem:[#allocation2 + $0x678] sm:$0xff]
    %v363 = vld [vmem:[#allocation2 + $0x680] sm:$0xff]
    %v364 = vld [vmem:[#allocation2 + $0x688] sm:$0xff]
    %v365 = vld [vmem:[#allocation2 + $0x690] sm:$0xff]
    %v366 = vld [vmem:[#allocation2 + $0x698] sm:$0xff]
    %v367 = vld [vmem:[#allocation2 + $0x6a0] sm:$0xff]
    %v368 = vld [vmem:[#allocation2 + $0x6a8] sm:$0xff]
    %v369 = vld [vmem:[#allocation2 + $0x6b0] sm:$0xff]
    %v370 = vld [vmem:[#allocation2 + $0x6b8] sm:$0xff]
    %v371 = vld [vmem:[#allocation2 + $0x6c0] sm:$0xff]
    %v372 = vld [vmem:[#allocation2 + $0x6c8] sm:$0xff]
    %v373 = vld [vmem:[#allocation2 + $0x6d0] sm:$0xff]
    %v374 = vld [vmem:[#allocation2 + $0x6d8] sm:$0xff]
    %v375 = vld [vmem:[#allocation2 + $0x6e0] sm:$0xff]
    %v376 = vld [vmem:[#allocation2 + $0x6e8] sm:$0xff]
    %v377 = vld [vmem:[#allocation2 + $0x6f0] sm:$0xff]
    %v378 = vld [vmem:[#allocation2 + $0x6f8] sm:$0xff]
    %v379 = vld [vmem:[#allocation2 + $0x700] sm:$0xff]
    %v380 = vld [vmem:[#allocation2 + $0x708] sm:$0xff]
    %v381 = vld [vmem:[#allocation2 + $0x710] sm:$0xff]
    %v382 = vld [vmem:[#allocation2 + $0x718] sm:$0xff]
    %v383 = vld [vmem:[#allocation2 + $0x720] sm:$0xff]
    %v384 = vld [vmem:[#allocation2 + $0x728] sm:$0xff]
    %v385 = vld [vmem:[#allocation2 + $0x730] sm:$0xff]
    %v386 = vld [vmem:[#allocation2 + $0x738] sm:$0xff]
    %v387 = vld [vmem:[#allocation2 + $0x740] sm:$0xff]
    %v388 = vld [vmem:[#allocation2 + $0x748] sm:$0xff]
    %v389 = vld [vmem:[#allocation2 + $0x750] sm:$0xff]
    %v390 = vld [vmem:[#allocation2 + $0x758] sm:$0xff]
    %v391 = vld [vmem:[#allocation2 + $0x760] sm:$0xff]
    %v392 = vld [vmem:[#allocation2 + $0x768] sm:$0xff]
    %v393 = vld [vmem:[#allocation2 + $0x770] sm:$0xff]
    %v394 = vld [vmem:[#allocation2 + $0x778] sm:$0xff]
    %v395 = vld [vmem:[#allocation2 + $0x780] sm:$0xff]
    %v396 = vld [vmem:[#allocation2 + $0x788] sm:$0xff]
    %v397 = vld [vmem:[#allocation2 + $0x790] sm:$0xff]
    %v398 = vld [vmem:[#allocation2 + $0x798] sm:$0xff]
    %v399 = vld [vmem:[#allocation2 + $0x7a0] sm:$0xff]
    %v400 = vld [vmem:[#allocation2 + $0x7a8] sm:$0xff]
    %v401 = vld [vmem:[#allocation2 + $0x7b0] sm:$0xff]
    %v402 = vld [vmem:[#allocation2 + $0x7b8] sm:$0xff]
    %v403 = vld [vmem:[#allocation2 + $0x7c0] sm:$0xff]
    %v404 = vld [vmem:[#allocation2 + $0x7c8] sm:$0xff]
    %v405 = vld [vmem:[#allocation2 + $0x7d0] sm:$0xff]
    %v406 = vld [vmem:[#allocation2 + $0x7d8] sm:$0xff]
    %v407 = vld [vmem:[#allocation2 + $0x7e0] sm:$0xff]
    %v408 = vld [vmem:[#allocation2 + $0x7e8] sm:$0xff]
    %v409 = vld [vmem:[#allocation2 + $0x7f0] sm:$0xff]
    %v410 = vld [vmem:[#allocation2 + $0x7f8] sm:$0xff]
    %v411 = vld [vmem:[#allocation2 + $0x800] sm:$0xff]
    %v412 = vld [vmem:[#allocation2 + $0x808] sm:$0xff]
    %v413 = vld [vmem:[#allocation2 + $0x810] sm:$0xff]
    %v414 = vld [vmem:[#allocation2 + $0x818] sm:$0xff]
    %v415 = vld [vmem:[#allocation2 + $0x820] sm:$0xff]
    %v416 = vld [vmem:[#allocation2 + $0x828] sm:$0xff]
    %v417 = vld [vmem:[#allocation2 + $0x830] sm:$0xff]
    %v418 = vld [vmem:[#allocation2 + $0x838] sm:$0xff]
    %v419 = vld [vmem:[#allocation2 + $0x840] sm:$0xff]
    %v420 = vld [vmem:[#allocation2 + $0x848] sm:$0xff]
    %v421 = vld [vmem:[#allocation2 + $0x850] sm:$0xff]
    %v422 = vld [vmem:[#allocation2 + $0x858] sm:$0xff]
    %v423 = vld [vmem:[#allocation2 + $0x860] sm:$0xff]
    %v424 = vld [vmem:[#allocation2 + $0x868] sm:$0xff]
    %v425 = vld [vmem:[#allocation2 + $0x870] sm:$0xff]
    %v426 = vld [vmem:[#allocation2 + $0x878] sm:$0xff]
    %v427 = vld [vmem:[#allocation2 + $0x880] sm:$0xff]
    %v428 = vld [vmem:[#allocation2 + $0x888] sm:$0xff]
    %v429 = vld [vmem:[#allocation2 + $0x890] sm:$0xff]
    %v430 = vld [vmem:[#allocation2 + $0x898] sm:$0xff]
    %v431 = vld [vmem:[#allocation2 + $0x8a0] sm:$0xff]
    %v432 = vld [vmem:[#allocation2 + $0x8a8] sm:$0xff]
    %v433 = vld [vmem:[#allocation2 + $0x8b0] sm:$0xff]
    %v434 = vld [vmem:[#allocation2 + $0x8b8] sm:$0xff]
    %v435 = vld [vmem:[#allocation2 + $0x8c0] sm:$0xff]
    %v436 = vld [vmem:[#allocation2 + $0x8c8] sm:$0xff]
    %v437 = vld [vmem:[#allocation2 + $0x8d0] sm:$0xff]
    %v438 = vld [vmem:[#allocation2 + $0x8d8] sm:$0xff]
    %v439 = vld [vmem:[#allocation2 + $0x8e0] sm:$0xff]
    %v440 = vld [vmem:[#allocation2 + $0x8e8] sm:$0xff]
    %v441 = vld [vmem:[#allocation2 + $0x8f0] sm:$0xff]
    %v442 = vld [vmem:[#allocation2 + $0x8f8] sm:$0xff]
    %v443 = vld [vmem:[#allocation2 + $0x900] sm:$0xff]
    %v444 = vld [vmem:[#allocation2 + $0x908] sm:$0xff]
    %v445 = vld [vmem:[#allocation2 + $0x910] sm:$0xff]
    %v446 = vld [vmem:[#allocation2 + $0x918] sm:$0xff]
    %v447 = vld [vmem:[#allocation2 + $0x920] sm:$0xff]
    %v448 = vld [vmem:[#allocation2 + $0x928] sm:$0xff]
    %v449 = vld [vmem:[#allocation2 + $0x930] sm:$0xff]
    %v450 = vld [vmem:[#allocation2 + $0x938] sm:$0xff]
    %v451 = vld [vmem:[#allocation2 + $0x940] sm:$0xff]
    %v452 = vld [vmem:[#allocation2 + $0x948] sm:$0xff]
    %v453 = vld [vmem:[#allocation2 + $0x950] sm:$0xff]
    %v454 = vld [vmem:[#allocation2 + $0x958] sm:$0xff]
    %v455 = vld [vmem:[#allocation2 + $0x960] sm:$0xff]
    %v456 = vld [vmem:[#allocation2 + $0x968] sm:$0xff]
    %v457 = vld [vmem:[#allocation2 + $0x970] sm:$0xff]
    %v458 = vld [vmem:[#allocation2 + $0x978] sm:$0xff]
    %v459 = vld [vmem:[#allocation2 + $0x980] sm:$0xff]
    %v460 = vld [vmem:[#allocation2 + $0x988] sm:$0xff]
    %v461 = vld [vmem:[#allocation2 + $0x990] sm:$0xff]
    %v462 = vld [vmem:[#allocation2 + $0x998] sm:$0xff]
    %v463 = vld [vmem:[#allocation2 + $0x9a0] sm:$0xff]
    %v464 = vld [vmem:[#allocation2 + $0x9a8] sm:$0xff]
    %v465 = vld [vmem:[#allocation2 + $0x9b0] sm:$0xff]
    %v466 = vld [vmem:[#allocation2 + $0x9b8] sm:$0xff]
    %v467 = vld [vmem:[#allocation2 + $0x9c0] sm:$0xff]
    %v468 = vld [vmem:[#allocation2 + $0x9c8] sm:$0xff]
    %v469 = vld [vmem:[#allocation2 + $0x9d0] sm:$0xff]
    %v470 = vld [vmem:[#allocation2 + $0x9d8] sm:$0xff]
    %v471 = vld [vmem:[#allocation2 + $0x9e0] sm:$0xff]
    %v472 = vld [vmem:[#allocation2 + $0x9e8] sm:$0xff]
    %v473 = vld [vmem:[#allocation2 + $0x9f0] sm:$0xff]
    %v474 = vld [vmem:[#allocation2 + $0x9f8] sm:$0xff]
    %v475 = vld [vmem:[#allocation2 + $0xa00] sm:$0xff]
    %v476 = vld [vmem:[#allocation2 + $0xa08] sm:$0xff]
    %v477 = vld [vmem:[#allocation2 + $0xa10] sm:$0xff]
    %v478 = vld [vmem:[#allocation2 + $0xa18] sm:$0xff]
    %v479 = vld [vmem:[#allocation2 + $0xa20] sm:$0xff]
    %v480 = vld [vmem:[#allocation2 + $0xa28] sm:$0xff]
    %v481 = vld [vmem:[#allocation2 + $0xa30] sm:$0xff]
    %v482 = vld [vmem:[#allocation2 + $0xa38] sm:$0xff]
    %v483 = vld [vmem:[#allocation2 + $0xa40] sm:$0xff]
    %v484 = vld [vmem:[#allocation2 + $0xa48] sm:$0xff]
    %v485 = vld [vmem:[#allocation2 + $0xa50] sm:$0xff]
    %v486 = vld [vmem:[#allocation2 + $0xa58] sm:$0xff]
    %v487 = vld [vmem:[#allocation2 + $0xa60] sm:$0xff]
    %v488 = vld [vmem:[#allocation2 + $0xa68] sm:$0xff]
    %v489 = vld [vmem:[#allocation2 + $0xa70] sm:$0xff]
    %v490 = vld [vmem:[#allocation2 + $0xa78] sm:$0xff]
    %v491 = vld [vmem:[#allocation2 + $0xa80] sm:$0xff]
    %v492 = vld [vmem:[#allocation2 + $0xa88] sm:$0xff]
    %v493 = vld [vmem:[#allocation2 + $0xa90] sm:$0xff]
    %v494 = vld [vmem:[#allocation2 + $0xa98] sm:$0xff]
    %v495 = vld [vmem:[#allocation2 + $0xaa0] sm:$0xff]
    %v496 = vld [vmem:[#allocation2 + $0xaa8] sm:$0xff]
    %v497 = vld [vmem:[#allocation2 + $0xab0] sm:$0xff]
    %v498 = vld [vmem:[#allocation2 + $0xab8] sm:$0xff]
    %v499 = vld [vmem:[#allocation2 + $0xac0] sm:$0xff]
    %v500 = vld [vmem:[#allocation2 + $0xac8] sm:$0xff]
    %v501 = vld [vmem:[#allocation2 + $0xad0] sm:$0xff]
    %v502 = vld [vmem:[#allocation2 + $0xad8] sm:$0xff]
    %v503 = vld [vmem:[#allocation2 + $0xae0] sm:$0xff]
    %v504 = vld [vmem:[#allocation2 + $0xae8] sm:$0xff]
    %v505 = vld [vmem:[#allocation2 + $0xaf0] sm:$0xff]
    %v506 = vld [vmem:[#allocation2 + $0xaf8] sm:$0xff]
    %v507 = vld [vmem:[#allocation2 + $0xb00] sm:$0xff]
    %v508 = vld [vmem:[#allocation2 + $0xb08] sm:$0xff]
    %v509 = vld [vmem:[#allocation2 + $0xb10] sm:$0xff]
    %v510 = vld [vmem:[#allocation2 + $0xb18] sm:$0xff]
    %v511 = vld [vmem:[#allocation2 + $0xb20] sm:$0xff]
    %v512 = vld [vmem:[#allocation2 + $0xb28] sm:$0xff]
    %v513 = vld [vmem:[#allocation2 + $0xb30] sm:$0xff]
    %v514 = vld [vmem:[#allocation2 + $0xb38] sm:$0xff]
    %v515 = vld [vmem:[#allocation2 + $0xb40] sm:$0xff]
    %v516 = vld [vmem:[#allocation2 + $0xb48] sm:$0xff]
    %v517 = vld [vmem:[#allocation2 + $0xb50] sm:$0xff]
    %v518 = vld [vmem:[#allocation2 + $0xb58] sm:$0xff]
    %v519 = vld [vmem:[#allocation2 + $0xb60] sm:$0xff]
    %v520 = vld [vmem:[#allocation2 + $0xb68] sm:$0xff]
    %v521 = vld [vmem:[#allocation2 + $0xb70] sm:$0xff]
    %v522 = vld [vmem:[#allocation2 + $0xb78] sm:$0xff]
    %v523 = vld [vmem:[#allocation2 + $0xb80] sm:$0xff]
    %v524 = vld [vmem:[#allocation2 + $0xb88] sm:$0xff]
    %v525 = vld [vmem:[#allocation2 + $0xb90] sm:$0xff]
    %v526 = vld [vmem:[#allocation2 + $0xb98] sm:$0xff]
    %v527 = vld [vmem:[#allocation2 + $0xba0] sm:$0xff]
    %v528 = vld [vmem:[#allocation2 + $0xba8] sm:$0xff]
    %v529 = vld [vmem:[#allocation2 + $0xbb0] sm:$0xff]
    %v530 = vld [vmem:[#allocation2 + $0xbb8] sm:$0xff]
    %v531 = vld [vmem:[#allocation2 + $0xbc0] sm:$0xff]
    %v532 = vld [vmem:[#allocation2 + $0xbc8] sm:$0xff]
    %v533 = vld [vmem:[#allocation2 + $0xbd0] sm:$0xff]
    %v534 = vld [vmem:[#allocation2 + $0xbd8] sm:$0xff]
    %v535 = vld [vmem:[#allocation2 + $0xbe0] sm:$0xff]
    %v536 = vld [vmem:[#allocation2 + $0xbe8] sm:$0xff]
    %v537 = vld [vmem:[#allocation2 + $0xbf0] sm:$0xff]
    %v538 = vld [vmem:[#allocation2 + $0xbf8] sm:$0xff]
    %v539 = vld [vmem:[#allocation2 + $0xc00] sm:$0xff]
    %v540 = vld [vmem:[#allocation2 + $0xc08] sm:$0xff]
    %v541 = vld [vmem:[#allocation2 + $0xc10] sm:$0xff]
    %v542 = vld [vmem:[#allocation2 + $0xc18] sm:$0xff]
    %v543 = vld [vmem:[#allocation2 + $0xc20] sm:$0xff]
    %v544 = vld [vmem:[#allocation2 + $0xc28] sm:$0xff]
    %v545 = vld [vmem:[#allocation2 + $0xc30] sm:$0xff]
    %v546 = vld [vmem:[#allocation2 + $0xc38] sm:$0xff]
    %v547 = vld [vmem:[#allocation5] sm:$0xff]
    %v549 = vlaneseq
    %v550 = vshrl.u32 %v549, 7
    %v551 = vsub.s32 0, %v550
    %v552 = vrot.slane %v547, %v551
    %v553 = vlaneseq
    %v554 = vshrl.u32 %v553, 7
    %v555 = vsub.s32 1, %v554
    %v556 = vrot.slane %v547, %v555
    %v557 = vlaneseq
    %v558 = vshrl.u32 %v557, 7
    %v559 = vsub.s32 2, %v558
    %v560 = vrot.slane %v547, %v559
    %v561 = vlaneseq
    %v562 = vshrl.u32 %v561, 7
    %v563 = vsub.s32 3, %v562
    %v564 = vrot.slane %v547, %v563
    %v565 = vlaneseq
    %v566 = vshrl.u32 %v565, 7
    %v567 = vsub.s32 4, %v566
    %v568 = vrot.slane %v547, %v567
    %v569 = vlaneseq
    %v570 = vshrl.u32 %v569, 7
    %v571 = vsub.s32 5, %v570
    %v572 = vrot.slane %v547, %v571
    %v573 = vlaneseq
    %v574 = vshrl.u32 %v573, 7
    %v575 = vsub.s32 6, %v574
    %v576 = vrot.slane %v547, %v575
    %v577 = vlaneseq
    %v578 = vshrl.u32 %v577, 7
    %v579 = vsub.s32 7, %v578
    %v580 = vrot.slane %v547, %v579
    %v981 = vunpack.c.l.b16 %v155
    %v982 = vunpack.c.h.b16 %v155
    %v983 = vunpack.c.l.b16 %v156
    %v984 = vunpack.c.h.b16 %v156
    %v985 = vunpack.c.l.b16 %v157
    %v986 = vunpack.c.h.b16 %v157
    %v987 = vunpack.c.l.b16 %v158
    %v988 = vunpack.c.h.b16 %v158
    %v989 = vunpack.c.l.b16 %v159
    %v990 = vunpack.c.h.b16 %v159
    %v991 = vunpack.c.l.b16 %v160
    %v992 = vunpack.c.h.b16 %v160
    %v993 = vunpack.c.l.b16 %v161
    %v994 = vunpack.c.h.b16 %v161
    %v995 = vunpack.c.l.b16 %v162
    %v996 = vunpack.c.h.b16 %v162
    %v997 = vunpack.c.l.b16 %v163
    %v998 = vunpack.c.h.b16 %v163
    %v999 = vunpack.c.l.b16 %v164
    %v1000 = vunpack.c.h.b16 %v164
    %v1001 = vunpack.c.l.b16 %v165
    %v1002 = vunpack.c.h.b16 %v165
    %v1003 = vunpack.c.l.b16 %v166
    %v1004 = vunpack.c.h.b16 %v166
    %v1005 = vunpack.c.l.b16 %v167
    %v1006 = vunpack.c.h.b16 %v167
    %v1007 = vunpack.c.l.b16 %v168
    %v1008 = vunpack.c.h.b16 %v168
    %v1009 = vunpack.c.l.b16 %v169
    %v1010 = vunpack.c.h.b16 %v169
    %v1011 = vunpack.c.l.b16 %v170
    %v1012 = vunpack.c.h.b16 %v170
    %v1013 = vunpack.c.l.b16 %v171
    %v1014 = vunpack.c.h.b16 %v171
    %v1015 = vunpack.c.l.b16 %v172
    %v1016 = vunpack.c.h.b16 %v172
    %v1017 = vunpack.c.l.b16 %v173
    %v1018 = vunpack.c.h.b16 %v173
    %v1019 = vunpack.c.l.b16 %v174
    %v1020 = vunpack.c.h.b16 %v174
    %v1021 = vunpack.c.l.b16 %v175
    %v1022 = vunpack.c.h.b16 %v175
    %v1023 = vunpack.c.l.b16 %v176
    %v1024 = vunpack.c.h.b16 %v176
    %v1025 = vunpack.c.l.b16 %v177
    %v1026 = vunpack.c.h.b16 %v177
    %v1027 = vunpack.c.l.b16 %v178
    %v1028 = vunpack.c.h.b16 %v178
    %v1029 = vunpack.c.l.b16 %v179
    %v1030 = vunpack.c.h.b16 %v179
    %v1031 = vunpack.c.l.b16 %v180
    %v1032 = vunpack.c.h.b16 %v180
    %v1033 = vunpack.c.l.b16 %v181
    %v1034 = vunpack.c.h.b16 %v181
    %v1035 = vunpack.c.l.b16 %v182
    %v1036 = vunpack.c.h.b16 %v182
    %v1037 = vunpack.c.l.b16 %v183
    %v1038 = vunpack.c.h.b16 %v183
    %v1039 = vunpack.c.l.b16 %v184
    %v1040 = vunpack.c.h.b16 %v184
    %v1041 = vunpack.c.l.b16 %v185
    %v1042 = vunpack.c.h.b16 %v185
    %v1043 = vunpack.c.l.b16 %v186
    %v1044 = vunpack.c.h.b16 %v186
    %v1045 = vunpack.c.l.b16 %v187
    %v1046 = vunpack.c.h.b16 %v187
    %v1047 = vunpack.c.l.b16 %v188
    %v1048 = vunpack.c.h.b16 %v188
    %v1049 = vunpack.c.l.b16 %v189
    %v1050 = vunpack.c.h.b16 %v189
    %v1051 = vunpack.c.l.b16 %v190
    %v1052 = vunpack.c.h.b16 %v190
    %v1053 = vunpack.c.l.b16 %v191
    %v1054 = vunpack.c.h.b16 %v191
    %v1055 = vunpack.c.l.b16 %v192
    %v1056 = vunpack.c.h.b16 %v192
    %v1057 = vunpack.c.l.b16 %v193
    %v1058 = vunpack.c.h.b16 %v193
    %v1059 = vunpack.c.l.b16 %v194
    %v1060 = vunpack.c.h.b16 %v194
    %v1061 = vunpack.c.l.b16 %v195
    %v1062 = vunpack.c.h.b16 %v195
    %v1063 = vunpack.c.l.b16 %v196
    %v1064 = vunpack.c.h.b16 %v196
    %v1065 = vunpack.c.l.b16 %v197
    %v1066 = vunpack.c.h.b16 %v197
    %v1067 = vunpack.c.l.b16 %v198
    %v1068 = vunpack.c.h.b16 %v198
    %v1069 = vunpack.c.l.b16 %v199
    %v1070 = vunpack.c.h.b16 %v199
    %v1071 = vunpack.c.l.b16 %v200
    %v1072 = vunpack.c.h.b16 %v200
    %v1073 = vunpack.c.l.b16 %v201
    %v1074 = vunpack.c.h.b16 %v201
    %v1075 = vunpack.c.l.b16 %v202
    %v1076 = vunpack.c.h.b16 %v202
    %v1077 = vunpack.c.l.b16 %v203
    %v1078 = vunpack.c.h.b16 %v203
    %v1079 = vunpack.c.l.b16 %v204
    %v1080 = vunpack.c.h.b16 %v204
    %v1081 = vunpack.c.l.b16 %v205
    %v1082 = vunpack.c.h.b16 %v205
    %v1083 = vunpack.c.l.b16 %v206
    %v1084 = vunpack.c.h.b16 %v206
    %v1085 = vunpack.c.l.b16 %v207
    %v1086 = vunpack.c.h.b16 %v207
    %v1087 = vunpack.c.l.b16 %v208
    %v1088 = vunpack.c.h.b16 %v208
    %v1089 = vunpack.c.l.b16 %v209
    %v1090 = vunpack.c.h.b16 %v209
    %v1091 = vunpack.c.l.b16 %v210
    %v1092 = vunpack.c.h.b16 %v210
    %v1093 = vunpack.c.l.b16 %v211
    %v1094 = vunpack.c.h.b16 %v211
    %v1095 = vunpack.c.l.b16 %v212
    %v1096 = vunpack.c.h.b16 %v212
    %v1097 = vunpack.c.l.b16 %v213
    %v1098 = vunpack.c.h.b16 %v213
    %v1099 = vunpack.c.l.b16 %v214
    %v1100 = vunpack.c.h.b16 %v214
    %v1101 = vunpack.c.l.b16 %v215
    %v1102 = vunpack.c.h.b16 %v215
    %v1103 = vunpack.c.l.b16 %v216
    %v1104 = vunpack.c.h.b16 %v216
    %v1105 = vunpack.c.l.b16 %v217
    %v1106 = vunpack.c.h.b16 %v217
    %v1107 = vunpack.c.l.b16 %v218
    %v1108 = vunpack.c.h.b16 %v218
    %v1109 = vunpack.c.l.b16 %v219
    %v1110 = vunpack.c.h.b16 %v219
    %v1111 = vunpack.c.l.b16 %v220
    %v1112 = vunpack.c.h.b16 %v220
    %v1113 = vunpack.c.l.b16 %v221
    %v1114 = vunpack.c.h.b16 %v221
    %v1115 = vunpack.c.l.b16 %v222
    %v1116 = vunpack.c.h.b16 %v222
    %v1117 = vunpack.c.l.b16 %v223
    %v1118 = vunpack.c.h.b16 %v223
    %v1119 = vunpack.c.l.b16 %v224
    %v1120 = vunpack.c.h.b16 %v224
    %v1121 = vunpack.c.l.b16 %v225
    %v1122 = vunpack.c.h.b16 %v225
    %v1123 = vunpack.c.l.b16 %v226
    %v1124 = vunpack.c.h.b16 %v226
    %v1125 = vunpack.c.l.b16 %v227
    %v1126 = vunpack.c.h.b16 %v227
    %v1127 = vunpack.c.l.b16 %v228
    %v1128 = vunpack.c.h.b16 %v228
    %v1129 = vunpack.c.l.b16 %v229
    %v1130 = vunpack.c.h.b16 %v229
    %v1131 = vunpack.c.l.b16 %v230
    %v1132 = vunpack.c.h.b16 %v230
    %v1133 = vunpack.c.l.b16 %v231
    %v1134 = vunpack.c.h.b16 %v231
    %v1135 = vunpack.c.l.b16 %v232
    %v1136 = vunpack.c.h.b16 %v232
    %v1137 = vunpack.c.l.b16 %v233
    %v1138 = vunpack.c.h.b16 %v233
    %v1139 = vunpack.c.l.b16 %v234
    %v1140 = vunpack.c.h.b16 %v234
    %v1141 = vunpack.c.l.b16 %v235
    %v1142 = vunpack.c.h.b16 %v235
    %v1143 = vunpack.c.l.b16 %v236
    %v1144 = vunpack.c.h.b16 %v236
    %v1145 = vunpack.c.l.b16 %v237
    %v1146 = vunpack.c.h.b16 %v237
    %v1147 = vunpack.c.l.b16 %v238
    %v1148 = vunpack.c.h.b16 %v238
    %v1149 = vunpack.c.l.b16 %v239
    %v1150 = vunpack.c.h.b16 %v239
    %v1151 = vunpack.c.l.b16 %v240
    %v1152 = vunpack.c.h.b16 %v240
    %v1153 = vunpack.c.l.b16 %v241
    %v1154 = vunpack.c.h.b16 %v241
    %v1155 = vunpack.c.l.b16 %v242
    %v1156 = vunpack.c.h.b16 %v242
    %v1157 = vunpack.c.l.b16 %v243
    %v1158 = vunpack.c.h.b16 %v243
    %v1159 = vunpack.c.l.b16 %v244
    %v1160 = vunpack.c.h.b16 %v244
    %v1161 = vunpack.c.l.b16 %v245
    %v1162 = vunpack.c.h.b16 %v245
    %v1163 = vunpack.c.l.b16 %v246
    %v1164 = vunpack.c.h.b16 %v246
    %v1165 = vunpack.c.l.b16 %v247
    %v1166 = vunpack.c.h.b16 %v247
    %v1167 = vunpack.c.l.b16 %v248
    %v1168 = vunpack.c.h.b16 %v248
    %v1169 = vunpack.c.l.b16 %v249
    %v1170 = vunpack.c.h.b16 %v249
    %v1171 = vunpack.c.l.b16 %v250
    %v1172 = vunpack.c.h.b16 %v250
    %v1173 = vunpack.c.l.b16 %v251
    %v1174 = vunpack.c.h.b16 %v251
    %v1175 = vunpack.c.l.b16 %v252
    %v1176 = vunpack.c.h.b16 %v252
    %v1177 = vunpack.c.l.b16 %v253
    %v1178 = vunpack.c.h.b16 %v253
    %v1179 = vunpack.c.l.b16 %v254
    %v1180 = vunpack.c.h.b16 %v254
    %v1181 = vunpack.c.l.b16 %v255
    %v1182 = vunpack.c.h.b16 %v255
    %v1183 = vunpack.c.l.b16 %v256
    %v1184 = vunpack.c.h.b16 %v256
    %v1185 = vunpack.c.l.b16 %v257
    %v1186 = vunpack.c.h.b16 %v257
    %v1187 = vunpack.c.l.b16 %v258
    %v1188 = vunpack.c.h.b16 %v258
    %v1189 = vunpack.c.l.b16 %v259
    %v1190 = vunpack.c.h.b16 %v259
    %v1191 = vunpack.c.l.b16 %v260
    %v1192 = vunpack.c.h.b16 %v260
    %v1193 = vunpack.c.l.b16 %v261
    %v1194 = vunpack.c.h.b16 %v261
    %v1195 = vunpack.c.l.b16 %v262
    %v1196 = vunpack.c.h.b16 %v262
    %v1197 = vunpack.c.l.b16 %v263
    %v1198 = vunpack.c.h.b16 %v263
    %v1199 = vunpack.c.l.b16 %v264
    %v1200 = vunpack.c.h.b16 %v264
    %v1201 = vunpack.c.l.b16 %v265
    %v1202 = vunpack.c.h.b16 %v265
    %v1203 = vunpack.c.l.b16 %v266
    %v1204 = vunpack.c.h.b16 %v266
    %v1205 = vunpack.c.l.b16 %v267
    %v1206 = vunpack.c.h.b16 %v267
    %v1207 = vunpack.c.l.b16 %v268
    %v1208 = vunpack.c.h.b16 %v268
    %v1209 = vunpack.c.l.b16 %v269
    %v1210 = vunpack.c.h.b16 %v269
    %v1211 = vunpack.c.l.b16 %v270
    %v1212 = vunpack.c.h.b16 %v270
    %v1213 = vunpack.c.l.b16 %v271
    %v1214 = vunpack.c.h.b16 %v271
    %v1215 = vunpack.c.l.b16 %v272
    %v1216 = vunpack.c.h.b16 %v272
    %v1217 = vunpack.c.l.b16 %v273
    %v1218 = vunpack.c.h.b16 %v273
    %v1219 = vunpack.c.l.b16 %v274
    %v1220 = vunpack.c.h.b16 %v274
    %v1221 = vunpack.c.l.b16 %v275
    %v1222 = vunpack.c.h.b16 %v275
    %v1223 = vunpack.c.l.b16 %v276
    %v1224 = vunpack.c.h.b16 %v276
    %v1225 = vunpack.c.l.b16 %v277
    %v1226 = vunpack.c.h.b16 %v277
    %v1227 = vunpack.c.l.b16 %v278
    %v1228 = vunpack.c.h.b16 %v278
    %v1229 = vunpack.c.l.b16 %v279
    %v1230 = vunpack.c.h.b16 %v279
    %v1231 = vunpack.c.l.b16 %v280
    %v1232 = vunpack.c.h.b16 %v280
    %v1233 = vunpack.c.l.b16 %v281
    %v1234 = vunpack.c.h.b16 %v281
    %v1235 = vunpack.c.l.b16 %v282
    %v1236 = vunpack.c.h.b16 %v282
    %v1237 = vunpack.c.l.b16 %v283
    %v1238 = vunpack.c.h.b16 %v283
    %v1239 = vunpack.c.l.b16 %v284
    %v1240 = vunpack.c.h.b16 %v284
    %v1241 = vunpack.c.l.b16 %v285
    %v1242 = vunpack.c.h.b16 %v285
    %v1243 = vunpack.c.l.b16 %v286
    %v1244 = vunpack.c.h.b16 %v286
    %v1245 = vunpack.c.l.b16 %v287
    %v1246 = vunpack.c.h.b16 %v287
    %v1247 = vunpack.c.l.b16 %v288
    %v1248 = vunpack.c.h.b16 %v288
    %v1249 = vunpack.c.l.b16 %v289
    %v1250 = vunpack.c.h.b16 %v289
    %v1251 = vunpack.c.l.b16 %v290
    %v1252 = vunpack.c.h.b16 %v290
    %v1253 = vunpack.c.l.b16 %v291
    %v1254 = vunpack.c.h.b16 %v291
    %v1255 = vunpack.c.l.b16 %v292
    %v1256 = vunpack.c.h.b16 %v292
    %v1257 = vunpack.c.l.b16 %v293
    %v1258 = vunpack.c.h.b16 %v293
    %v1259 = vunpack.c.l.b16 %v294
    %v1260 = vunpack.c.h.b16 %v294
    %v1261 = vunpack.c.l.b16 %v295
    %v1262 = vunpack.c.h.b16 %v295
    %v1263 = vunpack.c.l.b16 %v296
    %v1264 = vunpack.c.h.b16 %v296
    %v1265 = vunpack.c.l.b16 %v297
    %v1266 = vunpack.c.h.b16 %v297
    %v1267 = vunpack.c.l.b16 %v298
    %v1268 = vunpack.c.h.b16 %v298
    %v1269 = vunpack.c.l.b16 %v299
    %v1270 = vunpack.c.h.b16 %v299
    %v1271 = vunpack.c.l.b16 %v300
    %v1272 = vunpack.c.h.b16 %v300
    %v1273 = vunpack.c.l.b16 %v301
    %v1274 = vunpack.c.h.b16 %v301
    %v1275 = vunpack.c.l.b16 %v302
    %v1276 = vunpack.c.h.b16 %v302
    %v1277 = vunpack.c.l.b16 %v303
    %v1278 = vunpack.c.h.b16 %v303
    %v1279 = vunpack.c.l.b16 %v304
    %v1280 = vunpack.c.h.b16 %v304
    %v1281 = vunpack.c.l.b16 %v305
    %v1282 = vunpack.c.h.b16 %v305
    %v1283 = vunpack.c.l.b16 %v306
    %v1284 = vunpack.c.h.b16 %v306
    %v1285 = vunpack.c.l.b16 %v307
    %v1286 = vunpack.c.h.b16 %v307
    %v1287 = vunpack.c.l.b16 %v308
    %v1288 = vunpack.c.h.b16 %v308
    %v1289 = vunpack.c.l.b16 %v309
    %v1290 = vunpack.c.h.b16 %v309
    %v1291 = vunpack.c.l.b16 %v310
    %v1292 = vunpack.c.h.b16 %v310
    %v1293 = vunpack.c.l.b16 %v311
    %v1294 = vunpack.c.h.b16 %v311
    %v1295 = vunpack.c.l.b16 %v312
    %v1296 = vunpack.c.h.b16 %v312
    %v1297 = vunpack.c.l.b16 %v313
    %v1298 = vunpack.c.h.b16 %v313
    %v1299 = vunpack.c.l.b16 %v314
    %v1300 = vunpack.c.h.b16 %v314
    %v1301 = vunpack.c.l.b16 %v315
    %v1302 = vunpack.c.h.b16 %v315
    %v1303 = vunpack.c.l.b16 %v316
    %v1304 = vunpack.c.h.b16 %v316
    %v1305 = vunpack.c.l.b16 %v317
    %v1306 = vunpack.c.h.b16 %v317
    %v1307 = vunpack.c.l.b16 %v318
    %v1308 = vunpack.c.h.b16 %v318
    %v1309 = vunpack.c.l.b16 %v319
    %v1310 = vunpack.c.h.b16 %v319
    %v1311 = vunpack.c.l.b16 %v320
    %v1312 = vunpack.c.h.b16 %v320
    %v1313 = vunpack.c.l.b16 %v321
    %v1314 = vunpack.c.h.b16 %v321
    %v1315 = vunpack.c.l.b16 %v322
    %v1316 = vunpack.c.h.b16 %v322
    %v1317 = vunpack.c.l.b16 %v323
    %v1318 = vunpack.c.h.b16 %v323
    %v1319 = vunpack.c.l.b16 %v324
    %v1320 = vunpack.c.h.b16 %v324
    %v1321 = vunpack.c.l.b16 %v325
    %v1322 = vunpack.c.h.b16 %v325
    %v1323 = vunpack.c.l.b16 %v326
    %v1324 = vunpack.c.h.b16 %v326
    %v1325 = vunpack.c.l.b16 %v327
    %v1326 = vunpack.c.h.b16 %v327
    %v1327 = vunpack.c.l.b16 %v328
    %v1328 = vunpack.c.h.b16 %v328
    %v1329 = vunpack.c.l.b16 %v329
    %v1330 = vunpack.c.h.b16 %v329
    %v1331 = vunpack.c.l.b16 %v330
    %v1332 = vunpack.c.h.b16 %v330
    %v1333 = vunpack.c.l.b16 %v331
    %v1334 = vunpack.c.h.b16 %v331
    %v1335 = vunpack.c.l.b16 %v332
    %v1336 = vunpack.c.h.b16 %v332
    %v1337 = vunpack.c.l.b16 %v333
    %v1338 = vunpack.c.h.b16 %v333
    %v1339 = vunpack.c.l.b16 %v334
    %v1340 = vunpack.c.h.b16 %v334
    %v1341 = vunpack.c.l.b16 %v335
    %v1342 = vunpack.c.h.b16 %v335
    %v1343 = vunpack.c.l.b16 %v336
    %v1344 = vunpack.c.h.b16 %v336
    %v1345 = vunpack.c.l.b16 %v337
    %v1346 = vunpack.c.h.b16 %v337
    %v1347 = vunpack.c.l.b16 %v338
    %v1348 = vunpack.c.h.b16 %v338
    %v1349 = vunpack.c.l.b16 %v339
    %v1350 = vunpack.c.h.b16 %v339
    %v1351 = vunpack.c.l.b16 %v340
    %v1352 = vunpack.c.h.b16 %v340
    %v1353 = vunpack.c.l.b16 %v341
    %v1354 = vunpack.c.h.b16 %v341
    %v1355 = vunpack.c.l.b16 %v342
    %v1356 = vunpack.c.h.b16 %v342
    %v1357 = vunpack.c.l.b16 %v343
    %v1358 = vunpack.c.h.b16 %v343
    %v1359 = vunpack.c.l.b16 %v344
    %v1360 = vunpack.c.h.b16 %v344
    %v1361 = vunpack.c.l.b16 %v345
    %v1362 = vunpack.c.h.b16 %v345
    %v1363 = vunpack.c.l.b16 %v346
    %v1364 = vunpack.c.h.b16 %v346
    %v1365 = vunpack.c.l.b16 %v347
    %v1366 = vunpack.c.h.b16 %v347
    %v1367 = vunpack.c.l.b16 %v348
    %v1368 = vunpack.c.h.b16 %v348
    %v1369 = vunpack.c.l.b16 %v349
    %v1370 = vunpack.c.h.b16 %v349
    %v1371 = vunpack.c.l.b16 %v350
    %v1372 = vunpack.c.h.b16 %v350
    %v1373 = vunpack.c.l.b16 %v351
    %v1374 = vunpack.c.h.b16 %v351
    %v1375 = vunpack.c.l.b16 %v352
    %v1376 = vunpack.c.h.b16 %v352
    %v1377 = vunpack.c.l.b16 %v353
    %v1378 = vunpack.c.h.b16 %v353
    %v1379 = vunpack.c.l.b16 %v354
    %v1380 = vunpack.c.h.b16 %v354
    %v1381 = vunpack.c.l.b16 %v355
    %v1382 = vunpack.c.h.b16 %v355
    %v1383 = vunpack.c.l.b16 %v356
    %v1384 = vunpack.c.h.b16 %v356
    %v1385 = vunpack.c.l.b16 %v357
    %v1386 = vunpack.c.h.b16 %v357
    %v1387 = vunpack.c.l.b16 %v358
    %v1388 = vunpack.c.h.b16 %v358
    %v1389 = vunpack.c.l.b16 %v359
    %v1390 = vunpack.c.h.b16 %v359
    %v1391 = vunpack.c.l.b16 %v360
    %v1392 = vunpack.c.h.b16 %v360
    %v1393 = vunpack.c.l.b16 %v361
    %v1394 = vunpack.c.h.b16 %v361
    %v1395 = vunpack.c.l.b16 %v362
    %v1396 = vunpack.c.h.b16 %v362
    %v1397 = vunpack.c.l.b16 %v363
    %v1398 = vunpack.c.h.b16 %v363
    %v1399 = vunpack.c.l.b16 %v364
    %v1400 = vunpack.c.h.b16 %v364
    %v1401 = vunpack.c.l.b16 %v365
    %v1402 = vunpack.c.h.b16 %v365
    %v1403 = vunpack.c.l.b16 %v366
    %v1404 = vunpack.c.h.b16 %v366
    %v1405 = vunpack.c.l.b16 %v367
    %v1406 = vunpack.c.h.b16 %v367
    %v1407 = vunpack.c.l.b16 %v368
    %v1408 = vunpack.c.h.b16 %v368
    %v1409 = vunpack.c.l.b16 %v369
    %v1410 = vunpack.c.h.b16 %v369
    %v1411 = vunpack.c.l.b16 %v370
    %v1412 = vunpack.c.h.b16 %v370
    %v1413 = vunpack.c.l.b16 %v371
    %v1414 = vunpack.c.h.b16 %v371
    %v1415 = vunpack.c.l.b16 %v372
    %v1416 = vunpack.c.h.b16 %v372
    %v1417 = vunpack.c.l.b16 %v373
    %v1418 = vunpack.c.h.b16 %v373
    %v1419 = vunpack.c.l.b16 %v374
    %v1420 = vunpack.c.h.b16 %v374
    %v1421 = vunpack.c.l.b16 %v375
    %v1422 = vunpack.c.h.b16 %v375
    %v1423 = vunpack.c.l.b16 %v376
    %v1424 = vunpack.c.h.b16 %v376
    %v1425 = vunpack.c.l.b16 %v377
    %v1426 = vunpack.c.h.b16 %v377
    %v1427 = vunpack.c.l.b16 %v378
    %v1428 = vunpack.c.h.b16 %v378
    %v1429 = vunpack.c.l.b16 %v379
    %v1430 = vunpack.c.h.b16 %v379
    %v1431 = vunpack.c.l.b16 %v380
    %v1432 = vunpack.c.h.b16 %v380
    %v1433 = vunpack.c.l.b16 %v381
    %v1434 = vunpack.c.h.b16 %v381
    %v1435 = vunpack.c.l.b16 %v382
    %v1436 = vunpack.c.h.b16 %v382
    %v1437 = vunpack.c.l.b16 %v383
    %v1438 = vunpack.c.h.b16 %v383
    %v1439 = vunpack.c.l.b16 %v384
    %v1440 = vunpack.c.h.b16 %v384
    %v1441 = vunpack.c.l.b16 %v385
    %v1442 = vunpack.c.h.b16 %v385
    %v1443 = vunpack.c.l.b16 %v386
    %v1444 = vunpack.c.h.b16 %v386
    %v1445 = vunpack.c.l.b16 %v387
    %v1446 = vunpack.c.h.b16 %v387
    %v1447 = vunpack.c.l.b16 %v388
    %v1448 = vunpack.c.h.b16 %v388
    %v1449 = vunpack.c.l.b16 %v389
    %v1450 = vunpack.c.h.b16 %v389
    %v1451 = vunpack.c.l.b16 %v390
    %v1452 = vunpack.c.h.b16 %v390
    %v1453 = vunpack.c.l.b16 %v391
    %v1454 = vunpack.c.h.b16 %v391
    %v1455 = vunpack.c.l.b16 %v392
    %v1456 = vunpack.c.h.b16 %v392
    %v1457 = vunpack.c.l.b16 %v393
    %v1458 = vunpack.c.h.b16 %v393
    %v1459 = vunpack.c.l.b16 %v394
    %v1460 = vunpack.c.h.b16 %v394
    %v1461 = vunpack.c.l.b16 %v395
    %v1462 = vunpack.c.h.b16 %v395
    %v1463 = vunpack.c.l.b16 %v396
    %v1464 = vunpack.c.h.b16 %v396
    %v1465 = vunpack.c.l.b16 %v397
    %v1466 = vunpack.c.h.b16 %v397
    %v1467 = vunpack.c.l.b16 %v398
    %v1468 = vunpack.c.h.b16 %v398
    %v1469 = vunpack.c.l.b16 %v399
    %v1470 = vunpack.c.h.b16 %v399
    %v1471 = vunpack.c.l.b16 %v400
    %v1472 = vunpack.c.h.b16 %v400
    %v1473 = vunpack.c.l.b16 %v401
    %v1474 = vunpack.c.h.b16 %v401
    %v1475 = vunpack.c.l.b16 %v402
    %v1476 = vunpack.c.h.b16 %v402
    %v1477 = vunpack.c.l.b16 %v403
    %v1478 = vunpack.c.h.b16 %v403
    %v1479 = vunpack.c.l.b16 %v404
    %v1480 = vunpack.c.h.b16 %v404
    %v1481 = vunpack.c.l.b16 %v405
    %v1482 = vunpack.c.h.b16 %v405
    %v1483 = vunpack.c.l.b16 %v406
    %v1484 = vunpack.c.h.b16 %v406
    %v1485 = vunpack.c.l.b16 %v407
    %v1486 = vunpack.c.h.b16 %v407
    %v1487 = vunpack.c.l.b16 %v408
    %v1488 = vunpack.c.h.b16 %v408
    %v1489 = vunpack.c.l.b16 %v409
    %v1490 = vunpack.c.h.b16 %v409
    %v1491 = vunpack.c.l.b16 %v410
    %v1492 = vunpack.c.h.b16 %v410
    %v1493 = vunpack.c.l.b16 %v411
    %v1494 = vunpack.c.h.b16 %v411
    %v1495 = vunpack.c.l.b16 %v412
    %v1496 = vunpack.c.h.b16 %v412
    %v1497 = vunpack.c.l.b16 %v413
    %v1498 = vunpack.c.h.b16 %v413
    %v1499 = vunpack.c.l.b16 %v414
    %v1500 = vunpack.c.h.b16 %v414
    %v1501 = vunpack.c.l.b16 %v415
    %v1502 = vunpack.c.h.b16 %v415
    %v1503 = vunpack.c.l.b16 %v416
    %v1504 = vunpack.c.h.b16 %v416
    %v1505 = vunpack.c.l.b16 %v417
    %v1506 = vunpack.c.h.b16 %v417
    %v1507 = vunpack.c.l.b16 %v418
    %v1508 = vunpack.c.h.b16 %v418
    %v1509 = vunpack.c.l.b16 %v419
    %v1510 = vunpack.c.h.b16 %v419
    %v1511 = vunpack.c.l.b16 %v420
    %v1512 = vunpack.c.h.b16 %v420
    %v1513 = vunpack.c.l.b16 %v421
    %v1514 = vunpack.c.h.b16 %v421
    %v1515 = vunpack.c.l.b16 %v422
    %v1516 = vunpack.c.h.b16 %v422
    %v1517 = vunpack.c.l.b16 %v423
    %v1518 = vunpack.c.h.b16 %v423
    %v1519 = vunpack.c.l.b16 %v424
    %v1520 = vunpack.c.h.b16 %v424
    %v1521 = vunpack.c.l.b16 %v425
    %v1522 = vunpack.c.h.b16 %v425
    %v1523 = vunpack.c.l.b16 %v426
    %v1524 = vunpack.c.h.b16 %v426
    %v1525 = vunpack.c.l.b16 %v427
    %v1526 = vunpack.c.h.b16 %v427
    %v1527 = vunpack.c.l.b16 %v428
    %v1528 = vunpack.c.h.b16 %v428
    %v1529 = vunpack.c.l.b16 %v429
    %v1530 = vunpack.c.h.b16 %v429
    %v1531 = vunpack.c.l.b16 %v430
    %v1532 = vunpack.c.h.b16 %v430
    %v1533 = vunpack.c.l.b16 %v431
    %v1534 = vunpack.c.h.b16 %v431
    %v1535 = vunpack.c.l.b16 %v432
    %v1536 = vunpack.c.h.b16 %v432
    %v1537 = vunpack.c.l.b16 %v433
    %v1538 = vunpack.c.h.b16 %v433
    %v1539 = vunpack.c.l.b16 %v434
    %v1540 = vunpack.c.h.b16 %v434
    %v1541 = vunpack.c.l.b16 %v435
    %v1542 = vunpack.c.h.b16 %v435
    %v1543 = vunpack.c.l.b16 %v436
    %v1544 = vunpack.c.h.b16 %v436
    %v1545 = vunpack.c.l.b16 %v437
    %v1546 = vunpack.c.h.b16 %v437
    %v1547 = vunpack.c.l.b16 %v438
    %v1548 = vunpack.c.h.b16 %v438
    %v1549 = vunpack.c.l.b16 %v439
    %v1550 = vunpack.c.h.b16 %v439
    %v1551 = vunpack.c.l.b16 %v440
    %v1552 = vunpack.c.h.b16 %v440
    %v1553 = vunpack.c.l.b16 %v441
    %v1554 = vunpack.c.h.b16 %v441
    %v1555 = vunpack.c.l.b16 %v442
    %v1556 = vunpack.c.h.b16 %v442
    %v1557 = vunpack.c.l.b16 %v443
    %v1558 = vunpack.c.h.b16 %v443
    %v1559 = vunpack.c.l.b16 %v444
    %v1560 = vunpack.c.h.b16 %v444
    %v1561 = vunpack.c.l.b16 %v445
    %v1562 = vunpack.c.h.b16 %v445
    %v1563 = vunpack.c.l.b16 %v446
    %v1564 = vunpack.c.h.b16 %v446
    %v1565 = vunpack.c.l.b16 %v447
    %v1566 = vunpack.c.h.b16 %v447
    %v1567 = vunpack.c.l.b16 %v448
    %v1568 = vunpack.c.h.b16 %v448
    %v1569 = vunpack.c.l.b16 %v449
    %v1570 = vunpack.c.h.b16 %v449
    %v1571 = vunpack.c.l.b16 %v450
    %v1572 = vunpack.c.h.b16 %v450
    %v1573 = vunpack.c.l.b16 %v451
    %v1574 = vunpack.c.h.b16 %v451
    %v1575 = vunpack.c.l.b16 %v452
    %v1576 = vunpack.c.h.b16 %v452
    %v1577 = vunpack.c.l.b16 %v453
    %v1578 = vunpack.c.h.b16 %v453
    %v1579 = vunpack.c.l.b16 %v454
    %v1580 = vunpack.c.h.b16 %v454
    %v1581 = vunpack.c.l.b16 %v455
    %v1582 = vunpack.c.h.b16 %v455
    %v1583 = vunpack.c.l.b16 %v456
    %v1584 = vunpack.c.h.b16 %v456
    %v1585 = vunpack.c.l.b16 %v457
    %v1586 = vunpack.c.h.b16 %v457
    %v1587 = vunpack.c.l.b16 %v458
    %v1588 = vunpack.c.h.b16 %v458
    %v1589 = vunpack.c.l.b16 %v459
    %v1590 = vunpack.c.h.b16 %v459
    %v1591 = vunpack.c.l.b16 %v460
    %v1592 = vunpack.c.h.b16 %v460
    %v1593 = vunpack.c.l.b16 %v461
    %v1594 = vunpack.c.h.b16 %v461
    %v1595 = vunpack.c.l.b16 %v462
    %v1596 = vunpack.c.h.b16 %v462
    %v1597 = vunpack.c.l.b16 %v463
    %v1598 = vunpack.c.h.b16 %v463
    %v1599 = vunpack.c.l.b16 %v464
    %v1600 = vunpack.c.h.b16 %v464
    %v1601 = vunpack.c.l.b16 %v465
    %v1602 = vunpack.c.h.b16 %v465
    %v1603 = vunpack.c.l.b16 %v466
    %v1604 = vunpack.c.h.b16 %v466
    %v1605 = vunpack.c.l.b16 %v467
    %v1606 = vunpack.c.h.b16 %v467
    %v1607 = vunpack.c.l.b16 %v468
    %v1608 = vunpack.c.h.b16 %v468
    %v1609 = vunpack.c.l.b16 %v469
    %v1610 = vunpack.c.h.b16 %v469
    %v1611 = vunpack.c.l.b16 %v470
    %v1612 = vunpack.c.h.b16 %v470
    %v1613 = vunpack.c.l.b16 %v471
    %v1614 = vunpack.c.h.b16 %v471
    %v1615 = vunpack.c.l.b16 %v472
    %v1616 = vunpack.c.h.b16 %v472
    %v1617 = vunpack.c.l.b16 %v473
    %v1618 = vunpack.c.h.b16 %v473
    %v1619 = vunpack.c.l.b16 %v474
    %v1620 = vunpack.c.h.b16 %v474
    %v1621 = vunpack.c.l.b16 %v475
    %v1622 = vunpack.c.h.b16 %v475
    %v1623 = vunpack.c.l.b16 %v476
    %v1624 = vunpack.c.h.b16 %v476
    %v1625 = vunpack.c.l.b16 %v477
    %v1626 = vunpack.c.h.b16 %v477
    %v1627 = vunpack.c.l.b16 %v478
    %v1628 = vunpack.c.h.b16 %v478
    %v1629 = vunpack.c.l.b16 %v479
    %v1630 = vunpack.c.h.b16 %v479
    %v1631 = vunpack.c.l.b16 %v480
    %v1632 = vunpack.c.h.b16 %v480
    %v1633 = vunpack.c.l.b16 %v481
    %v1634 = vunpack.c.h.b16 %v481
    %v1635 = vunpack.c.l.b16 %v482
    %v1636 = vunpack.c.h.b16 %v482
    %v1637 = vunpack.c.l.b16 %v483
    %v1638 = vunpack.c.h.b16 %v483
    %v1639 = vunpack.c.l.b16 %v484
    %v1640 = vunpack.c.h.b16 %v484
    %v1641 = vunpack.c.l.b16 %v485
    %v1642 = vunpack.c.h.b16 %v485
    %v1643 = vunpack.c.l.b16 %v486
    %v1644 = vunpack.c.h.b16 %v486
    %v1645 = vunpack.c.l.b16 %v487
    %v1646 = vunpack.c.h.b16 %v487
    %v1647 = vunpack.c.l.b16 %v488
    %v1648 = vunpack.c.h.b16 %v488
    %v1649 = vunpack.c.l.b16 %v489
    %v1650 = vunpack.c.h.b16 %v489
    %v1651 = vunpack.c.l.b16 %v490
    %v1652 = vunpack.c.h.b16 %v490
    %v1653 = vunpack.c.l.b16 %v491
    %v1654 = vunpack.c.h.b16 %v491
    %v1655 = vunpack.c.l.b16 %v492
    %v1656 = vunpack.c.h.b16 %v492
    %v1657 = vunpack.c.l.b16 %v493
    %v1658 = vunpack.c.h.b16 %v493
    %v1659 = vunpack.c.l.b16 %v494
    %v1660 = vunpack.c.h.b16 %v494
    %v1661 = vunpack.c.l.b16 %v495
    %v1662 = vunpack.c.h.b16 %v495
    %v1663 = vunpack.c.l.b16 %v496
    %v1664 = vunpack.c.h.b16 %v496
    %v1665 = vunpack.c.l.b16 %v497
    %v1666 = vunpack.c.h.b16 %v497
    %v1667 = vunpack.c.l.b16 %v498
    %v1668 = vunpack.c.h.b16 %v498
    %v1669 = vunpack.c.l.b16 %v499
    %v1670 = vunpack.c.h.b16 %v499
    %v1671 = vunpack.c.l.b16 %v500
    %v1672 = vunpack.c.h.b16 %v500
    %v1673 = vunpack.c.l.b16 %v501
    %v1674 = vunpack.c.h.b16 %v501
    %v1675 = vunpack.c.l.b16 %v502
    %v1676 = vunpack.c.h.b16 %v502
    %v1677 = vunpack.c.l.b16 %v503
    %v1678 = vunpack.c.h.b16 %v503
    %v1679 = vunpack.c.l.b16 %v504
    %v1680 = vunpack.c.h.b16 %v504
    %v1681 = vunpack.c.l.b16 %v505
    %v1682 = vunpack.c.h.b16 %v505
    %v1683 = vunpack.c.l.b16 %v506
    %v1684 = vunpack.c.h.b16 %v506
    %v1685 = vunpack.c.l.b16 %v507
    %v1686 = vunpack.c.h.b16 %v507
    %v1687 = vunpack.c.l.b16 %v508
    %v1688 = vunpack.c.h.b16 %v508
    %v1689 = vunpack.c.l.b16 %v509
    %v1690 = vunpack.c.h.b16 %v509
    %v1691 = vunpack.c.l.b16 %v510
    %v1692 = vunpack.c.h.b16 %v510
    %v1693 = vunpack.c.l.b16 %v511
    %v1694 = vunpack.c.h.b16 %v511
    %v1695 = vunpack.c.l.b16 %v512
    %v1696 = vunpack.c.h.b16 %v512
    %v1697 = vunpack.c.l.b16 %v513
    %v1698 = vunpack.c.h.b16 %v513
    %v1699 = vunpack.c.l.b16 %v514
    %v1700 = vunpack.c.h.b16 %v514
    %v1701 = vunpack.c.l.b16 %v515
    %v1702 = vunpack.c.h.b16 %v515
    %v1703 = vunpack.c.l.b16 %v516
    %v1704 = vunpack.c.h.b16 %v516
    %v1705 = vunpack.c.l.b16 %v517
    %v1706 = vunpack.c.h.b16 %v517
    %v1707 = vunpack.c.l.b16 %v518
    %v1708 = vunpack.c.h.b16 %v518
    %v1709 = vunpack.c.l.b16 %v519
    %v1710 = vunpack.c.h.b16 %v519
    %v1711 = vunpack.c.l.b16 %v520
    %v1712 = vunpack.c.h.b16 %v520
    %v1713 = vunpack.c.l.b16 %v521
    %v1714 = vunpack.c.h.b16 %v521
    %v1715 = vunpack.c.l.b16 %v522
    %v1716 = vunpack.c.h.b16 %v522
    %v1717 = vunpack.c.l.b16 %v523
    %v1718 = vunpack.c.h.b16 %v523
    %v1719 = vunpack.c.l.b16 %v524
    %v1720 = vunpack.c.h.b16 %v524
    %v1721 = vunpack.c.l.b16 %v525
    %v1722 = vunpack.c.h.b16 %v525
    %v1723 = vunpack.c.l.b16 %v526
    %v1724 = vunpack.c.h.b16 %v526
    %v1725 = vunpack.c.l.b16 %v527
    %v1726 = vunpack.c.h.b16 %v527
    %v1727 = vunpack.c.l.b16 %v528
    %v1728 = vunpack.c.h.b16 %v528
    %v1729 = vunpack.c.l.b16 %v529
    %v1730 = vunpack.c.h.b16 %v529
    %v1731 = vunpack.c.l.b16 %v530
    %v1732 = vunpack.c.h.b16 %v530
    %v1733 = vunpack.c.l.b16 %v531
    %v1734 = vunpack.c.h.b16 %v531
    %v1735 = vunpack.c.l.b16 %v532
    %v1736 = vunpack.c.h.b16 %v532
    %v1737 = vunpack.c.l.b16 %v533
    %v1738 = vunpack.c.h.b16 %v533
    %v1739 = vunpack.c.l.b16 %v534
    %v1740 = vunpack.c.h.b16 %v534
    %v1741 = vunpack.c.l.b16 %v535
    %v1742 = vunpack.c.h.b16 %v535
    %v1743 = vunpack.c.l.b16 %v536
    %v1744 = vunpack.c.h.b16 %v536
    %v1745 = vunpack.c.l.b16 %v537
    %v1746 = vunpack.c.h.b16 %v537
    %v1747 = vunpack.c.l.b16 %v538
    %v1748 = vunpack.c.h.b16 %v538
    %v1749 = vunpack.c.l.b16 %v539
    %v1750 = vunpack.c.h.b16 %v539
    %v1751 = vunpack.c.l.b16 %v540
    %v1752 = vunpack.c.h.b16 %v540
    %v1753 = vunpack.c.l.b16 %v541
    %v1754 = vunpack.c.h.b16 %v541
    %v1755 = vunpack.c.l.b16 %v542
    %v1756 = vunpack.c.h.b16 %v542
    %v1757 = vunpack.c.l.b16 %v543
    %v1758 = vunpack.c.h.b16 %v543
    %v1759 = vunpack.c.l.b16 %v544
    %v1760 = vunpack.c.h.b16 %v544
    %v1761 = vunpack.c.l.b16 %v545
    %v1762 = vunpack.c.h.b16 %v545
    %v1763 = vunpack.c.l.b16 %v546
    %v1764 = vunpack.c.h.b16 %v546
    %v1765 = vpack.c.b16 %v989, %v981
    %v1766 = vpack.c.b16 %v990, %v982
    %v1767 = vpack.c.b16 %v991, %v983
    %v1768 = vpack.c.b16 %v992, %v984
    %v1769 = vpack.c.b16 %v993, %v985
    %v1770 = vpack.c.b16 %v994, %v986
    %v1771 = vpack.c.b16 %v995, %v987
    %v1772 = vpack.c.b16 %v996, %v988
    %v1773 = vpack.c.b16 %v1005, %v997
    %v1774 = vpack.c.b16 %v1006, %v998
    %v1775 = vpack.c.b16 %v1007, %v999
    %v1776 = vpack.c.b16 %v1008, %v1000
    %v1777 = vpack.c.b16 %v1009, %v1001
    %v1778 = vpack.c.b16 %v1010, %v1002
    %v1779 = vpack.c.b16 %v1011, %v1003
    %v1780 = vpack.c.b16 %v1012, %v1004
    %v1781 = vpack.c.b16 %v1021, %v1013
    %v1782 = vpack.c.b16 %v1022, %v1014
    %v1783 = vpack.c.b16 %v1023, %v1015
    %v1784 = vpack.c.b16 %v1024, %v1016
    %v1785 = vpack.c.b16 %v1025, %v1017
    %v1786 = vpack.c.b16 %v1026, %v1018
    %v1787 = vpack.c.b16 %v1027, %v1019
    %v1788 = vpack.c.b16 %v1028, %v1020
    %v1789 = vpack.c.b16 %v1037, %v1029
    %v1790 = vpack.c.b16 %v1038, %v1030
    %v1791 = vpack.c.b16 %v1039, %v1031
    %v1792 = vpack.c.b16 %v1040, %v1032
    %v1793 = vpack.c.b16 %v1041, %v1033
    %v1794 = vpack.c.b16 %v1042, %v1034
    %v1795 = vpack.c.b16 %v1043, %v1035
    %v1796 = vpack.c.b16 %v1044, %v1036
    %v1797 = vpack.c.b16 %v1053, %v1045
    %v1798 = vpack.c.b16 %v1054, %v1046
    %v1799 = vpack.c.b16 %v1055, %v1047
    %v1800 = vpack.c.b16 %v1056, %v1048
    %v1801 = vpack.c.b16 %v1057, %v1049
    %v1802 = vpack.c.b16 %v1058, %v1050
    %v1803 = vpack.c.b16 %v1059, %v1051
    %v1804 = vpack.c.b16 %v1060, %v1052
    %v1805 = vpack.c.b16 %v1069, %v1061
    %v1806 = vpack.c.b16 %v1070, %v1062
    %v1807 = vpack.c.b16 %v1071, %v1063
    %v1808 = vpack.c.b16 %v1072, %v1064
    %v1809 = vpack.c.b16 %v1073, %v1065
    %v1810 = vpack.c.b16 %v1074, %v1066
    %v1811 = vpack.c.b16 %v1075, %v1067
    %v1812 = vpack.c.b16 %v1076, %v1068
    %v1813 = vpack.c.b16 %v1085, %v1077
    %v1814 = vpack.c.b16 %v1086, %v1078
    %v1815 = vpack.c.b16 %v1087, %v1079
    %v1816 = vpack.c.b16 %v1088, %v1080
    %v1817 = vpack.c.b16 %v1089, %v1081
    %v1818 = vpack.c.b16 %v1090, %v1082
    %v1819 = vpack.c.b16 %v1091, %v1083
    %v1820 = vpack.c.b16 %v1092, %v1084
    %v1821 = vpack.c.b16 %v1101, %v1093
    %v1822 = vpack.c.b16 %v1102, %v1094
    %v1823 = vpack.c.b16 %v1103, %v1095
    %v1824 = vpack.c.b16 %v1104, %v1096
    %v1825 = vpack.c.b16 %v1105, %v1097
    %v1826 = vpack.c.b16 %v1106, %v1098
    %v1827 = vpack.c.b16 %v1107, %v1099
    %v1828 = vpack.c.b16 %v1108, %v1100
    %v1829 = vpack.c.b16 %v1117, %v1109
    %v1830 = vpack.c.b16 %v1118, %v1110
    %v1831 = vpack.c.b16 %v1119, %v1111
    %v1832 = vpack.c.b16 %v1120, %v1112
    %v1833 = vpack.c.b16 %v1121, %v1113
    %v1834 = vpack.c.b16 %v1122, %v1114
    %v1835 = vpack.c.b16 %v1123, %v1115
    %v1836 = vpack.c.b16 %v1124, %v1116
    %v1837 = vpack.c.b16 %v1133, %v1125
    %v1838 = vpack.c.b16 %v1134, %v1126
    %v1839 = vpack.c.b16 %v1135, %v1127
    %v1840 = vpack.c.b16 %v1136, %v1128
    %v1841 = vpack.c.b16 %v1137, %v1129
    %v1842 = vpack.c.b16 %v1138, %v1130
    %v1843 = vpack.c.b16 %v1139, %v1131
    %v1844 = vpack.c.b16 %v1140, %v1132
    %v1845 = vpack.c.b16 %v1149, %v1141
    %v1846 = vpack.c.b16 %v1150, %v1142
    %v1847 = vpack.c.b16 %v1151, %v1143
    %v1848 = vpack.c.b16 %v1152, %v1144
    %v1849 = vpack.c.b16 %v1153, %v1145
    %v1850 = vpack.c.b16 %v1154, %v1146
    %v1851 = vpack.c.b16 %v1155, %v1147
    %v1852 = vpack.c.b16 %v1156, %v1148
    %v1853 = vpack.c.b16 %v1165, %v1157
    %v1854 = vpack.c.b16 %v1166, %v1158
    %v1855 = vpack.c.b16 %v1167, %v1159
    %v1856 = vpack.c.b16 %v1168, %v1160
    %v1857 = vpack.c.b16 %v1169, %v1161
    %v1858 = vpack.c.b16 %v1170, %v1162
    %v1859 = vpack.c.b16 %v1171, %v1163
    %v1860 = vpack.c.b16 %v1172, %v1164
    %v1861 = vpack.c.b16 %v1181, %v1173
    %v1862 = vpack.c.b16 %v1182, %v1174
    %v1863 = vpack.c.b16 %v1183, %v1175
    %v1864 = vpack.c.b16 %v1184, %v1176
    %v1865 = vpack.c.b16 %v1185, %v1177
    %v1866 = vpack.c.b16 %v1186, %v1178
    %v1867 = vpack.c.b16 %v1187, %v1179
    %v1868 = vpack.c.b16 %v1188, %v1180
    %v1869 = vpack.c.b16 %v1197, %v1189
    %v1870 = vpack.c.b16 %v1198, %v1190
    %v1871 = vpack.c.b16 %v1199, %v1191
    %v1872 = vpack.c.b16 %v1200, %v1192
    %v1873 = vpack.c.b16 %v1201, %v1193
    %v1874 = vpack.c.b16 %v1202, %v1194
    %v1875 = vpack.c.b16 %v1203, %v1195
    %v1876 = vpack.c.b16 %v1204, %v1196
    %v1877 = vpack.c.b16 %v1213, %v1205
    %v1878 = vpack.c.b16 %v1214, %v1206
    %v1879 = vpack.c.b16 %v1215, %v1207
    %v1880 = vpack.c.b16 %v1216, %v1208
    %v1881 = vpack.c.b16 %v1217, %v1209
    %v1882 = vpack.c.b16 %v1218, %v1210
    %v1883 = vpack.c.b16 %v1219, %v1211
    %v1884 = vpack.c.b16 %v1220, %v1212
    %v1885 = vpack.c.b16 %v1229, %v1221
    %v1886 = vpack.c.b16 %v1230, %v1222
    %v1887 = vpack.c.b16 %v1231, %v1223
    %v1888 = vpack.c.b16 %v1232, %v1224
    %v1889 = vpack.c.b16 %v1233, %v1225
    %v1890 = vpack.c.b16 %v1234, %v1226
    %v1891 = vpack.c.b16 %v1235, %v1227
    %v1892 = vpack.c.b16 %v1236, %v1228
    %v1893 = vpack.c.b16 %v1245, %v1237
    %v1894 = vpack.c.b16 %v1246, %v1238
    %v1895 = vpack.c.b16 %v1247, %v1239
    %v1896 = vpack.c.b16 %v1248, %v1240
    %v1897 = vpack.c.b16 %v1249, %v1241
    %v1898 = vpack.c.b16 %v1250, %v1242
    %v1899 = vpack.c.b16 %v1251, %v1243
    %v1900 = vpack.c.b16 %v1252, %v1244
    %v1901 = vpack.c.b16 %v1261, %v1253
    %v1902 = vpack.c.b16 %v1262, %v1254
    %v1903 = vpack.c.b16 %v1263, %v1255
    %v1904 = vpack.c.b16 %v1264, %v1256
    %v1905 = vpack.c.b16 %v1265, %v1257
    %v1906 = vpack.c.b16 %v1266, %v1258
    %v1907 = vpack.c.b16 %v1267, %v1259
    %v1908 = vpack.c.b16 %v1268, %v1260
    %v1909 = vpack.c.b16 %v1277, %v1269
    %v1910 = vpack.c.b16 %v1278, %v1270
    %v1911 = vpack.c.b16 %v1279, %v1271
    %v1912 = vpack.c.b16 %v1280, %v1272
    %v1913 = vpack.c.b16 %v1281, %v1273
    %v1914 = vpack.c.b16 %v1282, %v1274
    %v1915 = vpack.c.b16 %v1283, %v1275
    %v1916 = vpack.c.b16 %v1284, %v1276
    %v1917 = vpack.c.b16 %v1293, %v1285
    %v1918 = vpack.c.b16 %v1294, %v1286
    %v1919 = vpack.c.b16 %v1295, %v1287
    %v1920 = vpack.c.b16 %v1296, %v1288
    %v1921 = vpack.c.b16 %v1297, %v1289
    %v1922 = vpack.c.b16 %v1298, %v1290
    %v1923 = vpack.c.b16 %v1299, %v1291
    %v1924 = vpack.c.b16 %v1300, %v1292
    %v1925 = vpack.c.b16 %v1309, %v1301
    %v1926 = vpack.c.b16 %v1310, %v1302
    %v1927 = vpack.c.b16 %v1311, %v1303
    %v1928 = vpack.c.b16 %v1312, %v1304
    %v1929 = vpack.c.b16 %v1313, %v1305
    %v1930 = vpack.c.b16 %v1314, %v1306
    %v1931 = vpack.c.b16 %v1315, %v1307
    %v1932 = vpack.c.b16 %v1316, %v1308
    %v1933 = vpack.c.b16 %v1325, %v1317
    %v1934 = vpack.c.b16 %v1326, %v1318
    %v1935 = vpack.c.b16 %v1327, %v1319
    %v1936 = vpack.c.b16 %v1328, %v1320
    %v1937 = vpack.c.b16 %v1329, %v1321
    %v1938 = vpack.c.b16 %v1330, %v1322
    %v1939 = vpack.c.b16 %v1331, %v1323
    %v1940 = vpack.c.b16 %v1332, %v1324
    %v1941 = vpack.c.b16 %v1341, %v1333
    %v1942 = vpack.c.b16 %v1342, %v1334
    %v1943 = vpack.c.b16 %v1343, %v1335
    %v1944 = vpack.c.b16 %v1344, %v1336
    %v1945 = vpack.c.b16 %v1345, %v1337
    %v1946 = vpack.c.b16 %v1346, %v1338
    %v1947 = vpack.c.b16 %v1347, %v1339
    %v1948 = vpack.c.b16 %v1348, %v1340
    %v1949 = vpack.c.b16 %v1357, %v1349
    %v1950 = vpack.c.b16 %v1358, %v1350
    %v1951 = vpack.c.b16 %v1359, %v1351
    %v1952 = vpack.c.b16 %v1360, %v1352
    %v1953 = vpack.c.b16 %v1361, %v1353
    %v1954 = vpack.c.b16 %v1362, %v1354
    %v1955 = vpack.c.b16 %v1363, %v1355
    %v1956 = vpack.c.b16 %v1364, %v1356
    %v1957 = vpack.c.b16 %v1373, %v1365
    %v1958 = vpack.c.b16 %v1374, %v1366
    %v1959 = vpack.c.b16 %v1375, %v1367
    %v1960 = vpack.c.b16 %v1376, %v1368
    %v1961 = vpack.c.b16 %v1377, %v1369
    %v1962 = vpack.c.b16 %v1378, %v1370
    %v1963 = vpack.c.b16 %v1379, %v1371
    %v1964 = vpack.c.b16 %v1380, %v1372
    %v1965 = vpack.c.b16 %v1389, %v1381
    %v1966 = vpack.c.b16 %v1390, %v1382
    %v1967 = vpack.c.b16 %v1391, %v1383
    %v1968 = vpack.c.b16 %v1392, %v1384
    %v1969 = vpack.c.b16 %v1393, %v1385
    %v1970 = vpack.c.b16 %v1394, %v1386
    %v1971 = vpack.c.b16 %v1395, %v1387
    %v1972 = vpack.c.b16 %v1396, %v1388
    %v1973 = vpack.c.b16 %v1405, %v1397
    %v1974 = vpack.c.b16 %v1406, %v1398
    %v1975 = vpack.c.b16 %v1407, %v1399
    %v1976 = vpack.c.b16 %v1408, %v1400
    %v1977 = vpack.c.b16 %v1409, %v1401
    %v1978 = vpack.c.b16 %v1410, %v1402
    %v1979 = vpack.c.b16 %v1411, %v1403
    %v1980 = vpack.c.b16 %v1412, %v1404
    %v1981 = vpack.c.b16 %v1421, %v1413
    %v1982 = vpack.c.b16 %v1422, %v1414
    %v1983 = vpack.c.b16 %v1423, %v1415
    %v1984 = vpack.c.b16 %v1424, %v1416
    %v1985 = vpack.c.b16 %v1425, %v1417
    %v1986 = vpack.c.b16 %v1426, %v1418
    %v1987 = vpack.c.b16 %v1427, %v1419
    %v1988 = vpack.c.b16 %v1428, %v1420
    %v1989 = vpack.c.b16 %v1437, %v1429
    %v1990 = vpack.c.b16 %v1438, %v1430
    %v1991 = vpack.c.b16 %v1439, %v1431
    %v1992 = vpack.c.b16 %v1440, %v1432
    %v1993 = vpack.c.b16 %v1441, %v1433
    %v1994 = vpack.c.b16 %v1442, %v1434
    %v1995 = vpack.c.b16 %v1443, %v1435
    %v1996 = vpack.c.b16 %v1444, %v1436
    %v1997 = vpack.c.b16 %v1453, %v1445
    %v1998 = vpack.c.b16 %v1454, %v1446
    %v1999 = vpack.c.b16 %v1455, %v1447
    %v2000 = vpack.c.b16 %v1456, %v1448
    %v2001 = vpack.c.b16 %v1457, %v1449
    %v2002 = vpack.c.b16 %v1458, %v1450
    %v2003 = vpack.c.b16 %v1459, %v1451
    %v2004 = vpack.c.b16 %v1460, %v1452
    %v2005 = vpack.c.b16 %v1469, %v1461
    %v2006 = vpack.c.b16 %v1470, %v1462
    %v2007 = vpack.c.b16 %v1471, %v1463
    %v2008 = vpack.c.b16 %v1472, %v1464
    %v2009 = vpack.c.b16 %v1473, %v1465
    %v2010 = vpack.c.b16 %v1474, %v1466
    %v2011 = vpack.c.b16 %v1475, %v1467
    %v2012 = vpack.c.b16 %v1476, %v1468
    %v2013 = vpack.c.b16 %v1485, %v1477
    %v2014 = vpack.c.b16 %v1486, %v1478
    %v2015 = vpack.c.b16 %v1487, %v1479
    %v2016 = vpack.c.b16 %v1488, %v1480
    %v2017 = vpack.c.b16 %v1489, %v1481
    %v2018 = vpack.c.b16 %v1490, %v1482
    %v2019 = vpack.c.b16 %v1491, %v1483
    %v2020 = vpack.c.b16 %v1492, %v1484
    %v2021 = vpack.c.b16 %v1501, %v1493
    %v2022 = vpack.c.b16 %v1502, %v1494
    %v2023 = vpack.c.b16 %v1503, %v1495
    %v2024 = vpack.c.b16 %v1504, %v1496
    %v2025 = vpack.c.b16 %v1505, %v1497
    %v2026 = vpack.c.b16 %v1506, %v1498
    %v2027 = vpack.c.b16 %v1507, %v1499
    %v2028 = vpack.c.b16 %v1508, %v1500
    %v2029 = vpack.c.b16 %v1517, %v1509
    %v2030 = vpack.c.b16 %v1518, %v1510
    %v2031 = vpack.c.b16 %v1519, %v1511
    %v2032 = vpack.c.b16 %v1520, %v1512
    %v2033 = vpack.c.b16 %v1521, %v1513
    %v2034 = vpack.c.b16 %v1522, %v1514
    %v2035 = vpack.c.b16 %v1523, %v1515
    %v2036 = vpack.c.b16 %v1524, %v1516
    %v2037 = vpack.c.b16 %v1533, %v1525
    %v2038 = vpack.c.b16 %v1534, %v1526
    %v2039 = vpack.c.b16 %v1535, %v1527
    %v2040 = vpack.c.b16 %v1536, %v1528
    %v2041 = vpack.c.b16 %v1537, %v1529
    %v2042 = vpack.c.b16 %v1538, %v1530
    %v2043 = vpack.c.b16 %v1539, %v1531
    %v2044 = vpack.c.b16 %v1540, %v1532
    %v2045 = vpack.c.b16 %v1549, %v1541
    %v2046 = vpack.c.b16 %v1550, %v1542
    %v2047 = vpack.c.b16 %v1551, %v1543
    %v2048 = vpack.c.b16 %v1552, %v1544
    %v2049 = vpack.c.b16 %v1553, %v1545
    %v2050 = vpack.c.b16 %v1554, %v1546
    %v2051 = vpack.c.b16 %v1555, %v1547
    %v2052 = vpack.c.b16 %v1556, %v1548
    %v2053 = vpack.c.b16 %v1565, %v1557
    %v2054 = vpack.c.b16 %v1566, %v1558
    %v2055 = vpack.c.b16 %v1567, %v1559
    %v2056 = vpack.c.b16 %v1568, %v1560
    %v2057 = vpack.c.b16 %v1569, %v1561
    %v2058 = vpack.c.b16 %v1570, %v1562
    %v2059 = vpack.c.b16 %v1571, %v1563
    %v2060 = vpack.c.b16 %v1572, %v1564
    %v2061 = vpack.c.b16 %v1581, %v1573
    %v2062 = vpack.c.b16 %v1582, %v1574
    %v2063 = vpack.c.b16 %v1583, %v1575
    %v2064 = vpack.c.b16 %v1584, %v1576
    %v2065 = vpack.c.b16 %v1585, %v1577
    %v2066 = vpack.c.b16 %v1586, %v1578
    %v2067 = vpack.c.b16 %v1587, %v1579
    %v2068 = vpack.c.b16 %v1588, %v1580
    %v2069 = vpack.c.b16 %v1597, %v1589
    %v2070 = vpack.c.b16 %v1598, %v1590
    %v2071 = vpack.c.b16 %v1599, %v1591
    %v2072 = vpack.c.b16 %v1600, %v1592
    %v2073 = vpack.c.b16 %v1601, %v1593
    %v2074 = vpack.c.b16 %v1602, %v1594
    %v2075 = vpack.c.b16 %v1603, %v1595
    %v2076 = vpack.c.b16 %v1604, %v1596
    %v2077 = vpack.c.b16 %v1613, %v1605
    %v2078 = vpack.c.b16 %v1614, %v1606
    %v2079 = vpack.c.b16 %v1615, %v1607
    %v2080 = vpack.c.b16 %v1616, %v1608
    %v2081 = vpack.c.b16 %v1617, %v1609
    %v2082 = vpack.c.b16 %v1618, %v1610
    %v2083 = vpack.c.b16 %v1619, %v1611
    %v2084 = vpack.c.b16 %v1620, %v1612
    %v2085 = vpack.c.b16 %v1629, %v1621
    %v2086 = vpack.c.b16 %v1630, %v1622
    %v2087 = vpack.c.b16 %v1631, %v1623
    %v2088 = vpack.c.b16 %v1632, %v1624
    %v2089 = vpack.c.b16 %v1633, %v1625
    %v2090 = vpack.c.b16 %v1634, %v1626
    %v2091 = vpack.c.b16 %v1635, %v1627
    %v2092 = vpack.c.b16 %v1636, %v1628
    %v2093 = vpack.c.b16 %v1645, %v1637
    %v2094 = vpack.c.b16 %v1646, %v1638
    %v2095 = vpack.c.b16 %v1647, %v1639
    %v2096 = vpack.c.b16 %v1648, %v1640
    %v2097 = vpack.c.b16 %v1649, %v1641
    %v2098 = vpack.c.b16 %v1650, %v1642
    %v2099 = vpack.c.b16 %v1651, %v1643
    %v2100 = vpack.c.b16 %v1652, %v1644
    %v2101 = vpack.c.b16 %v1661, %v1653
    %v2102 = vpack.c.b16 %v1662, %v1654
    %v2103 = vpack.c.b16 %v1663, %v1655
    %v2104 = vpack.c.b16 %v1664, %v1656
    %v2105 = vpack.c.b16 %v1665, %v1657
    %v2106 = vpack.c.b16 %v1666, %v1658
    %v2107 = vpack.c.b16 %v1667, %v1659
    %v2108 = vpack.c.b16 %v1668, %v1660
    %v2109 = vpack.c.b16 %v1677, %v1669
    %v2110 = vpack.c.b16 %v1678, %v1670
    %v2111 = vpack.c.b16 %v1679, %v1671
    %v2112 = vpack.c.b16 %v1680, %v1672
    %v2113 = vpack.c.b16 %v1681, %v1673
    %v2114 = vpack.c.b16 %v1682, %v1674
    %v2115 = vpack.c.b16 %v1683, %v1675
    %v2116 = vpack.c.b16 %v1684, %v1676
    %v2117 = vpack.c.b16 %v1693, %v1685
    %v2118 = vpack.c.b16 %v1694, %v1686
    %v2119 = vpack.c.b16 %v1695, %v1687
    %v2120 = vpack.c.b16 %v1696, %v1688
    %v2121 = vpack.c.b16 %v1697, %v1689
    %v2122 = vpack.c.b16 %v1698, %v1690
    %v2123 = vpack.c.b16 %v1699, %v1691
    %v2124 = vpack.c.b16 %v1700, %v1692
    %v2125 = vpack.c.b16 %v1709, %v1701
    %v2126 = vpack.c.b16 %v1710, %v1702
    %v2127 = vpack.c.b16 %v1711, %v1703
    %v2128 = vpack.c.b16 %v1712, %v1704
    %v2129 = vpack.c.b16 %v1713, %v1705
    %v2130 = vpack.c.b16 %v1714, %v1706
    %v2131 = vpack.c.b16 %v1715, %v1707
    %v2132 = vpack.c.b16 %v1716, %v1708
    %v2133 = vpack.c.b16 %v1725, %v1717
    %v2134 = vpack.c.b16 %v1726, %v1718
    %v2135 = vpack.c.b16 %v1727, %v1719
    %v2136 = vpack.c.b16 %v1728, %v1720
    %v2137 = vpack.c.b16 %v1729, %v1721
    %v2138 = vpack.c.b16 %v1730, %v1722
    %v2139 = vpack.c.b16 %v1731, %v1723
    %v2140 = vpack.c.b16 %v1732, %v1724
    %v2141 = vpack.c.b16 %v1741, %v1733
    %v2142 = vpack.c.b16 %v1742, %v1734
    %v2143 = vpack.c.b16 %v1743, %v1735
    %v2144 = vpack.c.b16 %v1744, %v1736
    %v2145 = vpack.c.b16 %v1745, %v1737
    %v2146 = vpack.c.b16 %v1746, %v1738
    %v2147 = vpack.c.b16 %v1747, %v1739
    %v2148 = vpack.c.b16 %v1748, %v1740
    %v2149 = vpack.c.b16 %v1757, %v1749
    %v2150 = vpack.c.b16 %v1758, %v1750
    %v2151 = vpack.c.b16 %v1759, %v1751
    %v2152 = vpack.c.b16 %v1760, %v1752
    %v2153 = vpack.c.b16 %v1761, %v1753
    %v2154 = vpack.c.b16 %v1762, %v1754
    %v2155 = vpack.c.b16 %v1763, %v1755
    %v2156 = vpack.c.b16 %v1764, %v1756
    %vm2549 = vcmask 130048
    %v2551 = vsel %vm2549, %v154, 0
    %2553 = vmatprep.subr.bf16.mxu0 %v1766
    %2554 = vmatpush1.bf16.msra.mxu0 %v1765
    %2555 = vmatprep.subr.bf16.mxu0 %v1774
    %2556 = vmatpush1.bf16.msra.mxu0 %v1773
    %2557 = vmatprep.subr.bf16.mxu0 %v1782
    %2558 = vmatpush1.bf16.msra.mxu0 %v1781
    %2559 = vmatprep.subr.bf16.mxu0 %v1790
    %2560 = vmatpush1.bf16.msra.mxu0 %v1789
    %2561 = vmatprep.subr.bf16.mxu0 %v1798
    %2562 = vmatpush1.bf16.msra.mxu0 %v1797
    %2563 = vmatprep.subr.bf16.mxu0 %v1806
    %2564 = vmatpush1.bf16.msra.mxu0 %v1805
    %2565 = vmatprep.subr.bf16.mxu0 %v1814
    %2566 = vmatpush1.bf16.msra.mxu0 %v1813
    %2567 = vmatprep.subr.bf16.mxu0 %v1822
    %2568 = vmatpush1.bf16.msra.mxu0 %v1821
    %2569 = vmatprep.subr.bf16.mxu0 %v1830
    %2570 = vmatpush1.bf16.msra.mxu0 %v1829
    %2571 = vmatprep.subr.bf16.mxu0 %v1838
    %2572 = vmatpush1.bf16.msra.mxu0 %v1837
    %2573 = vmatprep.subr.bf16.mxu0 %v1846
    %2574 = vmatpush1.bf16.msra.mxu0 %v1845
    %2575 = vmatprep.subr.bf16.mxu0 %v1854
    %2576 = vmatpush1.bf16.msra.mxu0 %v1853
    %2577 = vmatprep.subr.bf16.mxu0 %v1862
    %2578 = vmatpush1.bf16.msra.mxu0 %v1861
    %2579 = vmatprep.subr.bf16.mxu0 %v1870
    %2580 = vmatpush1.bf16.msra.mxu0 %v1869
    %2581 = vmatprep.subr.bf16.mxu0 %v1878
    %2582 = vmatpush1.bf16.msra.mxu0 %v1877
    %2583 = vmatprep.subr.bf16.mxu0 %v1886
    %2584 = vmatpush1.bf16.msra.mxu0 %v1885
    %2585 = vmatprep.mubr.bf16.mxu0 %v149
    %2586 = vmatmul.mubr.bf16.gmra.mrb[0].mxu0 %v148
    %v2587 = vpop.f32.mrb[0].mxu0
    %v2588 = vadd.f32 %v552, %v2587
    %v2589 = vpop.f32.mrb[0].mxu0
    %v2590 = vadd.f32 %v556, %v2589
    %v2591 = vpop.f32.mrb[0].mxu0
    %v2592 = vpop.f32.mrb[0].mxu0
    %2593 = vdwg.mxu0
    %2594 = vmatprep.subr.bf16.mxu0 %v1894
    %2595 = vmatpush1.bf16.msra.mxu0 %v1893
    %2596 = vmatprep.subr.bf16.mxu0 %v1902
    %2597 = vmatpush1.bf16.msra.mxu0 %v1901
    %2598 = vmatprep.subr.bf16.mxu0 %v1910
    %2599 = vmatpush1.bf16.msra.mxu0 %v1909
    %2600 = vmatprep.subr.bf16.mxu0 %v1918
    %2601 = vmatpush1.bf16.msra.mxu0 %v1917
    %2602 = vmatprep.subr.bf16.mxu0 %v1926
    %2603 = vmatpush1.bf16.msra.mxu0 %v1925
    %2604 = vmatprep.subr.bf16.mxu0 %v1934
    %2605 = vmatpush1.bf16.msra.mxu0 %v1933
    %2606 = vmatprep.subr.bf16.mxu0 %v1942
    %2607 = vmatpush1.bf16.msra.mxu0 %v1941
    %2608 = vmatprep.subr.bf16.mxu0 %v1950
    %2609 = vmatpush1.bf16.msra.mxu0 %v1949
    %2610 = vmatprep.subr.bf16.mxu0 %v1958
    %2611 = vmatpush1.bf16.msra.mxu0 %v1957
    %2612 = vmatprep.subr.bf16.mxu0 %v1966
    %2613 = vmatpush1.bf16.msra.mxu0 %v1965
    %2614 = vmatprep.subr.bf16.mxu0 %v1974
    %2615 = vmatpush1.bf16.msra.mxu0 %v1973
    %2616 = vmatprep.subr.bf16.mxu0 %v1982
    %2617 = vmatpush1.bf16.msra.mxu0 %v1981
    %2618 = vmatprep.subr.bf16.mxu0 %v1990
    %2619 = vmatpush1.bf16.msra.mxu0 %v1989
    %2620 = vmatprep.subr.bf16.mxu0 %v1998
    %2621 = vmatpush1.bf16.msra.mxu0 %v1997
    %2622 = vmatprep.subr.bf16.mxu0 %v2006
    %2623 = vmatpush1.bf16.msra.mxu0 %v2005
    %2624 = vmatprep.subr.bf16.mxu0 %v2014
    %2625 = vmatpush1.bf16.msra.mxu0 %v2013
    %2626 = vmatprep.mubr.bf16.mxu0 %v151
    %2627 = vmatmul.mubr.bf16.gmra.mrb[0].mxu0 %v150
    %v2628 = vpop.f32.mrb[0].mxu0
    %v2629 = vadd.f32 %v2588, %v2628
    %v2630 = vpop.f32.mrb[0].mxu0
    %v2631 = vadd.f32 %v2590, %v2630
    %v2632 = vpop.f32.mrb[0].mxu0
    %v2633 = vpop.f32.mrb[0].mxu0
    %2634 = vdwg.mxu0
    %2635 = vmatprep.subr.bf16.mxu0 %v2022
    %2636 = vmatpush1.bf16.msra.mxu0 %v2021
    %2637 = vmatprep.subr.bf16.mxu0 %v2030
    %2638 = vmatpush1.bf16.msra.mxu0 %v2029
    %2639 = vmatprep.subr.bf16.mxu0 %v2038
    %2640 = vmatpush1.bf16.msra.mxu0 %v2037
    %2641 = vmatprep.subr.bf16.mxu0 %v2046
    %2642 = vmatpush1.bf16.msra.mxu0 %v2045
    %2643 = vmatprep.subr.bf16.mxu0 %v2054
    %2644 = vmatpush1.bf16.msra.mxu0 %v2053
    %2645 = vmatprep.subr.bf16.mxu0 %v2062
    %2646 = vmatpush1.bf16.msra.mxu0 %v2061
    %2647 = vmatprep.subr.bf16.mxu0 %v2070
    %2648 = vmatpush1.bf16.msra.mxu0 %v2069
    %2649 = vmatprep.subr.bf16.mxu0 %v2078
    %2650 = vmatpush1.bf16.msra.mxu0 %v2077
    %2651 = vmatprep.subr.bf16.mxu0 %v2086
    %2652 = vmatpush1.bf16.msra.mxu0 %v2085
    %2653 = vmatprep.subr.bf16.mxu0 %v2094
    %2654 = vmatpush1.bf16.msra.mxu0 %v2093
    %2655 = vmatprep.subr.bf16.mxu0 %v2102
    %2656 = vmatpush1.bf16.msra.mxu0 %v2101
    %2657 = vmatprep.subr.bf16.mxu0 %v2110
    %2658 = vmatpush1.bf16.msra.mxu0 %v2109
    %2659 = vmatprep.subr.bf16.mxu0 %v2118
    %2660 = vmatpush1.bf16.msra.mxu0 %v2117
    %2661 = vmatprep.subr.bf16.mxu0 %v2126
    %2662 = vmatpush1.bf16.msra.mxu0 %v2125
    %2663 = vmatprep.subr.bf16.mxu0 %v2134
    %2664 = vmatpush1.bf16.msra.mxu0 %v2133
    %2665 = vmatprep.subr.bf16.mxu0 %v2142
    %2666 = vmatpush1.bf16.msra.mxu0 %v2141
    %2667 = vmatprep.mubr.bf16.mxu0 %v153
    %2668 = vmatmul.mubr.bf16.gmra.mrb[0].mxu0 %v152
    %v2669 = vpop.f32.mrb[0].mxu0
    %v2670 = vadd.f32 %v2629, %v2669
    %v2671 = vpop.f32.mrb[0].mxu0
    %v2672 = vadd.f32 %v2631, %v2671
    %v2673 = vpop.f32.mrb[0].mxu0
    %v2674 = vpop.f32.mrb[0].mxu0
    %2675 = vdwg.mxu0
    %2676 = vmatprep.subr.bf16.mxu0 %v2150
    %2677 = vmatpush1.bf16.msra.mxu0 %v2149
    %2678 = vmatprep.subr.bf16.mxu0 0
    %2679 = vmatpush1.bf16.msra.mxu0 0
    %2680 = vmatprep.subr.bf16.mxu0 0
    %2681 = vmatpush1.bf16.msra.mxu0 0
    %2682 = vmatprep.subr.bf16.mxu0 0
    %2683 = vmatpush1.bf16.msra.mxu0 0
    %2684 = vmatprep.subr.bf16.mxu0 0
    %2685 = vmatpush1.bf16.msra.mxu0 0
    %2686 = vmatprep.subr.bf16.mxu0 0
    %2687 = vmatpush1.bf16.msra.mxu0 0
    %2688 = vmatprep.subr.bf16.mxu0 0
    %2689 = vmatpush1.bf16.msra.mxu0 0
    %2690 = vmatprep.subr.bf16.mxu0 0
    %2691 = vmatpush1.bf16.msra.mxu0 0
    %2692 = vmatprep.subr.bf16.mxu0 0
    %2693 = vmatpush1.bf16.msra.mxu0 0
    %2694 = vmatprep.subr.bf16.mxu0 0
    %2695 = vmatpush1.bf16.msra.mxu0 0
    %2696 = vmatprep.subr.bf16.mxu0 0
    %2697 = vmatpush1.bf16.msra.mxu0 0
    %2698 = vmatprep.subr.bf16.mxu0 0
    %2699 = vmatpush1.bf16.msra.mxu0 0
    %2700 = vmatprep.subr.bf16.mxu0 0
    %2701 = vmatpush1.bf16.msra.mxu0 0
    %2702 = vmatprep.subr.bf16.mxu0 0
    %2703 = vmatpush1.bf16.msra.mxu0 0
    %2704 = vmatprep.subr.bf16.mxu0 0
    %2705 = vmatpush1.bf16.msra.mxu0 0
    %2706 = vmatprep.subr.bf16.mxu0 0
    %2707 = vmatpush1.bf16.msra.mxu0 0
    %2708 = vmatprep.mubr.bf16.mxu0 0
    %2709 = vmatmul.mubr.bf16.gmra.mrb[0].mxu0 %v2551
    %v2710 = vpop.f32.mrb[0].mxu0
    %v2711 = vadd.f32 %v2670, %v2710
    %v2712 = vpop.f32.mrb[0].mxu0
    %v2713 = vadd.f32 %v2672, %v2712
    %v2714 = vpop.f32.mrb[0].mxu0
    %v2715 = vpop.f32.mrb[0].mxu0
    %2716 = vdwg.mxu0
    %2717 = vmatprep.subr.bf16.mxu0 %v1768
    %2718 = vmatpush1.bf16.msra.mxu0 %v1767
    %2719 = vmatprep.subr.bf16.mxu0 %v1776
    %2720 = vmatpush1.bf16.msra.mxu0 %v1775
    %2721 = vmatprep.subr.bf16.mxu0 %v1784
    %2722 = vmatpush1.bf16.msra.mxu0 %v1783
    %2723 = vmatprep.subr.bf16.mxu0 %v1792
    %2724 = vmatpush1.bf16.msra.mxu0 %v1791
    %2725 = vmatprep.subr.bf16.mxu0 %v1800
    %2726 = vmatpush1.bf16.msra.mxu0 %v1799
    %2727 = vmatprep.subr.bf16.mxu0 %v1808
    %2728 = vmatpush1.bf16.msra.mxu0 %v1807
    %2729 = vmatprep.subr.bf16.mxu0 %v1816
    %2730 = vmatpush1.bf16.msra.mxu0 %v1815
    %2731 = vmatprep.subr.bf16.mxu0 %v1824
    %2732 = vmatpush1.bf16.msra.mxu0 %v1823
    %2733 = vmatprep.subr.bf16.mxu0 %v1832
    %2734 = vmatpush1.bf16.msra.mxu0 %v1831
    %2735 = vmatprep.subr.bf16.mxu0 %v1840
    %2736 = vmatpush1.bf16.msra.mxu0 %v1839
    %2737 = vmatprep.subr.bf16.mxu0 %v1848
    %2738 = vmatpush1.bf16.msra.mxu0 %v1847
    %2739 = vmatprep.subr.bf16.mxu0 %v1856
    %2740 = vmatpush1.bf16.msra.mxu0 %v1855
    %2741 = vmatprep.subr.bf16.mxu0 %v1864
    %2742 = vmatpush1.bf16.msra.mxu0 %v1863
    %2743 = vmatprep.subr.bf16.mxu0 %v1872
    %2744 = vmatpush1.bf16.msra.mxu0 %v1871
    %2745 = vmatprep.subr.bf16.mxu0 %v1880
    %2746 = vmatpush1.bf16.msra.mxu0 %v1879
    %2747 = vmatprep.subr.bf16.mxu0 %v1888
    %2748 = vmatpush1.bf16.msra.mxu0 %v1887
    %2749 = vmatprep.mubr.bf16.mxu0 %v149
    %2750 = vmatmul.mubr.bf16.gmra.mrb[0].mxu0 %v148
    %v2751 = vpop.f32.mrb[0].mxu0
    %v2752 = vadd.f32 %v560, %v2751
    %v2753 = vpop.f32.mrb[0].mxu0
    %v2754 = vadd.f32 %v564, %v2753
    %v2755 = vpop.f32.mrb[0].mxu0
    %v2756 = vpop.f32.mrb[0].mxu0
    %2757 = vdwg.mxu0
    %2758 = vmatprep.subr.bf16.mxu0 %v1896
    %2759 = vmatpush1.bf16.msra.mxu0 %v1895
    %2760 = vmatprep.subr.bf16.mxu0 %v1904
    %2761 = vmatpush1.bf16.msra.mxu0 %v1903
    %2762 = vmatprep.subr.bf16.mxu0 %v1912
    %2763 = vmatpush1.bf16.msra.mxu0 %v1911
    %2764 = vmatprep.subr.bf16.mxu0 %v1920
    %2765 = vmatpush1.bf16.msra.mxu0 %v1919
    %2766 = vmatprep.subr.bf16.mxu0 %v1928
    %2767 = vmatpush1.bf16.msra.mxu0 %v1927
    %2768 = vmatprep.subr.bf16.mxu0 %v1936
    %2769 = vmatpush1.bf16.msra.mxu0 %v1935
    %2770 = vmatprep.subr.bf16.mxu0 %v1944
    %2771 = vmatpush1.bf16.msra.mxu0 %v1943
    %2772 = vmatprep.subr.bf16.mxu0 %v1952
    %2773 = vmatpush1.bf16.msra.mxu0 %v1951
    %2774 = vmatprep.subr.bf16.mxu0 %v1960
    %2775 = vmatpush1.bf16.msra.mxu0 %v1959
    %2776 = vmatprep.subr.bf16.mxu0 %v1968
    %2777 = vmatpush1.bf16.msra.mxu0 %v1967
    %2778 = vmatprep.subr.bf16.mxu0 %v1976
    %2779 = vmatpush1.bf16.msra.mxu0 %v1975
    %2780 = vmatprep.subr.bf16.mxu0 %v1984
    %2781 = vmatpush1.bf16.msra.mxu0 %v1983
    %2782 = vmatprep.subr.bf16.mxu0 %v1992
    %2783 = vmatpush1.bf16.msra.mxu0 %v1991
    %2784 = vmatprep.subr.bf16.mxu0 %v2000
    %2785 = vmatpush1.bf16.msra.mxu0 %v1999
    %2786 = vmatprep.subr.bf16.mxu0 %v2008
    %2787 = vmatpush1.bf16.msra.mxu0 %v2007
    %2788 = vmatprep.subr.bf16.mxu0 %v2016
    %2789 = vmatpush1.bf16.msra.mxu0 %v2015
    %2790 = vmatprep.mubr.bf16.mxu0 %v151
    %2791 = vmatmul.mubr.bf16.gmra.mrb[0].mxu0 %v150
    %v2792 = vpop.f32.mrb[0].mxu0
    %v2793 = vadd.f32 %v2752, %v2792
    %v2794 = vpop.f32.mrb[0].mxu0
    %v2795 = vadd.f32 %v2754, %v2794
    %v2796 = vpop.f32.mrb[0].mxu0
    %v2797 = vpop.f32.mrb[0].mxu0
    %2798 = vdwg.mxu0
    %2799 = vmatprep.subr.bf16.mxu0 %v2024
    %2800 = vmatpush1.bf16.msra.mxu0 %v2023
    %2801 = vmatprep.subr.bf16.mxu0 %v2032
    %2802 = vmatpush1.bf16.msra.mxu0 %v2031
    %2803 = vmatprep.subr.bf16.mxu0 %v2040
    %2804 = vmatpush1.bf16.msra.mxu0 %v2039
    %2805 = vmatprep.subr.bf16.mxu0 %v2048
    %2806 = vmatpush1.bf16.msra.mxu0 %v2047
    %2807 = vmatprep.subr.bf16.mxu0 %v2056
    %2808 = vmatpush1.bf16.msra.mxu0 %v2055
    %2809 = vmatprep.subr.bf16.mxu0 %v2064
    %2810 = vmatpush1.bf16.msra.mxu0 %v2063
    %2811 = vmatprep.subr.bf16.mxu0 %v2072
    %2812 = vmatpush1.bf16.msra.mxu0 %v2071
    %2813 = vmatprep.subr.bf16.mxu0 %v2080
    %2814 = vmatpush1.bf16.msra.mxu0 %v2079
    %2815 = vmatprep.subr.bf16.mxu0 %v2088
    %2816 = vmatpush1.bf16.msra.mxu0 %v2087
    %2817 = vmatprep.subr.bf16.mxu0 %v2096
    %2818 = vmatpush1.bf16.msra.mxu0 %v2095
    %2819 = vmatprep.subr.bf16.mxu0 %v2104
    %2820 = vmatpush1.bf16.msra.mxu0 %v2103
    %2821 = vmatprep.subr.bf16.mxu0 %v2112
    %2822 = vmatpush1.bf16.msra.mxu0 %v2111
    %2823 = vmatprep.subr.bf16.mxu0 %v2120
    %2824 = vmatpush1.bf16.msra.mxu0 %v2119
    %2825 = vmatprep.subr.bf16.mxu0 %v2128
    %2826 = vmatpush1.bf16.msra.mxu0 %v2127
    %2827 = vmatprep.subr.bf16.mxu0 %v2136
    %2828 = vmatpush1.bf16.msra.mxu0 %v2135
    %2829 = vmatprep.subr.bf16.mxu0 %v2144
    %2830 = vmatpush1.bf16.msra.mxu0 %v2143
    %2831 = vmatprep.mubr.bf16.mxu0 %v153
    %2832 = vmatmul.mubr.bf16.gmra.mrb[0].mxu0 %v152
    %v2833 = vpop.f32.mrb[0].mxu0
    %v2834 = vadd.f32 %v2793, %v2833
    %v2835 = vpop.f32.mrb[0].mxu0
    %v2836 = vadd.f32 %v2795, %v2835
    %v2837 = vpop.f32.mrb[0].mxu0
    %v2838 = vpop.f32.mrb[0].mxu0
    %2839 = vdwg.mxu0
    %2840 = vmatprep.subr.bf16.mxu0 %v2152
    %2841 = vmatpush1.bf16.msra.mxu0 %v2151
    %2842 = vmatprep.subr.bf16.mxu0 0
    %2843 = vmatpush1.bf16.msra.mxu0 0
    %2844 = vmatprep.subr.bf16.mxu0 0
    %2845 = vmatpush1.bf16.msra.mxu0 0
    %2846 = vmatprep.subr.bf16.mxu0 0
    %2847 = vmatpush1.bf16.msra.mxu0 0
    %2848 = vmatprep.subr.bf16.mxu0 0
    %2849 = vmatpush1.bf16.msra.mxu0 0
    %2850 = vmatprep.subr.bf16.mxu0 0
    %2851 = vmatpush1.bf16.msra.mxu0 0
    %2852 = vmatprep.subr.bf16.mxu0 0
    %2853 = vmatpush1.bf16.msra.mxu0 0
    %2854 = vmatprep.subr.bf16.mxu0 0
    %2855 = vmatpush1.bf16.msra.mxu0 0
    %2856 = vmatprep.subr.bf16.mxu0 0
    %2857 = vmatpush1.bf16.msra.mxu0 0
    %2858 = vmatprep.subr.bf16.mxu0 0
    %2859 = vmatpush1.bf16.msra.mxu0 0
    %2860 = vmatprep.subr.bf16.mxu0 0
    %2861 = vmatpush1.bf16.msra.mxu0 0
    %2862 = vmatprep.subr.bf16.mxu0 0
    %2863 = vmatpush1.bf16.msra.mxu0 0
    %2864 = vmatprep.subr.bf16.mxu0 0
    %2865 = vmatpush1.bf16.msra.mxu0 0
    %2866 = vmatprep.subr.bf16.mxu0 0
    %2867 = vmatpush1.bf16.msra.mxu0 0
    %2868 = vmatprep.subr.bf16.mxu0 0
    %2869 = vmatpush1.bf16.msra.mxu0 0
    %2870 = vmatprep.subr.bf16.mxu0 0
    %2871 = vmatpush1.bf16.msra.mxu0 0
    %2872 = vmatprep.mubr.bf16.mxu0 0
    %2873 = vmatmul.mubr.bf16.gmra.mrb[0].mxu0 %v2551
    %v2874 = vpop.f32.mrb[0].mxu0
    %v2875 = vadd.f32 %v2834, %v2874
    %v2876 = vpop.f32.mrb[0].mxu0
    %v2877 = vadd.f32 %v2836, %v2876
    %v2878 = vpop.f32.mrb[0].mxu0
    %v2879 = vpop.f32.mrb[0].mxu0
    %2880 = vdwg.mxu0
    %2881 = vmatprep.subr.bf16.mxu0 %v1770
    %2882 = vmatpush1.bf16.msra.mxu0 %v1769
    %2883 = vmatprep.subr.bf16.mxu0 %v1778
    %2884 = vmatpush1.bf16.msra.mxu0 %v1777
    %2885 = vmatprep.subr.bf16.mxu0 %v1786
    %2886 = vmatpush1.bf16.msra.mxu0 %v1785
    %2887 = vmatprep.subr.bf16.mxu0 %v1794
    %2888 = vmatpush1.bf16.msra.mxu0 %v1793
    %2889 = vmatprep.subr.bf16.mxu0 %v1802
    %2890 = vmatpush1.bf16.msra.mxu0 %v1801
    %2891 = vmatprep.subr.bf16.mxu0 %v1810
    %2892 = vmatpush1.bf16.msra.mxu0 %v1809
    %2893 = vmatprep.subr.bf16.mxu0 %v1818
    %2894 = vmatpush1.bf16.msra.mxu0 %v1817
    %2895 = vmatprep.subr.bf16.mxu0 %v1826
    %2896 = vmatpush1.bf16.msra.mxu0 %v1825
    %2897 = vmatprep.subr.bf16.mxu0 %v1834
    %2898 = vmatpush1.bf16.msra.mxu0 %v1833
    %2899 = vmatprep.subr.bf16.mxu0 %v1842
    %2900 = vmatpush1.bf16.msra.mxu0 %v1841
    %2901 = vmatprep.subr.bf16.mxu0 %v1850
    %2902 = vmatpush1.bf16.msra.mxu0 %v1849
    %2903 = vmatprep.subr.bf16.mxu0 %v1858
    %2904 = vmatpush1.bf16.msra.mxu0 %v1857
    %2905 = vmatprep.subr.bf16.mxu0 %v1866
    %2906 = vmatpush1.bf16.msra.mxu0 %v1865
    %2907 = vmatprep.subr.bf16.mxu0 %v1874
    %2908 = vmatpush1.bf16.msra.mxu0 %v1873
    %2909 = vmatprep.subr.bf16.mxu0 %v1882
    %2910 = vmatpush1.bf16.msra.mxu0 %v1881
    %2911 = vmatprep.subr.bf16.mxu0 %v1890
    %2912 = vmatpush1.bf16.msra.mxu0 %v1889
    %2913 = vmatprep.mubr.bf16.mxu0 %v149
    %2914 = vmatmul.mubr.bf16.gmra.mrb[0].mxu0 %v148
    %v2915 = vpop.f32.mrb[0].mxu0
    %v2916 = vadd.f32 %v568, %v2915
    %v2917 = vpop.f32.mrb[0].mxu0
    %v2918 = vadd.f32 %v572, %v2917
    %v2919 = vpop.f32.mrb[0].mxu0
    %v2920 = vpop.f32.mrb[0].mxu0
    %2921 = vdwg.mxu0
    %2922 = vmatprep.subr.bf16.mxu0 %v1898
    %2923 = vmatpush1.bf16.msra.mxu0 %v1897
    %2924 = vmatprep.subr.bf16.mxu0 %v1906
    %2925 = vmatpush1.bf16.msra.mxu0 %v1905
    %2926 = vmatprep.subr.bf16.mxu0 %v1914
    %2927 = vmatpush1.bf16.msra.mxu0 %v1913
    %2928 = vmatprep.subr.bf16.mxu0 %v1922
    %2929 = vmatpush1.bf16.msra.mxu0 %v1921
    %2930 = vmatprep.subr.bf16.mxu0 %v1930
    %2931 = vmatpush1.bf16.msra.mxu0 %v1929
    %2932 = vmatprep.subr.bf16.mxu0 %v1938
    %2933 = vmatpush1.bf16.msra.mxu0 %v1937
    %2934 = vmatprep.subr.bf16.mxu0 %v1946
    %2935 = vmatpush1.bf16.msra.mxu0 %v1945
    %2936 = vmatprep.subr.bf16.mxu0 %v1954
    %2937 = vmatpush1.bf16.msra.mxu0 %v1953
    %2938 = vmatprep.subr.bf16.mxu0 %v1962
    %2939 = vmatpush1.bf16.msra.mxu0 %v1961
    %2940 = vmatprep.subr.bf16.mxu0 %v1970
    %2941 = vmatpush1.bf16.msra.mxu0 %v1969
    %2942 = vmatprep.subr.bf16.mxu0 %v1978
    %2943 = vmatpush1.bf16.msra.mxu0 %v1977
    %2944 = vmatprep.subr.bf16.mxu0 %v1986
    %2945 = vmatpush1.bf16.msra.mxu0 %v1985
    %2946 = vmatprep.subr.bf16.mxu0 %v1994
    %2947 = vmatpush1.bf16.msra.mxu0 %v1993
    %2948 = vmatprep.subr.bf16.mxu0 %v2002
    %2949 = vmatpush1.bf16.msra.mxu0 %v2001
    %2950 = vmatprep.subr.bf16.mxu0 %v2010
    %2951 = vmatpush1.bf16.msra.mxu0 %v2009
    %2952 = vmatprep.subr.bf16.mxu0 %v2018
    %2953 = vmatpush1.bf16.msra.mxu0 %v2017
    %2954 = vmatprep.mubr.bf16.mxu0 %v151
    %2955 = vmatmul.mubr.bf16.gmra.mrb[0].mxu0 %v150
    %v2956 = vpop.f32.mrb[0].mxu0
    %v2957 = vadd.f32 %v2916, %v2956
    %v2958 = vpop.f32.mrb[0].mxu0
    %v2959 = vadd.f32 %v2918, %v2958
    %v2960 = vpop.f32.mrb[0].mxu0
    %v2961 = vpop.f32.mrb[0].mxu0
    %2962 = vdwg.mxu0
    %2963 = vmatprep.subr.bf16.mxu0 %v2026
    %2964 = vmatpush1.bf16.msra.mxu0 %v2025
    %2965 = vmatprep.subr.bf16.mxu0 %v2034
    %2966 = vmatpush1.bf16.msra.mxu0 %v2033
    %2967 = vmatprep.subr.bf16.mxu0 %v2042
    %2968 = vmatpush1.bf16.msra.mxu0 %v2041
    %2969 = vmatprep.subr.bf16.mxu0 %v2050
    %2970 = vmatpush1.bf16.msra.mxu0 %v2049
    %2971 = vmatprep.subr.bf16.mxu0 %v2058
    %2972 = vmatpush1.bf16.msra.mxu0 %v2057
    %2973 = vmatprep.subr.bf16.mxu0 %v2066
    %2974 = vmatpush1.bf16.msra.mxu0 %v2065
    %2975 = vmatprep.subr.bf16.mxu0 %v2074
    %2976 = vmatpush1.bf16.msra.mxu0 %v2073
    %2977 = vmatprep.subr.bf16.mxu0 %v2082
    %2978 = vmatpush1.bf16.msra.mxu0 %v2081
    %2979 = vmatprep.subr.bf16.mxu0 %v2090
    %2980 = vmatpush1.bf16.msra.mxu0 %v2089
    %2981 = vmatprep.subr.bf16.mxu0 %v2098
    %2982 = vmatpush1.bf16.msra.mxu0 %v2097
    %2983 = vmatprep.subr.bf16.mxu0 %v2106
    %2984 = vmatpush1.bf16.msra.mxu0 %v2105
    %2985 = vmatprep.subr.bf16.mxu0 %v2114
    %2986 = vmatpush1.bf16.msra.mxu0 %v2113
    %2987 = vmatprep.subr.bf16.mxu0 %v2122
    %2988 = vmatpush1.bf16.msra.mxu0 %v2121
    %2989 = vmatprep.subr.bf16.mxu0 %v2130
    %2990 = vmatpush1.bf16.msra.mxu0 %v2129
    %2991 = vmatprep.subr.bf16.mxu0 %v2138
    %2992 = vmatpush1.bf16.msra.mxu0 %v2137
    %2993 = vmatprep.subr.bf16.mxu0 %v2146
    %2994 = vmatpush1.bf16.msra.mxu0 %v2145
    %2995 = vmatprep.mubr.bf16.mxu0 %v153
    %2996 = vmatmul.mubr.bf16.gmra.mrb[0].mxu0 %v152
    %v2997 = vpop.f32.mrb[0].mxu0
    %v2998 = vadd.f32 %v2957, %v2997
    %v2999 = vpop.f32.mrb[0].mxu0
    %v3000 = vadd.f32 %v2959, %v2999
    %v3001 = vpop.f32.mrb[0].mxu0
    %v3002 = vpop.f32.mrb[0].mxu0
    %3003 = vdwg.mxu0
    %3004 = vmatprep.subr.bf16.mxu0 %v2154
    %3005 = vmatpush1.bf16.msra.mxu0 %v2153
    %3006 = vmatprep.subr.bf16.mxu0 0
    %3007 = vmatpush1.bf16.msra.mxu0 0
    %3008 = vmatprep.subr.bf16.mxu0 0
    %3009 = vmatpush1.bf16.msra.mxu0 0
    %3010 = vmatprep.subr.bf16.mxu0 0
    %3011 = vmatpush1.bf16.msra.mxu0 0
    %3012 = vmatprep.subr.bf16.mxu0 0
    %3013 = vmatpush1.bf16.msra.mxu0 0
    %3014 = vmatprep.subr.bf16.mxu0 0
    %3015 = vmatpush1.bf16.msra.mxu0 0
    %3016 = vmatprep.subr.bf16.mxu0 0
    %3017 = vmatpush1.bf16.msra.mxu0 0
    %3018 = vmatprep.subr.bf16.mxu0 0
    %3019 = vmatpush1.bf16.msra.mxu0 0
    %3020 = vmatprep.subr.bf16.mxu0 0
    %3021 = vmatpush1.bf16.msra.mxu0 0
    %3022 = vmatprep.subr.bf16.mxu0 0
    %3023 = vmatpush1.bf16.msra.mxu0 0
    %3024 = vmatprep.subr.bf16.mxu0 0
    %3025 = vmatpush1.bf16.msra.mxu0 0
    %3026 = vmatprep.subr.bf16.mxu0 0
    %3027 = vmatpush1.bf16.msra.mxu0 0
    %3028 = vmatprep.subr.bf16.mxu0 0
    %3029 = vmatpush1.bf16.msra.mxu0 0
    %3030 = vmatprep.subr.bf16.mxu0 0
    %3031 = vmatpush1.bf16.msra.mxu0 0
    %3032 = vmatprep.subr.bf16.mxu0 0
    %3033 = vmatpush1.bf16.msra.mxu0 0
    %3034 = vmatprep.subr.bf16.mxu0 0
    %3035 = vmatpush1.bf16.msra.mxu0 0
    %3036 = vmatprep.mubr.bf16.mxu0 0
    %3037 = vmatmul.mubr.bf16.gmra.mrb[0].mxu0 %v2551
    %v3038 = vpop.f32.mrb[0].mxu0
    %v3039 = vadd.f32 %v2998, %v3038
    %v3040 = vpop.f32.mrb[0].mxu0
    %v3041 = vadd.f32 %v3000, %v3040
    %v3042 = vpop.f32.mrb[0].mxu0
    %v3043 = vpop.f32.mrb[0].mxu0
    %3044 = vdwg.mxu0
    %3045 = vmatprep.subr.bf16.mxu0 %v1772
    %3046 = vmatpush1.bf16.msra.mxu0 %v1771
    %3047 = vmatprep.subr.bf16.mxu0 %v1780
    %3048 = vmatpush1.bf16.msra.mxu0 %v1779
    %3049 = vmatprep.subr.bf16.mxu0 %v1788
    %3050 = vmatpush1.bf16.msra.mxu0 %v1787
    %3051 = vmatprep.subr.bf16.mxu0 %v1796
    %3052 = vmatpush1.bf16.msra.mxu0 %v1795
    %3053 = vmatprep.subr.bf16.mxu0 %v1804
    %3054 = vmatpush1.bf16.msra.mxu0 %v1803
    %3055 = vmatprep.subr.bf16.mxu0 %v1812
    %3056 = vmatpush1.bf16.msra.mxu0 %v1811
    %3057 = vmatprep.subr.bf16.mxu0 %v1820
    %3058 = vmatpush1.bf16.msra.mxu0 %v1819
    %3059 = vmatprep.subr.bf16.mxu0 %v1828
    %3060 = vmatpush1.bf16.msra.mxu0 %v1827
    %3061 = vmatprep.subr.bf16.mxu0 %v1836
    %3062 = vmatpush1.bf16.msra.mxu0 %v1835
    %3063 = vmatprep.subr.bf16.mxu0 %v1844
    %3064 = vmatpush1.bf16.msra.mxu0 %v1843
    %3065 = vmatprep.subr.bf16.mxu0 %v1852
    %3066 = vmatpush1.bf16.msra.mxu0 %v1851
    %3067 = vmatprep.subr.bf16.mxu0 %v1860
    %3068 = vmatpush1.bf16.msra.mxu0 %v1859
    %3069 = vmatprep.subr.bf16.mxu0 %v1868
    %3070 = vmatpush1.bf16.msra.mxu0 %v1867
    %3071 = vmatprep.subr.bf16.mxu0 %v1876
    %3072 = vmatpush1.bf16.msra.mxu0 %v1875
    %3073 = vmatprep.subr.bf16.mxu0 %v1884
    %3074 = vmatpush1.bf16.msra.mxu0 %v1883
    %3075 = vmatprep.subr.bf16.mxu0 %v1892
    %3076 = vmatpush1.bf16.msra.mxu0 %v1891
    %3077 = vmatprep.mubr.bf16.mxu0 %v149
    %3078 = vmatmul.mubr.bf16.gmra.mrb[0].mxu0 %v148
    %v3079 = vpop.f32.mrb[0].mxu0
    %v3080 = vadd.f32 %v576, %v3079
    %v3081 = vpop.f32.mrb[0].mxu0
    %v3082 = vadd.f32 %v580, %v3081
    %v3083 = vpop.f32.mrb[0].mxu0
    %v3084 = vpop.f32.mrb[0].mxu0
    %3085 = vdwg.mxu0
    %3086 = vmatprep.subr.bf16.mxu0 %v1900
    %3087 = vmatpush1.bf16.msra.mxu0 %v1899
    %3088 = vmatprep.subr.bf16.mxu0 %v1908
    %3089 = vmatpush1.bf16.msra.mxu0 %v1907
    %3090 = vmatprep.subr.bf16.mxu0 %v1916
    %3091 = vmatpush1.bf16.msra.mxu0 %v1915
    %3092 = vmatprep.subr.bf16.mxu0 %v1924
    %3093 = vmatpush1.bf16.msra.mxu0 %v1923
    %3094 = vmatprep.subr.bf16.mxu0 %v1932
    %3095 = vmatpush1.bf16.msra.mxu0 %v1931
    %3096 = vmatprep.subr.bf16.mxu0 %v1940
    %3097 = vmatpush1.bf16.msra.mxu0 %v1939
    %3098 = vmatprep.subr.bf16.mxu0 %v1948
    %3099 = vmatpush1.bf16.msra.mxu0 %v1947
    %3100 = vmatprep.subr.bf16.mxu0 %v1956
    %3101 = vmatpush1.bf16.msra.mxu0 %v1955
    %3102 = vmatprep.subr.bf16.mxu0 %v1964
    %3103 = vmatpush1.bf16.msra.mxu0 %v1963
    %3104 = vmatprep.subr.bf16.mxu0 %v1972
    %3105 = vmatpush1.bf16.msra.mxu0 %v1971
    %3106 = vmatprep.subr.bf16.mxu0 %v1980
    %3107 = vmatpush1.bf16.msra.mxu0 %v1979
    %3108 = vmatprep.subr.bf16.mxu0 %v1988
    %3109 = vmatpush1.bf16.msra.mxu0 %v1987
    %3110 = vmatprep.subr.bf16.mxu0 %v1996
    %3111 = vmatpush1.bf16.msra.mxu0 %v1995
    %3112 = vmatprep.subr.bf16.mxu0 %v2004
    %3113 = vmatpush1.bf16.msra.mxu0 %v2003
    %3114 = vmatprep.subr.bf16.mxu0 %v2012
    %3115 = vmatpush1.bf16.msra.mxu0 %v2011
    %3116 = vmatprep.subr.bf16.mxu0 %v2020
    %3117 = vmatpush1.bf16.msra.mxu0 %v2019
    %3118 = vmatprep.mubr.bf16.mxu0 %v151
    %3119 = vmatmul.mubr.bf16.gmra.mrb[0].mxu0 %v150
    %v3120 = vpop.f32.mrb[0].mxu0
    %v3121 = vadd.f32 %v3080, %v3120
    %v3122 = vpop.f32.mrb[0].mxu0
    %v3123 = vadd.f32 %v3082, %v3122
    %v3124 = vpop.f32.mrb[0].mxu0
    %v3125 = vpop.f32.mrb[0].mxu0
    %3126 = vdwg.mxu0
    %3127 = vmatprep.subr.bf16.mxu0 %v2028
    %3128 = vmatpush1.bf16.msra.mxu0 %v2027
    %3129 = vmatprep.subr.bf16.mxu0 %v2036
    %3130 = vmatpush1.bf16.msra.mxu0 %v2035
    %3131 = vmatprep.subr.bf16.mxu0 %v2044
    %3132 = vmatpush1.bf16.msra.mxu0 %v2043
    %3133 = vmatprep.subr.bf16.mxu0 %v2052
    %3134 = vmatpush1.bf16.msra.mxu0 %v2051
    %3135 = vmatprep.subr.bf16.mxu0 %v2060
    %3136 = vmatpush1.bf16.msra.mxu0 %v2059
    %3137 = vmatprep.subr.bf16.mxu0 %v2068
    %3138 = vmatpush1.bf16.msra.mxu0 %v2067
    %3139 = vmatprep.subr.bf16.mxu0 %v2076
    %3140 = vmatpush1.bf16.msra.mxu0 %v2075
    %3141 = vmatprep.subr.bf16.mxu0 %v2084
    %3142 = vmatpush1.bf16.msra.mxu0 %v2083
    %3143 = vmatprep.subr.bf16.mxu0 %v2092
    %3144 = vmatpush1.bf16.msra.mxu0 %v2091
    %3145 = vmatprep.subr.bf16.mxu0 %v2100
    %3146 = vmatpush1.bf16.msra.mxu0 %v2099
    %3147 = vmatprep.subr.bf16.mxu0 %v2108
    %3148 = vmatpush1.bf16.msra.mxu0 %v2107
    %3149 = vmatprep.subr.bf16.mxu0 %v2116
    %3150 = vmatpush1.bf16.msra.mxu0 %v2115
    %3151 = vmatprep.subr.bf16.mxu0 %v2124
    %3152 = vmatpush1.bf16.msra.mxu0 %v2123
    %3153 = vmatprep.subr.bf16.mxu0 %v2132
    %3154 = vmatpush1.bf16.msra.mxu0 %v2131
    %3155 = vmatprep.subr.bf16.mxu0 %v2140
    %3156 = vmatpush1.bf16.msra.mxu0 %v2139
    %3157 = vmatprep.subr.bf16.mxu0 %v2148
    %3158 = vmatpush1.bf16.msra.mxu0 %v2147
    %3159 = vmatprep.mubr.bf16.mxu0 %v153
    %3160 = vmatmul.mubr.bf16.gmra.mrb[0].mxu0 %v152
    %v3161 = vpop.f32.mrb[0].mxu0
    %v3162 = vadd.f32 %v3121, %v3161
    %v3163 = vpop.f32.mrb[0].mxu0
    %v3164 = vadd.f32 %v3123, %v3163
    %v3165 = vpop.f32.mrb[0].mxu0
    %v3166 = vpop.f32.mrb[0].mxu0
    %3167 = vdwg.mxu0
    %3168 = vmatprep.subr.bf16.mxu0 %v2156
    %3169 = vmatpush1.bf16.msra.mxu0 %v2155
    %3170 = vmatprep.subr.bf16.mxu0 0
    %3171 = vmatpush1.bf16.msra.mxu0 0
    %3172 = vmatprep.subr.bf16.mxu0 0
    %3173 = vmatpush1.bf16.msra.mxu0 0
    %3174 = vmatprep.subr.bf16.mxu0 0
    %3175 = vmatpush1.bf16.msra.mxu0 0
    %3176 = vmatprep.subr.bf16.mxu0 0
    %3177 = vmatpush1.bf16.msra.mxu0 0
    %3178 = vmatprep.subr.bf16.mxu0 0
    %3179 = vmatpush1.bf16.msra.mxu0 0
    %3180 = vmatprep.subr.bf16.mxu0 0
    %3181 = vmatpush1.bf16.msra.mxu0 0
    %3182 = vmatprep.subr.bf16.mxu0 0
    %3183 = vmatpush1.bf16.msra.mxu0 0
    %3184 = vmatprep.subr.bf16.mxu0 0
    %3185 = vmatpush1.bf16.msra.mxu0 0
    %3186 = vmatprep.subr.bf16.mxu0 0
    %3187 = vmatpush1.bf16.msra.mxu0 0
    %3188 = vmatprep.subr.bf16.mxu0 0
    %3189 = vmatpush1.bf16.msra.mxu0 0
    %3190 = vmatprep.subr.bf16.mxu0 0
    %3191 = vmatpush1.bf16.msra.mxu0 0
    %3192 = vmatprep.subr.bf16.mxu0 0
    %3193 = vmatpush1.bf16.msra.mxu0 0
    %3194 = vmatprep.subr.bf16.mxu0 0
    %3195 = vmatpush1.bf16.msra.mxu0 0
    %3196 = vmatprep.subr.bf16.mxu0 0
    %3197 = vmatpush1.bf16.msra.mxu0 0
    %3198 = vmatprep.subr.bf16.mxu0 0
    %3199 = vmatpush1.bf16.msra.mxu0 0
    %3200 = vmatprep.mubr.bf16.mxu0 0
    %3201 = vmatmul.mubr.bf16.gmra.mrb[0].mxu0 %v2551
    %v3202 = vpop.f32.mrb[0].mxu0
    %v3203 = vadd.f32 %v3162, %v3202
    %v3204 = vpop.f32.mrb[0].mxu0
    %v3205 = vadd.f32 %v3164, %v3204
    %v3206 = vpop.f32.mrb[0].mxu0
    %v3207 = vpop.f32.mrb[0].mxu0
    %3208 = vdwg.mxu0
    %v3209 = vmax.f32 %v2711, 0.0
    %v3210 = vmax.f32 %v2713, 0.0
    %v3211 = vmax.f32 %v2875, 0.0
    %v3212 = vmax.f32 %v2877, 0.0
    %v3213 = vmax.f32 %v3039, 0.0
    %v3214 = vmax.f32 %v3041, 0.0
    %v3215 = vmax.f32 %v3203, 0.0
    %v3216 = vmax.f32 %v3205, 0.0
    %v3217 = vpack.c.bf16 %v3209, %v3209
    %v3218 = vpack.c.bf16 %v3210, %v3210
    %v3219 = vpack.c.bf16 %v3211, %v3211
    %v3220 = vpack.c.bf16 %v3212, %v3212
    %v3221 = vpack.c.bf16 %v3213, %v3213
    %v3222 = vpack.c.bf16 %v3214, %v3214
    %v3223 = vpack.c.bf16 %v3215, %v3215
    %v3224 = vpack.c.bf16 %v3216, %v3216
    %v3225 = vld [vmem:[#allocation7] sm:$0xff]
    %v3226 = vld [vmem:[#allocation7 + $0x8] sm:$0xff]
    %v3227 = vld [vmem:[#allocation7 + $0x10] sm:$0xff]
    %v3228 = vld [vmem:[#allocation7 + $0x18] sm:$0xff]
    %v3229 = vld [vmem:[#allocation7 + $0x20] sm:$0xff]
    %v3230 = vld [vmem:[#allocation7 + $0x28] sm:$0xff]
    %v3231 = vld [vmem:[#allocation7 + $0x30] sm:$0xff]
    %v3232 = vld [vmem:[#allocation7 + $0x38] sm:$0xff]
    %v3233 = vld [vmem:[#allocation7 + $0x40] sm:$0xff]
    %v3234 = vld [vmem:[#allocation7 + $0x48] sm:$0xff]
    %v3235 = vld [vmem:[#allocation7 + $0x50] sm:$0xff]
    %v3236 = vld [vmem:[#allocation7 + $0x58] sm:$0xff]
    %v3237 = vld [vmem:[#allocation7 + $0x60] sm:$0xff]
    %v3238 = vld [vmem:[#allocation7 + $0x68] sm:$0xff]
    %v3239 = vld [vmem:[#allocation7 + $0x70] sm:$0xff]
    %v3240 = vld [vmem:[#allocation7 + $0x78] sm:$0xff]
    %v3241 = vld [vmem:[#allocation7 + $0x80] sm:$0xff]
    %v3242 = vld [vmem:[#allocation7 + $0x88] sm:$0xff]
    %v3243 = vld [vmem:[#allocation7 + $0x90] sm:$0xff]
    %v3244 = vld [vmem:[#allocation7 + $0x98] sm:$0xff]
    %v3245 = vld [vmem:[#allocation7 + $0xa0] sm:$0xff]
    %v3246 = vld [vmem:[#allocation7 + $0xa8] sm:$0xff]
    %v3247 = vld [vmem:[#allocation7 + $0xb0] sm:$0xff]
    %v3248 = vld [vmem:[#allocation7 + $0xb8] sm:$0xff]
    %v3249 = vld [vmem:[#allocation7 + $0xc0] sm:$0xff]
    %v3250 = vld [vmem:[#allocation7 + $0xc8] sm:$0xff]
    %v3251 = vld [vmem:[#allocation7 + $0xd0] sm:$0xff]
    %v3252 = vld [vmem:[#allocation7 + $0xd8] sm:$0xff]
    %v3253 = vld [vmem:[#allocation7 + $0xe0] sm:$0xff]
    %v3254 = vld [vmem:[#allocation7 + $0xe8] sm:$0xff]
    %v3255 = vld [vmem:[#allocation7 + $0xf0] sm:$0xff]
    %v3256 = vld [vmem:[#allocation7 + $0xf8] sm:$0xff]
    %v3257 = vld [vmem:[#allocation7 + $0x100] sm:$0xff]
    %v3258 = vld [vmem:[#allocation7 + $0x108] sm:$0xff]
    %v3259 = vld [vmem:[#allocation7 + $0x110] sm:$0xff]
    %v3260 = vld [vmem:[#allocation7 + $0x118] sm:$0xff]
    %v3261 = vld [vmem:[#allocation7 + $0x120] sm:$0xff]
    %v3262 = vld [vmem:[#allocation7 + $0x128] sm:$0xff]
    %v3263 = vld [vmem:[#allocation7 + $0x130] sm:$0xff]
    %v3264 = vld [vmem:[#allocation7 + $0x138] sm:$0xff]
    %v3265 = vld [vmem:[#allocation7 + $0x140] sm:$0xff]
    %v3266 = vld [vmem:[#allocation7 + $0x148] sm:$0xff]
    %v3267 = vld [vmem:[#allocation7 + $0x150] sm:$0xff]
    %v3268 = vld [vmem:[#allocation7 + $0x158] sm:$0xff]
    %v3269 = vld [vmem:[#allocation7 + $0x160] sm:$0xff]
    %v3270 = vld [vmem:[#allocation7 + $0x168] sm:$0xff]
    %v3271 = vld [vmem:[#allocation7 + $0x170] sm:$0xff]
    %v3272 = vld [vmem:[#allocation7 + $0x178] sm:$0xff]
    %v3273 = vld [vmem:[#allocation7 + $0x180] sm:$0xff]
    %v3274 = vld [vmem:[#allocation7 + $0x188] sm:$0xff]
    %v3275 = vld [vmem:[#allocation7 + $0x190] sm:$0xff]
    %v3276 = vld [vmem:[#allocation7 + $0x198] sm:$0xff]
    %v3277 = vld [vmem:[#allocation7 + $0x1a0] sm:$0xff]
    %v3278 = vld [vmem:[#allocation7 + $0x1a8] sm:$0xff]
    %v3279 = vld [vmem:[#allocation7 + $0x1b0] sm:$0xff]
    %v3280 = vld [vmem:[#allocation7 + $0x1b8] sm:$0xff]
    %v3281 = vld [vmem:[#allocation7 + $0x1c0] sm:$0xff]
    %v3282 = vld [vmem:[#allocation7 + $0x1c8] sm:$0xff]
    %v3283 = vld [vmem:[#allocation7 + $0x1d0] sm:$0xff]
    %v3284 = vld [vmem:[#allocation7 + $0x1d8] sm:$0xff]
    %v3285 = vld [vmem:[#allocation7 + $0x1e0] sm:$0xff]
    %v3286 = vld [vmem:[#allocation7 + $0x1e8] sm:$0xff]
    %v3287 = vld [vmem:[#allocation7 + $0x1f0] sm:$0xff]
    %v3288 = vld [vmem:[#allocation7 + $0x1f8] sm:$0xff]
    %v3289 = vld [vmem:[#allocation7 + $0x200] sm:$0xff]
    %v3290 = vld [vmem:[#allocation7 + $0x208] sm:$0xff]
    %v3291 = vld [vmem:[#allocation7 + $0x210] sm:$0xff]
    %v3292 = vld [vmem:[#allocation7 + $0x218] sm:$0xff]
    %v3293 = vld [vmem:[#allocation7 + $0x220] sm:$0xff]
    %v3294 = vld [vmem:[#allocation7 + $0x228] sm:$0xff]
    %v3295 = vld [vmem:[#allocation7 + $0x230] sm:$0xff]
    %v3296 = vld [vmem:[#allocation7 + $0x238] sm:$0xff]
    %v3297 = vld [vmem:[#allocation7 + $0x240] sm:$0xff]
    %v3298 = vld [vmem:[#allocation7 + $0x248] sm:$0xff]
    %v3299 = vld [vmem:[#allocation7 + $0x250] sm:$0xff]
    %v3300 = vld [vmem:[#allocation7 + $0x258] sm:$0xff]
    %v3301 = vld [vmem:[#allocation7 + $0x260] sm:$0xff]
    %v3302 = vld [vmem:[#allocation7 + $0x268] sm:$0xff]
    %v3303 = vld [vmem:[#allocation7 + $0x270] sm:$0xff]
    %v3304 = vld [vmem:[#allocation7 + $0x278] sm:$0xff]
    %v3305 = vld [vmem:[#allocation7 + $0x280] sm:$0xff]
    %v3306 = vld [vmem:[#allocation7 + $0x288] sm:$0xff]
    %v3307 = vld [vmem:[#allocation7 + $0x290] sm:$0xff]
    %v3308 = vld [vmem:[#allocation7 + $0x298] sm:$0xff]
    %v3309 = vld [vmem:[#allocation7 + $0x2a0] sm:$0xff]
    %v3310 = vld [vmem:[#allocation7 + $0x2a8] sm:$0xff]
    %v3311 = vld [vmem:[#allocation7 + $0x2b0] sm:$0xff]
    %v3312 = vld [vmem:[#allocation7 + $0x2b8] sm:$0xff]
    %v3313 = vld [vmem:[#allocation7 + $0x2c0] sm:$0xff]
    %v3314 = vld [vmem:[#allocation7 + $0x2c8] sm:$0xff]
    %v3315 = vld [vmem:[#allocation7 + $0x2d0] sm:$0xff]
    %v3316 = vld [vmem:[#allocation7 + $0x2d8] sm:$0xff]
    %v3317 = vld [vmem:[#allocation7 + $0x2e0] sm:$0xff]
    %v3318 = vld [vmem:[#allocation7 + $0x2e8] sm:$0xff]
    %v3319 = vld [vmem:[#allocation7 + $0x2f0] sm:$0xff]
    %v3320 = vld [vmem:[#allocation7 + $0x2f8] sm:$0xff]
    %v3321 = vld [vmem:[#allocation7 + $0x300] sm:$0xff]
    %v3322 = vld [vmem:[#allocation7 + $0x308] sm:$0xff]
    %v3323 = vld [vmem:[#allocation7 + $0x310] sm:$0xff]
    %v3324 = vld [vmem:[#allocation7 + $0x318] sm:$0xff]
    %v3325 = vld [vmem:[#allocation7 + $0x320] sm:$0xff]
    %v3326 = vld [vmem:[#allocation7 + $0x328] sm:$0xff]
    %v3327 = vld [vmem:[#allocation7 + $0x330] sm:$0xff]
    %v3328 = vld [vmem:[#allocation7 + $0x338] sm:$0xff]
    %v3329 = vld [vmem:[#allocation7 + $0x340] sm:$0xff]
    %v3330 = vld [vmem:[#allocation7 + $0x348] sm:$0xff]
    %v3331 = vld [vmem:[#allocation7 + $0x350] sm:$0xff]
    %v3332 = vld [vmem:[#allocation7 + $0x358] sm:$0xff]
    %v3333 = vld [vmem:[#allocation7 + $0x360] sm:$0xff]
    %v3334 = vld [vmem:[#allocation7 + $0x368] sm:$0xff]
    %v3335 = vld [vmem:[#allocation7 + $0x370] sm:$0xff]
    %v3336 = vld [vmem:[#allocation7 + $0x378] sm:$0xff]
    %v3337 = vld [vmem:[#allocation7 + $0x380] sm:$0xff]
    %v3338 = vld [vmem:[#allocation7 + $0x388] sm:$0xff]
    %v3339 = vld [vmem:[#allocation7 + $0x390] sm:$0xff]
    %v3340 = vld [vmem:[#allocation7 + $0x398] sm:$0xff]
    %v3341 = vld [vmem:[#allocation7 + $0x3a0] sm:$0xff]
    %v3342 = vld [vmem:[#allocation7 + $0x3a8] sm:$0xff]
    %v3343 = vld [vmem:[#allocation7 + $0x3b0] sm:$0xff]
    %v3344 = vld [vmem:[#allocation7 + $0x3b8] sm:$0xff]
    %v3345 = vld [vmem:[#allocation7 + $0x3c0] sm:$0xff]
    %v3346 = vld [vmem:[#allocation7 + $0x3c8] sm:$0xff]
    %v3347 = vld [vmem:[#allocation7 + $0x3d0] sm:$0xff]
    %v3348 = vld [vmem:[#allocation7 + $0x3d8] sm:$0xff]
    %v3349 = vld [vmem:[#allocation7 + $0x3e0] sm:$0xff]
    %v3350 = vld [vmem:[#allocation7 + $0x3e8] sm:$0xff]
    %v3351 = vld [vmem:[#allocation7 + $0x3f0] sm:$0xff]
    %v3352 = vld [vmem:[#allocation7 + $0x3f8] sm:$0xff]
    %v3353 = vld [vmem:[#allocation7 + $0x400] sm:$0xff]
    %v3354 = vld [vmem:[#allocation7 + $0x408] sm:$0xff]
    %v3355 = vld [vmem:[#allocation7 + $0x410] sm:$0xff]
    %v3356 = vld [vmem:[#allocation7 + $0x418] sm:$0xff]
    %v3357 = vld [vmem:[#allocation7 + $0x420] sm:$0xff]
    %v3358 = vld [vmem:[#allocation7 + $0x428] sm:$0xff]
    %v3359 = vld [vmem:[#allocation7 + $0x430] sm:$0xff]
    %v3360 = vld [vmem:[#allocation7 + $0x438] sm:$0xff]
    %v3361 = vld [vmem:[#allocation7 + $0x440] sm:$0xff]
    %v3362 = vld [vmem:[#allocation7 + $0x448] sm:$0xff]
    %v3363 = vld [vmem:[#allocation7 + $0x450] sm:$0xff]
    %v3364 = vld [vmem:[#allocation7 + $0x458] sm:$0xff]
    %v3365 = vld [vmem:[#allocation7 + $0x460] sm:$0xff]
    %v3366 = vld [vmem:[#allocation7 + $0x468] sm:$0xff]
    %v3367 = vld [vmem:[#allocation7 + $0x470] sm:$0xff]
    %v3368 = vld [vmem:[#allocation7 + $0x478] sm:$0xff]
    %v3369 = vld [vmem:[#allocation7 + $0x480] sm:$0xff]
    %v3370 = vld [vmem:[#allocation7 + $0x488] sm:$0xff]
    %v3371 = vld [vmem:[#allocation7 + $0x490] sm:$0xff]
    %v3372 = vld [vmem:[#allocation7 + $0x498] sm:$0xff]
    %v3373 = vld [vmem:[#allocation7 + $0x4a0] sm:$0xff]
    %v3374 = vld [vmem:[#allocation7 + $0x4a8] sm:$0xff]
    %v3375 = vld [vmem:[#allocation7 + $0x4b0] sm:$0xff]
    %v3376 = vld [vmem:[#allocation7 + $0x4b8] sm:$0xff]
    %v3377 = vld [vmem:[#allocation7 + $0x4c0] sm:$0xff]
    %v3378 = vld [vmem:[#allocation7 + $0x4c8] sm:$0xff]
    %v3379 = vld [vmem:[#allocation7 + $0x4d0] sm:$0xff]
    %v3380 = vld [vmem:[#allocation7 + $0x4d8] sm:$0xff]
    %v3381 = vld [vmem:[#allocation7 + $0x4e0] sm:$0xff]
    %v3382 = vld [vmem:[#allocation7 + $0x4e8] sm:$0xff]
    %v3383 = vld [vmem:[#allocation7 + $0x4f0] sm:$0xff]
    %v3384 = vld [vmem:[#allocation7 + $0x4f8] sm:$0xff]
    %v3385 = vld [vmem:[#allocation7 + $0x500] sm:$0xff]
    %v3386 = vld [vmem:[#allocation7 + $0x508] sm:$0xff]
    %v3387 = vld [vmem:[#allocation7 + $0x510] sm:$0xff]
    %v3388 = vld [vmem:[#allocation7 + $0x518] sm:$0xff]
    %v3389 = vld [vmem:[#allocation7 + $0x520] sm:$0xff]
    %v3390 = vld [vmem:[#allocation7 + $0x528] sm:$0xff]
    %v3391 = vld [vmem:[#allocation7 + $0x530] sm:$0xff]
    %v3392 = vld [vmem:[#allocation7 + $0x538] sm:$0xff]
    %v3393 = vld [vmem:[#allocation7 + $0x540] sm:$0xff]
    %v3394 = vld [vmem:[#allocation7 + $0x548] sm:$0xff]
    %v3395 = vld [vmem:[#allocation7 + $0x550] sm:$0xff]
    %v3396 = vld [vmem:[#allocation7 + $0x558] sm:$0xff]
    %v3397 = vld [vmem:[#allocation7 + $0x560] sm:$0xff]
    %v3398 = vld [vmem:[#allocation7 + $0x568] sm:$0xff]
    %v3399 = vld [vmem:[#allocation7 + $0x570] sm:$0xff]
    %v3400 = vld [vmem:[#allocation7 + $0x578] sm:$0xff]
    %v3401 = vld [vmem:[#allocation7 + $0x580] sm:$0xff]
    %v3402 = vld [vmem:[#allocation7 + $0x588] sm:$0xff]
    %v3403 = vld [vmem:[#allocation7 + $0x590] sm:$0xff]
    %v3404 = vld [vmem:[#allocation7 + $0x598] sm:$0xff]
    %v3405 = vld [vmem:[#allocation7 + $0x5a0] sm:$0xff]
    %v3406 = vld [vmem:[#allocation7 + $0x5a8] sm:$0xff]
    %v3407 = vld [vmem:[#allocation7 + $0x5b0] sm:$0xff]
    %v3408 = vld [vmem:[#allocation7 + $0x5b8] sm:$0xff]
    %v3409 = vld [vmem:[#allocation7 + $0x5c0] sm:$0xff]
    %v3410 = vld [vmem:[#allocation7 + $0x5c8] sm:$0xff]
    %v3411 = vld [vmem:[#allocation7 + $0x5d0] sm:$0xff]
    %v3412 = vld [vmem:[#allocation7 + $0x5d8] sm:$0xff]
    %v3413 = vld [vmem:[#allocation7 + $0x5e0] sm:$0xff]
    %v3414 = vld [vmem:[#allocation7 + $0x5e8] sm:$0xff]
    %v3415 = vld [vmem:[#allocation7 + $0x5f0] sm:$0xff]
    %v3416 = vld [vmem:[#allocation7 + $0x5f8] sm:$0xff]
    %v3417 = vld [vmem:[#allocation7 + $0x600] sm:$0xff]
    %v3418 = vld [vmem:[#allocation7 + $0x608] sm:$0xff]
    %v3419 = vld [vmem:[#allocation7 + $0x610] sm:$0xff]
    %v3420 = vld [vmem:[#allocation7 + $0x618] sm:$0xff]
    %v3421 = vld [vmem:[#allocation7 + $0x620] sm:$0xff]
    %v3422 = vld [vmem:[#allocation7 + $0x628] sm:$0xff]
    %v3423 = vld [vmem:[#allocation7 + $0x630] sm:$0xff]
    %v3424 = vld [vmem:[#allocation7 + $0x638] sm:$0xff]
    %v3425 = vld [vmem:[#allocation7 + $0x640] sm:$0xff]
    %v3426 = vld [vmem:[#allocation7 + $0x648] sm:$0xff]
    %v3427 = vld [vmem:[#allocation7 + $0x650] sm:$0xff]
    %v3428 = vld [vmem:[#allocation7 + $0x658] sm:$0xff]
    %v3429 = vld [vmem:[#allocation7 + $0x660] sm:$0xff]
    %v3430 = vld [vmem:[#allocation7 + $0x668] sm:$0xff]
    %v3431 = vld [vmem:[#allocation7 + $0x670] sm:$0xff]
    %v3432 = vld [vmem:[#allocation7 + $0x678] sm:$0xff]
    %v3433 = vld [vmem:[#allocation7 + $0x680] sm:$0xff]
    %v3434 = vld [vmem:[#allocation7 + $0x688] sm:$0xff]
    %v3435 = vld [vmem:[#allocation7 + $0x690] sm:$0xff]
    %v3436 = vld [vmem:[#allocation7 + $0x698] sm:$0xff]
    %v3437 = vld [vmem:[#allocation7 + $0x6a0] sm:$0xff]
    %v3438 = vld [vmem:[#allocation7 + $0x6a8] sm:$0xff]
    %v3439 = vld [vmem:[#allocation7 + $0x6b0] sm:$0xff]
    %v3440 = vld [vmem:[#allocation7 + $0x6b8] sm:$0xff]
    %v3441 = vld [vmem:[#allocation7 + $0x6c0] sm:$0xff]
    %v3442 = vld [vmem:[#allocation7 + $0x6c8] sm:$0xff]
    %v3443 = vld [vmem:[#allocation7 + $0x6d0] sm:$0xff]
    %v3444 = vld [vmem:[#allocation7 + $0x6d8] sm:$0xff]
    %v3445 = vld [vmem:[#allocation7 + $0x6e0] sm:$0xff]
    %v3446 = vld [vmem:[#allocation7 + $0x6e8] sm:$0xff]
    %v3447 = vld [vmem:[#allocation7 + $0x6f0] sm:$0xff]
    %v3448 = vld [vmem:[#allocation7 + $0x6f8] sm:$0xff]
    %v3449 = vld [vmem:[#allocation7 + $0x700] sm:$0xff]
    %v3450 = vld [vmem:[#allocation7 + $0x708] sm:$0xff]
    %v3451 = vld [vmem:[#allocation7 + $0x710] sm:$0xff]
    %v3452 = vld [vmem:[#allocation7 + $0x718] sm:$0xff]
    %v3453 = vld [vmem:[#allocation7 + $0x720] sm:$0xff]
    %v3454 = vld [vmem:[#allocation7 + $0x728] sm:$0xff]
    %v3455 = vld [vmem:[#allocation7 + $0x730] sm:$0xff]
    %v3456 = vld [vmem:[#allocation7 + $0x738] sm:$0xff]
    %v3457 = vld [vmem:[#allocation7 + $0x740] sm:$0xff]
    %v3458 = vld [vmem:[#allocation7 + $0x748] sm:$0xff]
    %v3459 = vld [vmem:[#allocation7 + $0x750] sm:$0xff]
    %v3460 = vld [vmem:[#allocation7 + $0x758] sm:$0xff]
    %v3461 = vld [vmem:[#allocation7 + $0x760] sm:$0xff]
    %v3462 = vld [vmem:[#allocation7 + $0x768] sm:$0xff]
    %v3463 = vld [vmem:[#allocation7 + $0x770] sm:$0xff]
    %v3464 = vld [vmem:[#allocation7 + $0x778] sm:$0xff]
    %v3465 = vld [vmem:[#allocation7 + $0x780] sm:$0xff]
    %v3466 = vld [vmem:[#allocation7 + $0x788] sm:$0xff]
    %v3467 = vld [vmem:[#allocation7 + $0x790] sm:$0xff]
    %v3468 = vld [vmem:[#allocation7 + $0x798] sm:$0xff]
    %v3469 = vld [vmem:[#allocation7 + $0x7a0] sm:$0xff]
    %v3470 = vld [vmem:[#allocation7 + $0x7a8] sm:$0xff]
    %v3471 = vld [vmem:[#allocation7 + $0x7b0] sm:$0xff]
    %v3472 = vld [vmem:[#allocation7 + $0x7b8] sm:$0xff]
    %v3473 = vld [vmem:[#allocation7 + $0x7c0] sm:$0xff]
    %v3474 = vld [vmem:[#allocation7 + $0x7c8] sm:$0xff]
    %v3475 = vld [vmem:[#allocation7 + $0x7d0] sm:$0xff]
    %v3476 = vld [vmem:[#allocation7 + $0x7d8] sm:$0xff]
    %v3477 = vld [vmem:[#allocation7 + $0x7e0] sm:$0xff]
    %v3478 = vld [vmem:[#allocation7 + $0x7e8] sm:$0xff]
    %v3479 = vld [vmem:[#allocation7 + $0x7f0] sm:$0xff]
    %v3480 = vld [vmem:[#allocation7 + $0x7f8] sm:$0xff]
    %v3481 = vld [vmem:[#allocation7 + $0x800] sm:$0xff]
    %v3482 = vld [vmem:[#allocation7 + $0x808] sm:$0xff]
    %v3483 = vld [vmem:[#allocation7 + $0x810] sm:$0xff]
    %v3484 = vld [vmem:[#allocation7 + $0x818] sm:$0xff]
    %v3485 = vld [vmem:[#allocation7 + $0x820] sm:$0xff]
    %v3486 = vld [vmem:[#allocation7 + $0x828] sm:$0xff]
    %v3487 = vld [vmem:[#allocation7 + $0x830] sm:$0xff]
    %v3488 = vld [vmem:[#allocation7 + $0x838] sm:$0xff]
    %v3489 = vld [vmem:[#allocation7 + $0x840] sm:$0xff]
    %v3490 = vld [vmem:[#allocation7 + $0x848] sm:$0xff]
    %v3491 = vld [vmem:[#allocation7 + $0x850] sm:$0xff]
    %v3492 = vld [vmem:[#allocation7 + $0x858] sm:$0xff]
    %v3493 = vld [vmem:[#allocation7 + $0x860] sm:$0xff]
    %v3494 = vld [vmem:[#allocation7 + $0x868] sm:$0xff]
    %v3495 = vld [vmem:[#allocation7 + $0x870] sm:$0xff]
    %v3496 = vld [vmem:[#allocation7 + $0x878] sm:$0xff]
    %v3497 = vld [vmem:[#allocation7 + $0x880] sm:$0xff]
    %v3498 = vld [vmem:[#allocation7 + $0x888] sm:$0xff]
    %v3499 = vld [vmem:[#allocation7 + $0x890] sm:$0xff]
    %v3500 = vld [vmem:[#allocation7 + $0x898] sm:$0xff]
    %v3501 = vld [vmem:[#allocation7 + $0x8a0] sm:$0xff]
    %v3502 = vld [vmem:[#allocation7 + $0x8a8] sm:$0xff]
    %v3503 = vld [vmem:[#allocation7 + $0x8b0] sm:$0xff]
    %v3504 = vld [vmem:[#allocation7 + $0x8b8] sm:$0xff]
    %v3505 = vld [vmem:[#allocation7 + $0x8c0] sm:$0xff]
    %v3506 = vld [vmem:[#allocation7 + $0x8c8] sm:$0xff]
    %v3507 = vld [vmem:[#allocation7 + $0x8d0] sm:$0xff]
    %v3508 = vld [vmem:[#allocation7 + $0x8d8] sm:$0xff]
    %v3509 = vld [vmem:[#allocation7 + $0x8e0] sm:$0xff]
    %v3510 = vld [vmem:[#allocation7 + $0x8e8] sm:$0xff]
    %v3511 = vld [vmem:[#allocation7 + $0x8f0] sm:$0xff]
    %v3512 = vld [vmem:[#allocation7 + $0x8f8] sm:$0xff]
    %v3513 = vld [vmem:[#allocation7 + $0x900] sm:$0xff]
    %v3514 = vld [vmem:[#allocation7 + $0x908] sm:$0xff]
    %v3515 = vld [vmem:[#allocation7 + $0x910] sm:$0xff]
    %v3516 = vld [vmem:[#allocation7 + $0x918] sm:$0xff]
    %v3517 = vld [vmem:[#allocation7 + $0x920] sm:$0xff]
    %v3518 = vld [vmem:[#allocation7 + $0x928] sm:$0xff]
    %v3519 = vld [vmem:[#allocation7 + $0x930] sm:$0xff]
    %v3520 = vld [vmem:[#allocation7 + $0x938] sm:$0xff]
    %v3521 = vld [vmem:[#allocation7 + $0x940] sm:$0xff]
    %v3522 = vld [vmem:[#allocation7 + $0x948] sm:$0xff]
    %v3523 = vld [vmem:[#allocation7 + $0x950] sm:$0xff]
    %v3524 = vld [vmem:[#allocation7 + $0x958] sm:$0xff]
    %v3525 = vld [vmem:[#allocation7 + $0x960] sm:$0xff]
    %v3526 = vld [vmem:[#allocation7 + $0x968] sm:$0xff]
    %v3527 = vld [vmem:[#allocation7 + $0x970] sm:$0xff]
    %v3528 = vld [vmem:[#allocation7 + $0x978] sm:$0xff]
    %v3529 = vld [vmem:[#allocation7 + $0x980] sm:$0xff]
    %v3530 = vld [vmem:[#allocation7 + $0x988] sm:$0xff]
    %v3531 = vld [vmem:[#allocation7 + $0x990] sm:$0xff]
    %v3532 = vld [vmem:[#allocation7 + $0x998] sm:$0xff]
    %v3533 = vld [vmem:[#allocation7 + $0x9a0] sm:$0xff]
    %v3534 = vld [vmem:[#allocation7 + $0x9a8] sm:$0xff]
    %v3535 = vld [vmem:[#allocation7 + $0x9b0] sm:$0xff]
    %v3536 = vld [vmem:[#allocation7 + $0x9b8] sm:$0xff]
    %v3537 = vld [vmem:[#allocation7 + $0x9c0] sm:$0xff]
    %v3538 = vld [vmem:[#allocation7 + $0x9c8] sm:$0xff]
    %v3539 = vld [vmem:[#allocation7 + $0x9d0] sm:$0xff]
    %v3540 = vld [vmem:[#allocation7 + $0x9d8] sm:$0xff]
    %v3541 = vld [vmem:[#allocation7 + $0x9e0] sm:$0xff]
    %v3542 = vld [vmem:[#allocation7 + $0x9e8] sm:$0xff]
    %v3543 = vld [vmem:[#allocation7 + $0x9f0] sm:$0xff]
    %v3544 = vld [vmem:[#allocation7 + $0x9f8] sm:$0xff]
    %v3545 = vld [vmem:[#allocation7 + $0xa00] sm:$0xff]
    %v3546 = vld [vmem:[#allocation7 + $0xa08] sm:$0xff]
    %v3547 = vld [vmem:[#allocation7 + $0xa10] sm:$0xff]
    %v3548 = vld [vmem:[#allocation7 + $0xa18] sm:$0xff]
    %v3549 = vld [vmem:[#allocation7 + $0xa20] sm:$0xff]
    %v3550 = vld [vmem:[#allocation7 + $0xa28] sm:$0xff]
    %v3551 = vld [vmem:[#allocation7 + $0xa30] sm:$0xff]
    %v3552 = vld [vmem:[#allocation7 + $0xa38] sm:$0xff]
    %v3553 = vld [vmem:[#allocation7 + $0xa40] sm:$0xff]
    %v3554 = vld [vmem:[#allocation7 + $0xa48] sm:$0xff]
    %v3555 = vld [vmem:[#allocation7 + $0xa50] sm:$0xff]
    %v3556 = vld [vmem:[#allocation7 + $0xa58] sm:$0xff]
    %v3557 = vld [vmem:[#allocation7 + $0xa60] sm:$0xff]
    %v3558 = vld [vmem:[#allocation7 + $0xa68] sm:$0xff]
    %v3559 = vld [vmem:[#allocation7 + $0xa70] sm:$0xff]
    %v3560 = vld [vmem:[#allocation7 + $0xa78] sm:$0xff]
    %v3561 = vld [vmem:[#allocation7 + $0xa80] sm:$0xff]
    %v3562 = vld [vmem:[#allocation7 + $0xa88] sm:$0xff]
    %v3563 = vld [vmem:[#allocation7 + $0xa90] sm:$0xff]
    %v3564 = vld [vmem:[#allocation7 + $0xa98] sm:$0xff]
    %v3565 = vld [vmem:[#allocation7 + $0xaa0] sm:$0xff]
    %v3566 = vld [vmem:[#allocation7 + $0xaa8] sm:$0xff]
    %v3567 = vld [vmem:[#allocation7 + $0xab0] sm:$0xff]
    %v3568 = vld [vmem:[#allocation7 + $0xab8] sm:$0xff]
    %v3569 = vld [vmem:[#allocation7 + $0xac0] sm:$0xff]
    %v3570 = vld [vmem:[#allocation7 + $0xac8] sm:$0xff]
    %v3571 = vld [vmem:[#allocation7 + $0xad0] sm:$0xff]
    %v3572 = vld [vmem:[#allocation7 + $0xad8] sm:$0xff]
    %v3573 = vld [vmem:[#allocation7 + $0xae0] sm:$0xff]
    %v3574 = vld [vmem:[#allocation7 + $0xae8] sm:$0xff]
    %v3575 = vld [vmem:[#allocation7 + $0xaf0] sm:$0xff]
    %v3576 = vld [vmem:[#allocation7 + $0xaf8] sm:$0xff]
    %v3577 = vld [vmem:[#allocation7 + $0xb00] sm:$0xff]
    %v3578 = vld [vmem:[#allocation7 + $0xb08] sm:$0xff]
    %v3579 = vld [vmem:[#allocation7 + $0xb10] sm:$0xff]
    %v3580 = vld [vmem:[#allocation7 + $0xb18] sm:$0xff]
    %v3581 = vld [vmem:[#allocation7 + $0xb20] sm:$0xff]
    %v3582 = vld [vmem:[#allocation7 + $0xb28] sm:$0xff]
    %v3583 = vld [vmem:[#allocation7 + $0xb30] sm:$0xff]
    %v3584 = vld [vmem:[#allocation7 + $0xb38] sm:$0xff]
    %v3585 = vld [vmem:[#allocation7 + $0xb40] sm:$0xff]
    %v3586 = vld [vmem:[#allocation7 + $0xb48] sm:$0xff]
    %v3587 = vld [vmem:[#allocation7 + $0xb50] sm:$0xff]
    %v3588 = vld [vmem:[#allocation7 + $0xb58] sm:$0xff]
    %v3589 = vld [vmem:[#allocation7 + $0xb60] sm:$0xff]
    %v3590 = vld [vmem:[#allocation7 + $0xb68] sm:$0xff]
    %v3591 = vld [vmem:[#allocation7 + $0xb70] sm:$0xff]
    %v3592 = vld [vmem:[#allocation7 + $0xb78] sm:$0xff]
    %v3593 = vld [vmem:[#allocation7 + $0xb80] sm:$0xff]
    %v3594 = vld [vmem:[#allocation7 + $0xb88] sm:$0xff]
    %v3595 = vld [vmem:[#allocation7 + $0xb90] sm:$0xff]
    %v3596 = vld [vmem:[#allocation7 + $0xb98] sm:$0xff]
    %v3597 = vld [vmem:[#allocation7 + $0xba0] sm:$0xff]
    %v3598 = vld [vmem:[#allocation7 + $0xba8] sm:$0xff]
    %v3599 = vld [vmem:[#allocation7 + $0xbb0] sm:$0xff]
    %v3600 = vld [vmem:[#allocation7 + $0xbb8] sm:$0xff]
    %v3601 = vld [vmem:[#allocation7 + $0xbc0] sm:$0xff]
    %v3602 = vld [vmem:[#allocation7 + $0xbc8] sm:$0xff]
    %v3603 = vld [vmem:[#allocation7 + $0xbd0] sm:$0xff]
    %v3604 = vld [vmem:[#allocation7 + $0xbd8] sm:$0xff]
    %v3605 = vld [vmem:[#allocation7 + $0xbe0] sm:$0xff]
    %v3606 = vld [vmem:[#allocation7 + $0xbe8] sm:$0xff]
    %v3607 = vld [vmem:[#allocation7 + $0xbf0] sm:$0xff]
    %v3608 = vld [vmem:[#allocation7 + $0xbf8] sm:$0xff]
    %v3609 = vld [vmem:[#allocation7 + $0xc00] sm:$0xff]
    %v3610 = vld [vmem:[#allocation7 + $0xc08] sm:$0xff]
    %v3611 = vld [vmem:[#allocation7 + $0xc10] sm:$0xff]
    %v3612 = vld [vmem:[#allocation7 + $0xc18] sm:$0xff]
    %v3613 = vld [vmem:[#allocation7 + $0xc20] sm:$0xff]
    %v3614 = vld [vmem:[#allocation7 + $0xc28] sm:$0xff]
    %v3615 = vld [vmem:[#allocation7 + $0xc30] sm:$0xff]
    %v3616 = vld [vmem:[#allocation7 + $0xc38] sm:$0xff]
    %v3617 = vld [vmem:[#allocation7 + $0xc40] sm:$0xff]
    %v3618 = vld [vmem:[#allocation7 + $0xc48] sm:$0xff]
    %v3619 = vld [vmem:[#allocation7 + $0xc50] sm:$0xff]
    %v3620 = vld [vmem:[#allocation7 + $0xc58] sm:$0xff]
    %v3621 = vld [vmem:[#allocation7 + $0xc60] sm:$0xff]
    %v3622 = vld [vmem:[#allocation7 + $0xc68] sm:$0xff]
    %v3623 = vld [vmem:[#allocation7 + $0xc70] sm:$0xff]
    %v3624 = vld [vmem:[#allocation7 + $0xc78] sm:$0xff]
    %v3625 = vld [vmem:[#allocation7 + $0xc80] sm:$0xff]
    %v3626 = vld [vmem:[#allocation7 + $0xc88] sm:$0xff]
    %v3627 = vld [vmem:[#allocation7 + $0xc90] sm:$0xff]
    %v3628 = vld [vmem:[#allocation7 + $0xc98] sm:$0xff]
    %v3629 = vld [vmem:[#allocation7 + $0xca0] sm:$0xff]
    %v3630 = vld [vmem:[#allocation7 + $0xca8] sm:$0xff]
    %v3631 = vld [vmem:[#allocation7 + $0xcb0] sm:$0xff]
    %v3632 = vld [vmem:[#allocation7 + $0xcb8] sm:$0xff]
    %v3633 = vld [vmem:[#allocation7 + $0xcc0] sm:$0xff]
    %v3634 = vld [vmem:[#allocation7 + $0xcc8] sm:$0xff]
    %v3635 = vld [vmem:[#allocation7 + $0xcd0] sm:$0xff]
    %v3636 = vld [vmem:[#allocation7 + $0xcd8] sm:$0xff]
    %v3637 = vld [vmem:[#allocation7 + $0xce0] sm:$0xff]
    %v3638 = vld [vmem:[#allocation7 + $0xce8] sm:$0xff]
    %v3639 = vld [vmem:[#allocation7 + $0xcf0] sm:$0xff]
    %v3640 = vld [vmem:[#allocation7 + $0xcf8] sm:$0xff]
    %v3641 = vld [vmem:[#allocation7 + $0xd00] sm:$0xff]
    %v3642 = vld [vmem:[#allocation7 + $0xd08] sm:$0xff]
    %v3643 = vld [vmem:[#allocation7 + $0xd10] sm:$0xff]
    %v3644 = vld [vmem:[#allocation7 + $0xd18] sm:$0xff]
    %v3645 = vld [vmem:[#allocation7 + $0xd20] sm:$0xff]
    %v3646 = vld [vmem:[#allocation7 + $0xd28] sm:$0xff]
    %v3647 = vld [vmem:[#allocation7 + $0xd30] sm:$0xff]
    %v3648 = vld [vmem:[#allocation7 + $0xd38] sm:$0xff]
    %v3649 = vld [vmem:[#allocation7 + $0xd40] sm:$0xff]
    %v3650 = vld [vmem:[#allocation7 + $0xd48] sm:$0xff]
    %v3651 = vld [vmem:[#allocation7 + $0xd50] sm:$0xff]
    %v3652 = vld [vmem:[#allocation7 + $0xd58] sm:$0xff]
    %v3653 = vld [vmem:[#allocation7 + $0xd60] sm:$0xff]
    %v3654 = vld [vmem:[#allocation7 + $0xd68] sm:$0xff]
    %v3655 = vld [vmem:[#allocation7 + $0xd70] sm:$0xff]
    %v3656 = vld [vmem:[#allocation7 + $0xd78] sm:$0xff]
    %v3657 = vld [vmem:[#allocation7 + $0xd80] sm:$0xff]
    %v3658 = vld [vmem:[#allocation7 + $0xd88] sm:$0xff]
    %v3659 = vld [vmem:[#allocation7 + $0xd90] sm:$0xff]
    %v3660 = vld [vmem:[#allocation7 + $0xd98] sm:$0xff]
    %v3661 = vld [vmem:[#allocation7 + $0xda0] sm:$0xff]
    %v3662 = vld [vmem:[#allocation7 + $0xda8] sm:$0xff]
    %v3663 = vld [vmem:[#allocation7 + $0xdb0] sm:$0xff]
    %v3664 = vld [vmem:[#allocation7 + $0xdb8] sm:$0xff]
    %v3665 = vld [vmem:[#allocation7 + $0xdc0] sm:$0xff]
    %v3666 = vld [vmem:[#allocation7 + $0xdc8] sm:$0xff]
    %v3667 = vld [vmem:[#allocation7 + $0xdd0] sm:$0xff]
    %v3668 = vld [vmem:[#allocation7 + $0xdd8] sm:$0xff]
    %v3669 = vld [vmem:[#allocation7 + $0xde0] sm:$0xff]
    %v3670 = vld [vmem:[#allocation7 + $0xde8] sm:$0xff]
    %v3671 = vld [vmem:[#allocation7 + $0xdf0] sm:$0xff]
    %v3672 = vld [vmem:[#allocation7 + $0xdf8] sm:$0xff]
    %v3673 = vld [vmem:[#allocation7 + $0xe00] sm:$0xff]
    %v3674 = vld [vmem:[#allocation7 + $0xe08] sm:$0xff]
    %v3675 = vld [vmem:[#allocation7 + $0xe10] sm:$0xff]
    %v3676 = vld [vmem:[#allocation7 + $0xe18] sm:$0xff]
    %v3677 = vld [vmem:[#allocation7 + $0xe20] sm:$0xff]
    %v3678 = vld [vmem:[#allocation7 + $0xe28] sm:$0xff]
    %v3679 = vld [vmem:[#allocation7 + $0xe30] sm:$0xff]
    %v3680 = vld [vmem:[#allocation7 + $0xe38] sm:$0xff]
    %v3681 = vld [vmem:[#allocation7 + $0xe40] sm:$0xff]
    %v3682 = vld [vmem:[#allocation7 + $0xe48] sm:$0xff]
    %v3683 = vld [vmem:[#allocation7 + $0xe50] sm:$0xff]
    %v3684 = vld [vmem:[#allocation7 + $0xe58] sm:$0xff]
    %v3685 = vld [vmem:[#allocation7 + $0xe60] sm:$0xff]
    %v3686 = vld [vmem:[#allocation7 + $0xe68] sm:$0xff]
    %v3687 = vld [vmem:[#allocation7 + $0xe70] sm:$0xff]
    %v3688 = vld [vmem:[#allocation7 + $0xe78] sm:$0xff]
    %v3689 = vld [vmem:[#allocation7 + $0xe80] sm:$0xff]
    %v3690 = vld [vmem:[#allocation7 + $0xe88] sm:$0xff]
    %v3691 = vld [vmem:[#allocation7 + $0xe90] sm:$0xff]
    %v3692 = vld [vmem:[#allocation7 + $0xe98] sm:$0xff]
    %v3693 = vld [vmem:[#allocation7 + $0xea0] sm:$0xff]
    %v3694 = vld [vmem:[#allocation7 + $0xea8] sm:$0xff]
    %v3695 = vld [vmem:[#allocation7 + $0xeb0] sm:$0xff]
    %v3696 = vld [vmem:[#allocation7 + $0xeb8] sm:$0xff]
    %v3697 = vld [vmem:[#allocation7 + $0xec0] sm:$0xff]
    %v3698 = vld [vmem:[#allocation7 + $0xec8] sm:$0xff]
    %v3699 = vld [vmem:[#allocation7 + $0xed0] sm:$0xff]
    %v3700 = vld [vmem:[#allocation7 + $0xed8] sm:$0xff]
    %v3701 = vld [vmem:[#allocation7 + $0xee0] sm:$0xff]
    %v3702 = vld [vmem:[#allocation7 + $0xee8] sm:$0xff]
    %v3703 = vld [vmem:[#allocation7 + $0xef0] sm:$0xff]
    %v3704 = vld [vmem:[#allocation7 + $0xef8] sm:$0xff]
    %v3705 = vld [vmem:[#allocation7 + $0xf00] sm:$0xff]
    %v3706 = vld [vmem:[#allocation7 + $0xf08] sm:$0xff]
    %v3707 = vld [vmem:[#allocation7 + $0xf10] sm:$0xff]
    %v3708 = vld [vmem:[#allocation7 + $0xf18] sm:$0xff]
    %v3709 = vld [vmem:[#allocation7 + $0xf20] sm:$0xff]
    %v3710 = vld [vmem:[#allocation7 + $0xf28] sm:$0xff]
    %v3711 = vld [vmem:[#allocation7 + $0xf30] sm:$0xff]
    %v3712 = vld [vmem:[#allocation7 + $0xf38] sm:$0xff]
    %v3713 = vld [vmem:[#allocation7 + $0xf40] sm:$0xff]
    %v3714 = vld [vmem:[#allocation7 + $0xf48] sm:$0xff]
    %v3715 = vld [vmem:[#allocation7 + $0xf50] sm:$0xff]
    %v3716 = vld [vmem:[#allocation7 + $0xf58] sm:$0xff]
    %v3717 = vld [vmem:[#allocation7 + $0xf60] sm:$0xff]
    %v3718 = vld [vmem:[#allocation7 + $0xf68] sm:$0xff]
    %v3719 = vld [vmem:[#allocation7 + $0xf70] sm:$0xff]
    %v3720 = vld [vmem:[#allocation7 + $0xf78] sm:$0xff]
    %v3721 = vld [vmem:[#allocation7 + $0xf80] sm:$0xff]
    %v3722 = vld [vmem:[#allocation7 + $0xf88] sm:$0xff]
    %v3723 = vld [vmem:[#allocation7 + $0xf90] sm:$0xff]
    %v3724 = vld [vmem:[#allocation7 + $0xf98] sm:$0xff]
    %v3725 = vld [vmem:[#allocation7 + $0xfa0] sm:$0xff]
    %v3726 = vld [vmem:[#allocation7 + $0xfa8] sm:$0xff]
    %v3727 = vld [vmem:[#allocation7 + $0xfb0] sm:$0xff]
    %v3728 = vld [vmem:[#allocation7 + $0xfb8] sm:$0xff]
    %v3729 = vld [vmem:[#allocation7 + $0xfc0] sm:$0xff]
    %v3730 = vld [vmem:[#allocation7 + $0xfc8] sm:$0xff]
    %v3731 = vld [vmem:[#allocation7 + $0xfd0] sm:$0xff]
    %v3732 = vld [vmem:[#allocation7 + $0xfd8] sm:$0xff]
    %v3733 = vld [vmem:[#allocation7 + $0xfe0] sm:$0xff]
    %v3734 = vld [vmem:[#allocation7 + $0xfe8] sm:$0xff]
    %v3735 = vld [vmem:[#allocation7 + $0xff0] sm:$0xff]
    %v3736 = vld [vmem:[#allocation7 + $0xff8] sm:$0xff]
    %v3737 = vld [vmem:[#allocation8] sm:$0xff]
    %v3739 = vlaneseq
    %v3740 = vshrl.u32 %v3739, 7
    %v3741 = vsub.s32 0, %v3740
    %v3742 = vrot.slane %v3737, %v3741
    %v3743 = vlaneseq
    %v3744 = vshrl.u32 %v3743, 7
    %v3745 = vsub.s32 1, %v3744
    %v3746 = vrot.slane %v3737, %v3745
    %v3747 = vlaneseq
    %v3748 = vshrl.u32 %v3747, 7
    %v3749 = vsub.s32 2, %v3748
    %v3750 = vrot.slane %v3737, %v3749
    %v3751 = vlaneseq
    %v3752 = vshrl.u32 %v3751, 7
    %v3753 = vsub.s32 3, %v3752
    %v3754 = vrot.slane %v3737, %v3753
    %v3755 = vlaneseq
    %v3756 = vshrl.u32 %v3755, 7
    %v3757 = vsub.s32 4, %v3756
    %v3758 = vrot.slane %v3737, %v3757
    %v3759 = vlaneseq
    %v3760 = vshrl.u32 %v3759, 7
    %v3761 = vsub.s32 5, %v3760
    %v3762 = vrot.slane %v3737, %v3761
    %v3763 = vlaneseq
    %v3764 = vshrl.u32 %v3763, 7
    %v3765 = vsub.s32 6, %v3764
    %v3766 = vrot.slane %v3737, %v3765
    %v3767 = vlaneseq
    %v3768 = vshrl.u32 %v3767, 7
    %v3769 = vsub.s32 7, %v3768
    %v3770 = vrot.slane %v3737, %v3769
    %v4291 = vunpack.c.l.b16 %v3225
    %v4292 = vunpack.c.h.b16 %v3225
    %v4293 = vunpack.c.l.b16 %v3226
    %v4294 = vunpack.c.h.b16 %v3226
    %v4295 = vunpack.c.l.b16 %v3227
    %v4296 = vunpack.c.h.b16 %v3227
    %v4297 = vunpack.c.l.b16 %v3228
    %v4298 = vunpack.c.h.b16 %v3228
    %v4299 = vunpack.c.l.b16 %v3229
    %v4300 = vunpack.c.h.b16 %v3229
    %v4301 = vunpack.c.l.b16 %v3230
    %v4302 = vunpack.c.h.b16 %v3230
    %v4303 = vunpack.c.l.b16 %v3231
    %v4304 = vunpack.c.h.b16 %v3231
    %v4305 = vunpack.c.l.b16 %v3232
    %v4306 = vunpack.c.h.b16 %v3232
    %v4307 = vunpack.c.l.b16 %v3233
    %v4308 = vunpack.c.h.b16 %v3233
    %v4309 = vunpack.c.l.b16 %v3234
    %v4310 = vunpack.c.h.b16 %v3234
    %v4311 = vunpack.c.l.b16 %v3235
    %v4312 = vunpack.c.h.b16 %v3235
    %v4313 = vunpack.c.l.b16 %v3236
    %v4314 = vunpack.c.h.b16 %v3236
    %v4315 = vunpack.c.l.b16 %v3237
    %v4316 = vunpack.c.h.b16 %v3237
    %v4317 = vunpack.c.l.b16 %v3238
    %v4318 = vunpack.c.h.b16 %v3238
    %v4319 = vunpack.c.l.b16 %v3239
    %v4320 = vunpack.c.h.b16 %v3239
    %v4321 = vunpack.c.l.b16 %v3240
    %v4322 = vunpack.c.h.b16 %v3240
    %v4323 = vunpack.c.l.b16 %v3241
    %v4324 = vunpack.c.h.b16 %v3241
    %v4325 = vunpack.c.l.b16 %v3242
    %v4326 = vunpack.c.h.b16 %v3242
    %v4327 = vunpack.c.l.b16 %v3243
    %v4328 = vunpack.c.h.b16 %v3243
    %v4329 = vunpack.c.l.b16 %v3244
    %v4330 = vunpack.c.h.b16 %v3244
    %v4331 = vunpack.c.l.b16 %v3245
    %v4332 = vunpack.c.h.b16 %v3245
    %v4333 = vunpack.c.l.b16 %v3246
    %v4334 = vunpack.c.h.b16 %v3246
    %v4335 = vunpack.c.l.b16 %v3247
    %v4336 = vunpack.c.h.b16 %v3247
    %v4337 = vunpack.c.l.b16 %v3248
    %v4338 = vunpack.c.h.b16 %v3248
    %v4339 = vunpack.c.l.b16 %v3249
    %v4340 = vunpack.c.h.b16 %v3249
    %v4341 = vunpack.c.l.b16 %v3250
    %v4342 = vunpack.c.h.b16 %v3250
    %v4343 = vunpack.c.l.b16 %v3251
    %v4344 = vunpack.c.h.b16 %v3251
    %v4345 = vunpack.c.l.b16 %v3252
    %v4346 = vunpack.c.h.b16 %v3252
    %v4347 = vunpack.c.l.b16 %v3253
    %v4348 = vunpack.c.h.b16 %v3253
    %v4349 = vunpack.c.l.b16 %v3254
    %v4350 = vunpack.c.h.b16 %v3254
    %v4351 = vunpack.c.l.b16 %v3255
    %v4352 = vunpack.c.h.b16 %v3255
    %v4353 = vunpack.c.l.b16 %v3256
    %v4354 = vunpack.c.h.b16 %v3256
    %v4355 = vunpack.c.l.b16 %v3257
    %v4356 = vunpack.c.h.b16 %v3257
    %v4357 = vunpack.c.l.b16 %v3258
    %v4358 = vunpack.c.h.b16 %v3258
    %v4359 = vunpack.c.l.b16 %v3259
    %v4360 = vunpack.c.h.b16 %v3259
    %v4361 = vunpack.c.l.b16 %v3260
    %v4362 = vunpack.c.h.b16 %v3260
    %v4363 = vunpack.c.l.b16 %v3261
    %v4364 = vunpack.c.h.b16 %v3261
    %v4365 = vunpack.c.l.b16 %v3262
    %v4366 = vunpack.c.h.b16 %v3262
    %v4367 = vunpack.c.l.b16 %v3263
    %v4368 = vunpack.c.h.b16 %v3263
    %v4369 = vunpack.c.l.b16 %v3264
    %v4370 = vunpack.c.h.b16 %v3264
    %v4371 = vunpack.c.l.b16 %v3265
    %v4372 = vunpack.c.h.b16 %v3265
    %v4373 = vunpack.c.l.b16 %v3266
    %v4374 = vunpack.c.h.b16 %v3266
    %v4375 = vunpack.c.l.b16 %v3267
    %v4376 = vunpack.c.h.b16 %v3267
    %v4377 = vunpack.c.l.b16 %v3268
    %v4378 = vunpack.c.h.b16 %v3268
    %v4379 = vunpack.c.l.b16 %v3269
    %v4380 = vunpack.c.h.b16 %v3269
    %v4381 = vunpack.c.l.b16 %v3270
    %v4382 = vunpack.c.h.b16 %v3270
    %v4383 = vunpack.c.l.b16 %v3271
    %v4384 = vunpack.c.h.b16 %v3271
    %v4385 = vunpack.c.l.b16 %v3272
    %v4386 = vunpack.c.h.b16 %v3272
    %v4387 = vunpack.c.l.b16 %v3273
    %v4388 = vunpack.c.h.b16 %v3273
    %v4389 = vunpack.c.l.b16 %v3274
    %v4390 = vunpack.c.h.b16 %v3274
    %v4391 = vunpack.c.l.b16 %v3275
    %v4392 = vunpack.c.h.b16 %v3275
    %v4393 = vunpack.c.l.b16 %v3276
    %v4394 = vunpack.c.h.b16 %v3276
    %v4395 = vunpack.c.l.b16 %v3277
    %v4396 = vunpack.c.h.b16 %v3277
    %v4397 = vunpack.c.l.b16 %v3278
    %v4398 = vunpack.c.h.b16 %v3278
    %v4399 = vunpack.c.l.b16 %v3279
    %v4400 = vunpack.c.h.b16 %v3279
    %v4401 = vunpack.c.l.b16 %v3280
    %v4402 = vunpack.c.h.b16 %v3280
    %v4403 = vunpack.c.l.b16 %v3281
    %v4404 = vunpack.c.h.b16 %v3281
    %v4405 = vunpack.c.l.b16 %v3282
    %v4406 = vunpack.c.h.b16 %v3282
    %v4407 = vunpack.c.l.b16 %v3283
    %v4408 = vunpack.c.h.b16 %v3283
    %v4409 = vunpack.c.l.b16 %v3284
    %v4410 = vunpack.c.h.b16 %v3284
    %v4411 = vunpack.c.l.b16 %v3285
    %v4412 = vunpack.c.h.b16 %v3285
    %v4413 = vunpack.c.l.b16 %v3286
    %v4414 = vunpack.c.h.b16 %v3286
    %v4415 = vunpack.c.l.b16 %v3287
    %v4416 = vunpack.c.h.b16 %v3287
    %v4417 = vunpack.c.l.b16 %v3288
    %v4418 = vunpack.c.h.b16 %v3288
    %v4419 = vunpack.c.l.b16 %v3289
    %v4420 = vunpack.c.h.b16 %v3289
    %v4421 = vunpack.c.l.b16 %v3290
    %v4422 = vunpack.c.h.b16 %v3290
    %v4423 = vunpack.c.l.b16 %v3291
    %v4424 = vunpack.c.h.b16 %v3291
    %v4425 = vunpack.c.l.b16 %v3292
    %v4426 = vunpack.c.h.b16 %v3292
    %v4427 = vunpack.c.l.b16 %v3293
    %v4428 = vunpack.c.h.b16 %v3293
    %v4429 = vunpack.c.l.b16 %v3294
    %v4430 = vunpack.c.h.b16 %v3294
    %v4431 = vunpack.c.l.b16 %v3295
    %v4432 = vunpack.c.h.b16 %v3295
    %v4433 = vunpack.c.l.b16 %v3296
    %v4434 = vunpack.c.h.b16 %v3296
    %v4435 = vunpack.c.l.b16 %v3297
    %v4436 = vunpack.c.h.b16 %v3297
    %v4437 = vunpack.c.l.b16 %v3298
    %v4438 = vunpack.c.h.b16 %v3298
    %v4439 = vunpack.c.l.b16 %v3299
    %v4440 = vunpack.c.h.b16 %v3299
    %v4441 = vunpack.c.l.b16 %v3300
    %v4442 = vunpack.c.h.b16 %v3300
    %v4443 = vunpack.c.l.b16 %v3301
    %v4444 = vunpack.c.h.b16 %v3301
    %v4445 = vunpack.c.l.b16 %v3302
    %v4446 = vunpack.c.h.b16 %v3302
    %v4447 = vunpack.c.l.b16 %v3303
    %v4448 = vunpack.c.h.b16 %v3303
    %v4449 = vunpack.c.l.b16 %v3304
    %v4450 = vunpack.c.h.b16 %v3304
    %v4451 = vunpack.c.l.b16 %v3305
    %v4452 = vunpack.c.h.b16 %v3305
    %v4453 = vunpack.c.l.b16 %v3306
    %v4454 = vunpack.c.h.b16 %v3306
    %v4455 = vunpack.c.l.b16 %v3307
    %v4456 = vunpack.c.h.b16 %v3307
    %v4457 = vunpack.c.l.b16 %v3308
    %v4458 = vunpack.c.h.b16 %v3308
    %v4459 = vunpack.c.l.b16 %v3309
    %v4460 = vunpack.c.h.b16 %v3309
    %v4461 = vunpack.c.l.b16 %v3310
    %v4462 = vunpack.c.h.b16 %v3310
    %v4463 = vunpack.c.l.b16 %v3311
    %v4464 = vunpack.c.h.b16 %v3311
    %v4465 = vunpack.c.l.b16 %v3312
    %v4466 = vunpack.c.h.b16 %v3312
    %v4467 = vunpack.c.l.b16 %v3313
    %v4468 = vunpack.c.h.b16 %v3313
    %v4469 = vunpack.c.l.b16 %v3314
    %v4470 = vunpack.c.h.b16 %v3314
    %v4471 = vunpack.c.l.b16 %v3315
    %v4472 = vunpack.c.h.b16 %v3315
    %v4473 = vunpack.c.l.b16 %v3316
    %v4474 = vunpack.c.h.b16 %v3316
    %v4475 = vunpack.c.l.b16 %v3317
    %v4476 = vunpack.c.h.b16 %v3317
    %v4477 = vunpack.c.l.b16 %v3318
    %v4478 = vunpack.c.h.b16 %v3318
    %v4479 = vunpack.c.l.b16 %v3319
    %v4480 = vunpack.c.h.b16 %v3319
    %v4481 = vunpack.c.l.b16 %v3320
    %v4482 = vunpack.c.h.b16 %v3320
    %v4483 = vunpack.c.l.b16 %v3321
    %v4484 = vunpack.c.h.b16 %v3321
    %v4485 = vunpack.c.l.b16 %v3322
    %v4486 = vunpack.c.h.b16 %v3322
    %v4487 = vunpack.c.l.b16 %v3323
    %v4488 = vunpack.c.h.b16 %v3323
    %v4489 = vunpack.c.l.b16 %v3324
    %v4490 = vunpack.c.h.b16 %v3324
    %v4491 = vunpack.c.l.b16 %v3325
    %v4492 = vunpack.c.h.b16 %v3325
    %v4493 = vunpack.c.l.b16 %v3326
    %v4494 = vunpack.c.h.b16 %v3326
    %v4495 = vunpack.c.l.b16 %v3327
    %v4496 = vunpack.c.h.b16 %v3327
    %v4497 = vunpack.c.l.b16 %v3328
    %v4498 = vunpack.c.h.b16 %v3328
    %v4499 = vunpack.c.l.b16 %v3329
    %v4500 = vunpack.c.h.b16 %v3329
    %v4501 = vunpack.c.l.b16 %v3330
    %v4502 = vunpack.c.h.b16 %v3330
    %v4503 = vunpack.c.l.b16 %v3331
    %v4504 = vunpack.c.h.b16 %v3331
    %v4505 = vunpack.c.l.b16 %v3332
    %v4506 = vunpack.c.h.b16 %v3332
    %v4507 = vunpack.c.l.b16 %v3333
    %v4508 = vunpack.c.h.b16 %v3333
    %v4509 = vunpack.c.l.b16 %v3334
    %v4510 = vunpack.c.h.b16 %v3334
    %v4511 = vunpack.c.l.b16 %v3335
    %v4512 = vunpack.c.h.b16 %v3335
    %v4513 = vunpack.c.l.b16 %v3336
    %v4514 = vunpack.c.h.b16 %v3336
    %v4515 = vunpack.c.l.b16 %v3337
    %v4516 = vunpack.c.h.b16 %v3337
    %v4517 = vunpack.c.l.b16 %v3338
    %v4518 = vunpack.c.h.b16 %v3338
    %v4519 = vunpack.c.l.b16 %v3339
    %v4520 = vunpack.c.h.b16 %v3339
    %v4521 = vunpack.c.l.b16 %v3340
    %v4522 = vunpack.c.h.b16 %v3340
    %v4523 = vunpack.c.l.b16 %v3341
    %v4524 = vunpack.c.h.b16 %v3341
    %v4525 = vunpack.c.l.b16 %v3342
    %v4526 = vunpack.c.h.b16 %v3342
    %v4527 = vunpack.c.l.b16 %v3343
    %v4528 = vunpack.c.h.b16 %v3343
    %v4529 = vunpack.c.l.b16 %v3344
    %v4530 = vunpack.c.h.b16 %v3344
    %v4531 = vunpack.c.l.b16 %v3345
    %v4532 = vunpack.c.h.b16 %v3345
    %v4533 = vunpack.c.l.b16 %v3346
    %v4534 = vunpack.c.h.b16 %v3346
    %v4535 = vunpack.c.l.b16 %v3347
    %v4536 = vunpack.c.h.b16 %v3347
    %v4537 = vunpack.c.l.b16 %v3348
    %v4538 = vunpack.c.h.b16 %v3348
    %v4539 = vunpack.c.l.b16 %v3349
    %v4540 = vunpack.c.h.b16 %v3349
    %v4541 = vunpack.c.l.b16 %v3350
    %v4542 = vunpack.c.h.b16 %v3350
    %v4543 = vunpack.c.l.b16 %v3351
    %v4544 = vunpack.c.h.b16 %v3351
    %v4545 = vunpack.c.l.b16 %v3352
    %v4546 = vunpack.c.h.b16 %v3352
    %v4547 = vunpack.c.l.b16 %v3353
    %v4548 = vunpack.c.h.b16 %v3353
    %v4549 = vunpack.c.l.b16 %v3354
    %v4550 = vunpack.c.h.b16 %v3354
    %v4551 = vunpack.c.l.b16 %v3355
    %v4552 = vunpack.c.h.b16 %v3355
    %v4553 = vunpack.c.l.b16 %v3356
    %v4554 = vunpack.c.h.b16 %v3356
    %v4555 = vunpack.c.l.b16 %v3357
    %v4556 = vunpack.c.h.b16 %v3357
    %v4557 = vunpack.c.l.b16 %v3358
    %v4558 = vunpack.c.h.b16 %v3358
    %v4559 = vunpack.c.l.b16 %v3359
    %v4560 = vunpack.c.h.b16 %v3359
    %v4561 = vunpack.c.l.b16 %v3360
    %v4562 = vunpack.c.h.b16 %v3360
    %v4563 = vunpack.c.l.b16 %v3361
    %v4564 = vunpack.c.h.b16 %v3361
    %v4565 = vunpack.c.l.b16 %v3362
    %v4566 = vunpack.c.h.b16 %v3362
    %v4567 = vunpack.c.l.b16 %v3363
    %v4568 = vunpack.c.h.b16 %v3363
    %v4569 = vunpack.c.l.b16 %v3364
    %v4570 = vunpack.c.h.b16 %v3364
    %v4571 = vunpack.c.l.b16 %v3365
    %v4572 = vunpack.c.h.b16 %v3365
    %v4573 = vunpack.c.l.b16 %v3366
    %v4574 = vunpack.c.h.b16 %v3366
    %v4575 = vunpack.c.l.b16 %v3367
    %v4576 = vunpack.c.h.b16 %v3367
    %v4577 = vunpack.c.l.b16 %v3368
    %v4578 = vunpack.c.h.b16 %v3368
    %v4579 = vunpack.c.l.b16 %v3369
    %v4580 = vunpack.c.h.b16 %v3369
    %v4581 = vunpack.c.l.b16 %v3370
    %v4582 = vunpack.c.h.b16 %v3370
    %v4583 = vunpack.c.l.b16 %v3371
    %v4584 = vunpack.c.h.b16 %v3371
    %v4585 = vunpack.c.l.b16 %v3372
    %v4586 = vunpack.c.h.b16 %v3372
    %v4587 = vunpack.c.l.b16 %v3373
    %v4588 = vunpack.c.h.b16 %v3373
    %v4589 = vunpack.c.l.b16 %v3374
    %v4590 = vunpack.c.h.b16 %v3374
    %v4591 = vunpack.c.l.b16 %v3375
    %v4592 = vunpack.c.h.b16 %v3375
    %v4593 = vunpack.c.l.b16 %v3376
    %v4594 = vunpack.c.h.b16 %v3376
    %v4595 = vunpack.c.l.b16 %v3377
    %v4596 = vunpack.c.h.b16 %v3377
    %v4597 = vunpack.c.l.b16 %v3378
    %v4598 = vunpack.c.h.b16 %v3378
    %v4599 = vunpack.c.l.b16 %v3379
    %v4600 = vunpack.c.h.b16 %v3379
    %v4601 = vunpack.c.l.b16 %v3380
    %v4602 = vunpack.c.h.b16 %v3380
    %v4603 = vunpack.c.l.b16 %v3381
    %v4604 = vunpack.c.h.b16 %v3381
    %v4605 = vunpack.c.l.b16 %v3382
    %v4606 = vunpack.c.h.b16 %v3382
    %v4607 = vunpack.c.l.b16 %v3383
    %v4608 = vunpack.c.h.b16 %v3383
    %v4609 = vunpack.c.l.b16 %v3384
    %v4610 = vunpack.c.h.b16 %v3384
    %v4611 = vunpack.c.l.b16 %v3385
    %v4612 = vunpack.c.h.b16 %v3385
    %v4613 = vunpack.c.l.b16 %v3386
    %v4614 = vunpack.c.h.b16 %v3386
    %v4615 = vunpack.c.l.b16 %v3387
    %v4616 = vunpack.c.h.b16 %v3387
    %v4617 = vunpack.c.l.b16 %v3388
    %v4618 = vunpack.c.h.b16 %v3388
    %v4619 = vunpack.c.l.b16 %v3389
    %v4620 = vunpack.c.h.b16 %v3389
    %v4621 = vunpack.c.l.b16 %v3390
    %v4622 = vunpack.c.h.b16 %v3390
    %v4623 = vunpack.c.l.b16 %v3391
    %v4624 = vunpack.c.h.b16 %v3391
    %v4625 = vunpack.c.l.b16 %v3392
    %v4626 = vunpack.c.h.b16 %v3392
    %v4627 = vunpack.c.l.b16 %v3393
    %v4628 = vunpack.c.h.b16 %v3393
    %v4629 = vunpack.c.l.b16 %v3394
    %v4630 = vunpack.c.h.b16 %v3394
    %v4631 = vunpack.c.l.b16 %v3395
    %v4632 = vunpack.c.h.b16 %v3395
    %v4633 = vunpack.c.l.b16 %v3396
    %v4634 = vunpack.c.h.b16 %v3396
    %v4635 = vunpack.c.l.b16 %v3397
    %v4636 = vunpack.c.h.b16 %v3397
    %v4637 = vunpack.c.l.b16 %v3398
    %v4638 = vunpack.c.h.b16 %v3398
    %v4639 = vunpack.c.l.b16 %v3399
    %v4640 = vunpack.c.h.b16 %v3399
    %v4641 = vunpack.c.l.b16 %v3400
    %v4642 = vunpack.c.h.b16 %v3400
    %v4643 = vunpack.c.l.b16 %v3401
    %v4644 = vunpack.c.h.b16 %v3401
    %v4645 = vunpack.c.l.b16 %v3402
    %v4646 = vunpack.c.h.b16 %v3402
    %v4647 = vunpack.c.l.b16 %v3403
    %v4648 = vunpack.c.h.b16 %v3403
    %v4649 = vunpack.c.l.b16 %v3404
    %v4650 = vunpack.c.h.b16 %v3404
    %v4651 = vunpack.c.l.b16 %v3405
    %v4652 = vunpack.c.h.b16 %v3405
    %v4653 = vunpack.c.l.b16 %v3406
    %v4654 = vunpack.c.h.b16 %v3406
    %v4655 = vunpack.c.l.b16 %v3407
    %v4656 = vunpack.c.h.b16 %v3407
    %v4657 = vunpack.c.l.b16 %v3408
    %v4658 = vunpack.c.h.b16 %v3408
    %v4659 = vunpack.c.l.b16 %v3409
    %v4660 = vunpack.c.h.b16 %v3409
    %v4661 = vunpack.c.l.b16 %v3410
    %v4662 = vunpack.c.h.b16 %v3410
    %v4663 = vunpack.c.l.b16 %v3411
    %v4664 = vunpack.c.h.b16 %v3411
    %v4665 = vunpack.c.l.b16 %v3412
    %v4666 = vunpack.c.h.b16 %v3412
    %v4667 = vunpack.c.l.b16 %v3413
    %v4668 = vunpack.c.h.b16 %v3413
    %v4669 = vunpack.c.l.b16 %v3414
    %v4670 = vunpack.c.h.b16 %v3414
    %v4671 = vunpack.c.l.b16 %v3415
    %v4672 = vunpack.c.h.b16 %v3415
    %v4673 = vunpack.c.l.b16 %v3416
    %v4674 = vunpack.c.h.b16 %v3416
    %v4675 = vunpack.c.l.b16 %v3417
    %v4676 = vunpack.c.h.b16 %v3417
    %v4677 = vunpack.c.l.b16 %v3418
    %v4678 = vunpack.c.h.b16 %v3418
    %v4679 = vunpack.c.l.b16 %v3419
    %v4680 = vunpack.c.h.b16 %v3419
    %v4681 = vunpack.c.l.b16 %v3420
    %v4682 = vunpack.c.h.b16 %v3420
    %v4683 = vunpack.c.l.b16 %v3421
    %v4684 = vunpack.c.h.b16 %v3421
    %v4685 = vunpack.c.l.b16 %v3422
    %v4686 = vunpack.c.h.b16 %v3422
    %v4687 = vunpack.c.l.b16 %v3423
    %v4688 = vunpack.c.h.b16 %v3423
    %v4689 = vunpack.c.l.b16 %v3424
    %v4690 = vunpack.c.h.b16 %v3424
    %v4691 = vunpack.c.l.b16 %v3425
    %v4692 = vunpack.c.h.b16 %v3425
    %v4693 = vunpack.c.l.b16 %v3426
    %v4694 = vunpack.c.h.b16 %v3426
    %v4695 = vunpack.c.l.b16 %v3427
    %v4696 = vunpack.c.h.b16 %v3427
    %v4697 = vunpack.c.l.b16 %v3428
    %v4698 = vunpack.c.h.b16 %v3428
    %v4699 = vunpack.c.l.b16 %v3429
    %v4700 = vunpack.c.h.b16 %v3429
    %v4701 = vunpack.c.l.b16 %v3430
    %v4702 = vunpack.c.h.b16 %v3430
    %v4703 = vunpack.c.l.b16 %v3431
    %v4704 = vunpack.c.h.b16 %v3431
    %v4705 = vunpack.c.l.b16 %v3432
    %v4706 = vunpack.c.h.b16 %v3432
    %v4707 = vunpack.c.l.b16 %v3433
    %v4708 = vunpack.c.h.b16 %v3433
    %v4709 = vunpack.c.l.b16 %v3434
    %v4710 = vunpack.c.h.b16 %v3434
    %v4711 = vunpack.c.l.b16 %v3435
    %v4712 = vunpack.c.h.b16 %v3435
    %v4713 = vunpack.c.l.b16 %v3436
    %v4714 = vunpack.c.h.b16 %v3436
    %v4715 = vunpack.c.l.b16 %v3437
    %v4716 = vunpack.c.h.b16 %v3437
    %v4717 = vunpack.c.l.b16 %v3438
    %v4718 = vunpack.c.h.b16 %v3438
    %v4719 = vunpack.c.l.b16 %v3439
    %v4720 = vunpack.c.h.b16 %v3439
    %v4721 = vunpack.c.l.b16 %v3440
    %v4722 = vunpack.c.h.b16 %v3440
    %v4723 = vunpack.c.l.b16 %v3441
    %v4724 = vunpack.c.h.b16 %v3441
    %v4725 = vunpack.c.l.b16 %v3442
    %v4726 = vunpack.c.h.b16 %v3442
    %v4727 = vunpack.c.l.b16 %v3443
    %v4728 = vunpack.c.h.b16 %v3443
    %v4729 = vunpack.c.l.b16 %v3444
    %v4730 = vunpack.c.h.b16 %v3444
    %v4731 = vunpack.c.l.b16 %v3445
    %v4732 = vunpack.c.h.b16 %v3445
    %v4733 = vunpack.c.l.b16 %v3446
    %v4734 = vunpack.c.h.b16 %v3446
    %v4735 = vunpack.c.l.b16 %v3447
    %v4736 = vunpack.c.h.b16 %v3447
    %v4737 = vunpack.c.l.b16 %v3448
    %v4738 = vunpack.c.h.b16 %v3448
    %v4739 = vunpack.c.l.b16 %v3449
    %v4740 = vunpack.c.h.b16 %v3449
    %v4741 = vunpack.c.l.b16 %v3450
    %v4742 = vunpack.c.h.b16 %v3450
    %v4743 = vunpack.c.l.b16 %v3451
    %v4744 = vunpack.c.h.b16 %v3451
    %v4745 = vunpack.c.l.b16 %v3452
    %v4746 = vunpack.c.h.b16 %v3452
    %v4747 = vunpack.c.l.b16 %v3453
    %v4748 = vunpack.c.h.b16 %v3453
    %v4749 = vunpack.c.l.b16 %v3454
    %v4750 = vunpack.c.h.b16 %v3454
    %v4751 = vunpack.c.l.b16 %v3455
    %v4752 = vunpack.c.h.b16 %v3455
    %v4753 = vunpack.c.l.b16 %v3456
    %v4754 = vunpack.c.h.b16 %v3456
    %v4755 = vunpack.c.l.b16 %v3457
    %v4756 = vunpack.c.h.b16 %v3457
    %v4757 = vunpack.c.l.b16 %v3458
    %v4758 = vunpack.c.h.b16 %v3458
    %v4759 = vunpack.c.l.b16 %v3459
    %v4760 = vunpack.c.h.b16 %v3459
    %v4761 = vunpack.c.l.b16 %v3460
    %v4762 = vunpack.c.h.b16 %v3460
    %v4763 = vunpack.c.l.b16 %v3461
    %v4764 = vunpack.c.h.b16 %v3461
    %v4765 = vunpack.c.l.b16 %v3462
    %v4766 = vunpack.c.h.b16 %v3462
    %v4767 = vunpack.c.l.b16 %v3463
    %v4768 = vunpack.c.h.b16 %v3463
    %v4769 = vunpack.c.l.b16 %v3464
    %v4770 = vunpack.c.h.b16 %v3464
    %v4771 = vunpack.c.l.b16 %v3465
    %v4772 = vunpack.c.h.b16 %v3465
    %v4773 = vunpack.c.l.b16 %v3466
    %v4774 = vunpack.c.h.b16 %v3466
    %v4775 = vunpack.c.l.b16 %v3467
    %v4776 = vunpack.c.h.b16 %v3467
    %v4777 = vunpack.c.l.b16 %v3468
    %v4778 = vunpack.c.h.b16 %v3468
    %v4779 = vunpack.c.l.b16 %v3469
    %v4780 = vunpack.c.h.b16 %v3469
    %v4781 = vunpack.c.l.b16 %v3470
    %v4782 = vunpack.c.h.b16 %v3470
    %v4783 = vunpack.c.l.b16 %v3471
    %v4784 = vunpack.c.h.b16 %v3471
    %v4785 = vunpack.c.l.b16 %v3472
    %v4786 = vunpack.c.h.b16 %v3472
    %v4787 = vunpack.c.l.b16 %v3473
    %v4788 = vunpack.c.h.b16 %v3473
    %v4789 = vunpack.c.l.b16 %v3474
    %v4790 = vunpack.c.h.b16 %v3474
    %v4791 = vunpack.c.l.b16 %v3475
    %v4792 = vunpack.c.h.b16 %v3475
    %v4793 = vunpack.c.l.b16 %v3476
    %v4794 = vunpack.c.h.b16 %v3476
    %v4795 = vunpack.c.l.b16 %v3477
    %v4796 = vunpack.c.h.b16 %v3477
    %v4797 = vunpack.c.l.b16 %v3478
    %v4798 = vunpack.c.h.b16 %v3478
    %v4799 = vunpack.c.l.b16 %v3479
    %v4800 = vunpack.c.h.b16 %v3479
    %v4801 = vunpack.c.l.b16 %v3480
    %v4802 = vunpack.c.h.b16 %v3480
    %v4803 = vunpack.c.l.b16 %v3481
    %v4804 = vunpack.c.h.b16 %v3481
    %v4805 = vunpack.c.l.b16 %v3482
    %v4806 = vunpack.c.h.b16 %v3482
    %v4807 = vunpack.c.l.b16 %v3483
    %v4808 = vunpack.c.h.b16 %v3483
    %v4809 = vunpack.c.l.b16 %v3484
    %v4810 = vunpack.c.h.b16 %v3484
    %v4811 = vunpack.c.l.b16 %v3485
    %v4812 = vunpack.c.h.b16 %v3485
    %v4813 = vunpack.c.l.b16 %v3486
    %v4814 = vunpack.c.h.b16 %v3486
    %v4815 = vunpack.c.l.b16 %v3487
    %v4816 = vunpack.c.h.b16 %v3487
    %v4817 = vunpack.c.l.b16 %v3488
    %v4818 = vunpack.c.h.b16 %v3488
    %v4819 = vunpack.c.l.b16 %v3489
    %v4820 = vunpack.c.h.b16 %v3489
    %v4821 = vunpack.c.l.b16 %v3490
    %v4822 = vunpack.c.h.b16 %v3490
    %v4823 = vunpack.c.l.b16 %v3491
    %v4824 = vunpack.c.h.b16 %v3491
    %v4825 = vunpack.c.l.b16 %v3492
    %v4826 = vunpack.c.h.b16 %v3492
    %v4827 = vunpack.c.l.b16 %v3493
    %v4828 = vunpack.c.h.b16 %v3493
    %v4829 = vunpack.c.l.b16 %v3494
    %v4830 = vunpack.c.h.b16 %v3494
    %v4831 = vunpack.c.l.b16 %v3495
    %v4832 = vunpack.c.h.b16 %v3495
    %v4833 = vunpack.c.l.b16 %v3496
    %v4834 = vunpack.c.h.b16 %v3496
    %v4835 = vunpack.c.l.b16 %v3497
    %v4836 = vunpack.c.h.b16 %v3497
    %v4837 = vunpack.c.l.b16 %v3498
    %v4838 = vunpack.c.h.b16 %v3498
    %v4839 = vunpack.c.l.b16 %v3499
    %v4840 = vunpack.c.h.b16 %v3499
    %v4841 = vunpack.c.l.b16 %v3500
    %v4842 = vunpack.c.h.b16 %v3500
    %v4843 = vunpack.c.l.b16 %v3501
    %v4844 = vunpack.c.h.b16 %v3501
    %v4845 = vunpack.c.l.b16 %v3502
    %v4846 = vunpack.c.h.b16 %v3502
    %v4847 = vunpack.c.l.b16 %v3503
    %v4848 = vunpack.c.h.b16 %v3503
    %v4849 = vunpack.c.l.b16 %v3504
    %v4850 = vunpack.c.h.b16 %v3504
    %v4851 = vunpack.c.l.b16 %v3505
    %v4852 = vunpack.c.h.b16 %v3505
    %v4853 = vunpack.c.l.b16 %v3506
    %v4854 = vunpack.c.h.b16 %v3506
    %v4855 = vunpack.c.l.b16 %v3507
    %v4856 = vunpack.c.h.b16 %v3507
    %v4857 = vunpack.c.l.b16 %v3508
    %v4858 = vunpack.c.h.b16 %v3508
    %v4859 = vunpack.c.l.b16 %v3509
    %v4860 = vunpack.c.h.b16 %v3509
    %v4861 = vunpack.c.l.b16 %v3510
    %v4862 = vunpack.c.h.b16 %v3510
    %v4863 = vunpack.c.l.b16 %v3511
    %v4864 = vunpack.c.h.b16 %v3511
    %v4865 = vunpack.c.l.b16 %v3512
    %v4866 = vunpack.c.h.b16 %v3512
    %v4867 = vunpack.c.l.b16 %v3513
    %v4868 = vunpack.c.h.b16 %v3513
    %v4869 = vunpack.c.l.b16 %v3514
    %v4870 = vunpack.c.h.b16 %v3514
    %v4871 = vunpack.c.l.b16 %v3515
    %v4872 = vunpack.c.h.b16 %v3515
    %v4873 = vunpack.c.l.b16 %v3516
    %v4874 = vunpack.c.h.b16 %v3516
    %v4875 = vunpack.c.l.b16 %v3517
    %v4876 = vunpack.c.h.b16 %v3517
    %v4877 = vunpack.c.l.b16 %v3518
    %v4878 = vunpack.c.h.b16 %v3518
    %v4879 = vunpack.c.l.b16 %v3519
    %v4880 = vunpack.c.h.b16 %v3519
    %v4881 = vunpack.c.l.b16 %v3520
    %v4882 = vunpack.c.h.b16 %v3520
    %v4883 = vunpack.c.l.b16 %v3521
    %v4884 = vunpack.c.h.b16 %v3521
    %v4885 = vunpack.c.l.b16 %v3522
    %v4886 = vunpack.c.h.b16 %v3522
    %v4887 = vunpack.c.l.b16 %v3523
    %v4888 = vunpack.c.h.b16 %v3523
    %v4889 = vunpack.c.l.b16 %v3524
    %v4890 = vunpack.c.h.b16 %v3524
    %v4891 = vunpack.c.l.b16 %v3525
    %v4892 = vunpack.c.h.b16 %v3525
    %v4893 = vunpack.c.l.b16 %v3526
    %v4894 = vunpack.c.h.b16 %v3526
    %v4895 = vunpack.c.l.b16 %v3527
    %v4896 = vunpack.c.h.b16 %v3527
    %v4897 = vunpack.c.l.b16 %v3528
    %v4898 = vunpack.c.h.b16 %v3528
    %v4899 = vunpack.c.l.b16 %v3529
    %v4900 = vunpack.c.h.b16 %v3529
    %v4901 = vunpack.c.l.b16 %v3530
    %v4902 = vunpack.c.h.b16 %v3530
    %v4903 = vunpack.c.l.b16 %v3531
    %v4904 = vunpack.c.h.b16 %v3531
    %v4905 = vunpack.c.l.b16 %v3532
    %v4906 = vunpack.c.h.b16 %v3532
    %v4907 = vunpack.c.l.b16 %v3533
    %v4908 = vunpack.c.h.b16 %v3533
    %v4909 = vunpack.c.l.b16 %v3534
    %v4910 = vunpack.c.h.b16 %v3534
    %v4911 = vunpack.c.l.b16 %v3535
    %v4912 = vunpack.c.h.b16 %v3535
    %v4913 = vunpack.c.l.b16 %v3536
    %v4914 = vunpack.c.h.b16 %v3536
    %v4915 = vunpack.c.l.b16 %v3537
    %v4916 = vunpack.c.h.b16 %v3537
    %v4917 = vunpack.c.l.b16 %v3538
    %v4918 = vunpack.c.h.b16 %v3538
    %v4919 = vunpack.c.l.b16 %v3539
    %v4920 = vunpack.c.h.b16 %v3539
    %v4921 = vunpack.c.l.b16 %v3540
    %v4922 = vunpack.c.h.b16 %v3540
    %v4923 = vunpack.c.l.b16 %v3541
    %v4924 = vunpack.c.h.b16 %v3541
    %v4925 = vunpack.c.l.b16 %v3542
    %v4926 = vunpack.c.h.b16 %v3542
    %v4927 = vunpack.c.l.b16 %v3543
    %v4928 = vunpack.c.h.b16 %v3543
    %v4929 = vunpack.c.l.b16 %v3544
    %v4930 = vunpack.c.h.b16 %v3544
    %v4931 = vunpack.c.l.b16 %v3545
    %v4932 = vunpack.c.h.b16 %v3545
    %v4933 = vunpack.c.l.b16 %v3546
    %v4934 = vunpack.c.h.b16 %v3546
    %v4935 = vunpack.c.l.b16 %v3547
    %v4936 = vunpack.c.h.b16 %v3547
    %v4937 = vunpack.c.l.b16 %v3548
    %v4938 = vunpack.c.h.b16 %v3548
    %v4939 = vunpack.c.l.b16 %v3549
    %v4940 = vunpack.c.h.b16 %v3549
    %v4941 = vunpack.c.l.b16 %v3550
    %v4942 = vunpack.c.h.b16 %v3550
    %v4943 = vunpack.c.l.b16 %v3551
    %v4944 = vunpack.c.h.b16 %v3551
    %v4945 = vunpack.c.l.b16 %v3552
    %v4946 = vunpack.c.h.b16 %v3552
    %v4947 = vunpack.c.l.b16 %v3553
    %v4948 = vunpack.c.h.b16 %v3553
    %v4949 = vunpack.c.l.b16 %v3554
    %v4950 = vunpack.c.h.b16 %v3554
    %v4951 = vunpack.c.l.b16 %v3555
    %v4952 = vunpack.c.h.b16 %v3555
    %v4953 = vunpack.c.l.b16 %v3556
    %v4954 = vunpack.c.h.b16 %v3556
    %v4955 = vunpack.c.l.b16 %v3557
    %v4956 = vunpack.c.h.b16 %v3557
    %v4957 = vunpack.c.l.b16 %v3558
    %v4958 = vunpack.c.h.b16 %v3558
    %v4959 = vunpack.c.l.b16 %v3559
    %v4960 = vunpack.c.h.b16 %v3559
    %v4961 = vunpack.c.l.b16 %v3560
    %v4962 = vunpack.c.h.b16 %v3560
    %v4963 = vunpack.c.l.b16 %v3561
    %v4964 = vunpack.c.h.b16 %v3561
    %v4965 = vunpack.c.l.b16 %v3562
    %v4966 = vunpack.c.h.b16 %v3562
    %v4967 = vunpack.c.l.b16 %v3563
    %v4968 = vunpack.c.h.b16 %v3563
    %v4969 = vunpack.c.l.b16 %v3564
    %v4970 = vunpack.c.h.b16 %v3564
    %v4971 = vunpack.c.l.b16 %v3565
    %v4972 = vunpack.c.h.b16 %v3565
    %v4973 = vunpack.c.l.b16 %v3566
    %v4974 = vunpack.c.h.b16 %v3566
    %v4975 = vunpack.c.l.b16 %v3567
    %v4976 = vunpack.c.h.b16 %v3567
    %v4977 = vunpack.c.l.b16 %v3568
    %v4978 = vunpack.c.h.b16 %v3568
    %v4979 = vunpack.c.l.b16 %v3569
    %v4980 = vunpack.c.h.b16 %v3569
    %v4981 = vunpack.c.l.b16 %v3570
    %v4982 = vunpack.c.h.b16 %v3570
    %v4983 = vunpack.c.l.b16 %v3571
    %v4984 = vunpack.c.h.b16 %v3571
    %v4985 = vunpack.c.l.b16 %v3572
    %v4986 = vunpack.c.h.b16 %v3572
    %v4987 = vunpack.c.l.b16 %v3573
    %v4988 = vunpack.c.h.b16 %v3573
    %v4989 = vunpack.c.l.b16 %v3574
    %v4990 = vunpack.c.h.b16 %v3574
    %v4991 = vunpack.c.l.b16 %v3575
    %v4992 = vunpack.c.h.b16 %v3575
    %v4993 = vunpack.c.l.b16 %v3576
    %v4994 = vunpack.c.h.b16 %v3576
    %v4995 = vunpack.c.l.b16 %v3577
    %v4996 = vunpack.c.h.b16 %v3577
    %v4997 = vunpack.c.l.b16 %v3578
    %v4998 = vunpack.c.h.b16 %v3578
    %v4999 = vunpack.c.l.b16 %v3579
    %v5000 = vunpack.c.h.b16 %v3579
    %v5001 = vunpack.c.l.b16 %v3580
    %v5002 = vunpack.c.h.b16 %v3580
    %v5003 = vunpack.c.l.b16 %v3581
    %v5004 = vunpack.c.h.b16 %v3581
    %v5005 = vunpack.c.l.b16 %v3582
    %v5006 = vunpack.c.h.b16 %v3582
    %v5007 = vunpack.c.l.b16 %v3583
    %v5008 = vunpack.c.h.b16 %v3583
    %v5009 = vunpack.c.l.b16 %v3584
    %v5010 = vunpack.c.h.b16 %v3584
    %v5011 = vunpack.c.l.b16 %v3585
    %v5012 = vunpack.c.h.b16 %v3585
    %v5013 = vunpack.c.l.b16 %v3586
    %v5014 = vunpack.c.h.b16 %v3586
    %v5015 = vunpack.c.l.b16 %v3587
    %v5016 = vunpack.c.h.b16 %v3587
    %v5017 = vunpack.c.l.b16 %v3588
    %v5018 = vunpack.c.h.b16 %v3588
    %v5019 = vunpack.c.l.b16 %v3589
    %v5020 = vunpack.c.h.b16 %v3589
    %v5021 = vunpack.c.l.b16 %v3590
    %v5022 = vunpack.c.h.b16 %v3590
    %v5023 = vunpack.c.l.b16 %v3591
    %v5024 = vunpack.c.h.b16 %v3591
    %v5025 = vunpack.c.l.b16 %v3592
    %v5026 = vunpack.c.h.b16 %v3592
    %v5027 = vunpack.c.l.b16 %v3593
    %v5028 = vunpack.c.h.b16 %v3593
    %v5029 = vunpack.c.l.b16 %v3594
    %v5030 = vunpack.c.h.b16 %v3594
    %v5031 = vunpack.c.l.b16 %v3595
    %v5032 = vunpack.c.h.b16 %v3595
    %v5033 = vunpack.c.l.b16 %v3596
    %v5034 = vunpack.c.h.b16 %v3596
    %v5035 = vunpack.c.l.b16 %v3597
    %v5036 = vunpack.c.h.b16 %v3597
    %v5037 = vunpack.c.l.b16 %v3598
    %v5038 = vunpack.c.h.b16 %v3598
    %v5039 = vunpack.c.l.b16 %v3599
    %v5040 = vunpack.c.h.b16 %v3599
    %v5041 = vunpack.c.l.b16 %v3600
    %v5042 = vunpack.c.h.b16 %v3600
    %v5043 = vunpack.c.l.b16 %v3601
    %v5044 = vunpack.c.h.b16 %v3601
    %v5045 = vunpack.c.l.b16 %v3602
    %v5046 = vunpack.c.h.b16 %v3602
    %v5047 = vunpack.c.l.b16 %v3603
    %v5048 = vunpack.c.h.b16 %v3603
    %v5049 = vunpack.c.l.b16 %v3604
    %v5050 = vunpack.c.h.b16 %v3604
    %v5051 = vunpack.c.l.b16 %v3605
    %v5052 = vunpack.c.h.b16 %v3605
    %v5053 = vunpack.c.l.b16 %v3606
    %v5054 = vunpack.c.h.b16 %v3606
    %v5055 = vunpack.c.l.b16 %v3607
    %v5056 = vunpack.c.h.b16 %v3607
    %v5057 = vunpack.c.l.b16 %v3608
    %v5058 = vunpack.c.h.b16 %v3608
    %v5059 = vunpack.c.l.b16 %v3609
    %v5060 = vunpack.c.h.b16 %v3609
    %v5061 = vunpack.c.l.b16 %v3610
    %v5062 = vunpack.c.h.b16 %v3610
    %v5063 = vunpack.c.l.b16 %v3611
    %v5064 = vunpack.c.h.b16 %v3611
    %v5065 = vunpack.c.l.b16 %v3612
    %v5066 = vunpack.c.h.b16 %v3612
    %v5067 = vunpack.c.l.b16 %v3613
    %v5068 = vunpack.c.h.b16 %v3613
    %v5069 = vunpack.c.l.b16 %v3614
    %v5070 = vunpack.c.h.b16 %v3614
    %v5071 = vunpack.c.l.b16 %v3615
    %v5072 = vunpack.c.h.b16 %v3615
    %v5073 = vunpack.c.l.b16 %v3616
    %v5074 = vunpack.c.h.b16 %v3616
    %v5075 = vunpack.c.l.b16 %v3617
    %v5076 = vunpack.c.h.b16 %v3617
    %v5077 = vunpack.c.l.b16 %v3618
    %v5078 = vunpack.c.h.b16 %v3618
    %v5079 = vunpack.c.l.b16 %v3619
    %v5080 = vunpack.c.h.b16 %v3619
    %v5081 = vunpack.c.l.b16 %v3620
    %v5082 = vunpack.c.h.b16 %v3620
    %v5083 = vunpack.c.l.b16 %v3621
    %v5084 = vunpack.c.h.b16 %v3621
    %v5085 = vunpack.c.l.b16 %v3622
    %v5086 = vunpack.c.h.b16 %v3622
    %v5087 = vunpack.c.l.b16 %v3623
    %v5088 = vunpack.c.h.b16 %v3623
    %v5089 = vunpack.c.l.b16 %v3624
    %v5090 = vunpack.c.h.b16 %v3624
    %v5091 = vunpack.c.l.b16 %v3625
    %v5092 = vunpack.c.h.b16 %v3625
    %v5093 = vunpack.c.l.b16 %v3626
    %v5094 = vunpack.c.h.b16 %v3626
    %v5095 = vunpack.c.l.b16 %v3627
    %v5096 = vunpack.c.h.b16 %v3627
    %v5097 = vunpack.c.l.b16 %v3628
    %v5098 = vunpack.c.h.b16 %v3628
    %v5099 = vunpack.c.l.b16 %v3629
    %v5100 = vunpack.c.h.b16 %v3629
    %v5101 = vunpack.c.l.b16 %v3630
    %v5102 = vunpack.c.h.b16 %v3630
    %v5103 = vunpack.c.l.b16 %v3631
    %v5104 = vunpack.c.h.b16 %v3631
    %v5105 = vunpack.c.l.b16 %v3632
    %v5106 = vunpack.c.h.b16 %v3632
    %v5107 = vunpack.c.l.b16 %v3633
    %v5108 = vunpack.c.h.b16 %v3633
    %v5109 = vunpack.c.l.b16 %v3634
    %v5110 = vunpack.c.h.b16 %v3634
    %v5111 = vunpack.c.l.b16 %v3635
    %v5112 = vunpack.c.h.b16 %v3635
    %v5113 = vunpack.c.l.b16 %v3636
    %v5114 = vunpack.c.h.b16 %v3636
    %v5115 = vunpack.c.l.b16 %v3637
    %v5116 = vunpack.c.h.b16 %v3637
    %v5117 = vunpack.c.l.b16 %v3638
    %v5118 = vunpack.c.h.b16 %v3638
    %v5119 = vunpack.c.l.b16 %v3639
    %v5120 = vunpack.c.h.b16 %v3639
    %v5121 = vunpack.c.l.b16 %v3640
    %v5122 = vunpack.c.h.b16 %v3640
    %v5123 = vunpack.c.l.b16 %v3641
    %v5124 = vunpack.c.h.b16 %v3641
    %v5125 = vunpack.c.l.b16 %v3642
    %v5126 = vunpack.c.h.b16 %v3642
    %v5127 = vunpack.c.l.b16 %v3643
    %v5128 = vunpack.c.h.b16 %v3643
    %v5129 = vunpack.c.l.b16 %v3644
    %v5130 = vunpack.c.h.b16 %v3644
    %v5131 = vunpack.c.l.b16 %v3645
    %v5132 = vunpack.c.h.b16 %v3645
    %v5133 = vunpack.c.l.b16 %v3646
    %v5134 = vunpack.c.h.b16 %v3646
    %v5135 = vunpack.c.l.b16 %v3647
    %v5136 = vunpack.c.h.b16 %v3647
    %v5137 = vunpack.c.l.b16 %v3648
    %v5138 = vunpack.c.h.b16 %v3648
    %v5139 = vunpack.c.l.b16 %v3649
    %v5140 = vunpack.c.h.b16 %v3649
    %v5141 = vunpack.c.l.b16 %v3650
    %v5142 = vunpack.c.h.b16 %v3650
    %v5143 = vunpack.c.l.b16 %v3651
    %v5144 = vunpack.c.h.b16 %v3651
    %v5145 = vunpack.c.l.b16 %v3652
    %v5146 = vunpack.c.h.b16 %v3652
    %v5147 = vunpack.c.l.b16 %v3653
    %v5148 = vunpack.c.h.b16 %v3653
    %v5149 = vunpack.c.l.b16 %v3654
    %v5150 = vunpack.c.h.b16 %v3654
    %v5151 = vunpack.c.l.b16 %v3655
    %v5152 = vunpack.c.h.b16 %v3655
    %v5153 = vunpack.c.l.b16 %v3656
    %v5154 = vunpack.c.h.b16 %v3656
    %v5155 = vunpack.c.l.b16 %v3657
    %v5156 = vunpack.c.h.b16 %v3657
    %v5157 = vunpack.c.l.b16 %v3658
    %v5158 = vunpack.c.h.b16 %v3658
    %v5159 = vunpack.c.l.b16 %v3659
    %v5160 = vunpack.c.h.b16 %v3659
    %v5161 = vunpack.c.l.b16 %v3660
    %v5162 = vunpack.c.h.b16 %v3660
    %v5163 = vunpack.c.l.b16 %v3661
    %v5164 = vunpack.c.h.b16 %v3661
    %v5165 = vunpack.c.l.b16 %v3662
    %v5166 = vunpack.c.h.b16 %v3662
    %v5167 = vunpack.c.l.b16 %v3663
    %v5168 = vunpack.c.h.b16 %v3663
    %v5169 = vunpack.c.l.b16 %v3664
    %v5170 = vunpack.c.h.b16 %v3664
    %v5171 = vunpack.c.l.b16 %v3665
    %v5172 = vunpack.c.h.b16 %v3665
    %v5173 = vunpack.c.l.b16 %v3666
    %v5174 = vunpack.c.h.b16 %v3666
    %v5175 = vunpack.c.l.b16 %v3667
    %v5176 = vunpack.c.h.b16 %v3667
    %v5177 = vunpack.c.l.b16 %v3668
    %v5178 = vunpack.c.h.b16 %v3668
    %v5179 = vunpack.c.l.b16 %v3669
    %v5180 = vunpack.c.h.b16 %v3669
    %v5181 = vunpack.c.l.b16 %v3670
    %v5182 = vunpack.c.h.b16 %v3670
    %v5183 = vunpack.c.l.b16 %v3671
    %v5184 = vunpack.c.h.b16 %v3671
    %v5185 = vunpack.c.l.b16 %v3672
    %v5186 = vunpack.c.h.b16 %v3672
    %v5187 = vunpack.c.l.b16 %v3673
    %v5188 = vunpack.c.h.b16 %v3673
    %v5189 = vunpack.c.l.b16 %v3674
    %v5190 = vunpack.c.h.b16 %v3674
    %v5191 = vunpack.c.l.b16 %v3675
    %v5192 = vunpack.c.h.b16 %v3675
    %v5193 = vunpack.c.l.b16 %v3676
    %v5194 = vunpack.c.h.b16 %v3676
    %v5195 = vunpack.c.l.b16 %v3677
    %v5196 = vunpack.c.h.b16 %v3677
    %v5197 = vunpack.c.l.b16 %v3678
    %v5198 = vunpack.c.h.b16 %v3678
    %v5199 = vunpack.c.l.b16 %v3679
    %v5200 = vunpack.c.h.b16 %v3679
    %v5201 = vunpack.c.l.b16 %v3680
    %v5202 = vunpack.c.h.b16 %v3680
    %v5203 = vunpack.c.l.b16 %v3681
    %v5204 = vunpack.c.h.b16 %v3681
    %v5205 = vunpack.c.l.b16 %v3682
    %v5206 = vunpack.c.h.b16 %v3682
    %v5207 = vunpack.c.l.b16 %v3683
    %v5208 = vunpack.c.h.b16 %v3683
    %v5209 = vunpack.c.l.b16 %v3684
    %v5210 = vunpack.c.h.b16 %v3684
    %v5211 = vunpack.c.l.b16 %v3685
    %v5212 = vunpack.c.h.b16 %v3685
    %v5213 = vunpack.c.l.b16 %v3686
    %v5214 = vunpack.c.h.b16 %v3686
    %v5215 = vunpack.c.l.b16 %v3687
    %v5216 = vunpack.c.h.b16 %v3687
    %v5217 = vunpack.c.l.b16 %v3688
    %v5218 = vunpack.c.h.b16 %v3688
    %v5219 = vunpack.c.l.b16 %v3689
    %v5220 = vunpack.c.h.b16 %v3689
    %v5221 = vunpack.c.l.b16 %v3690
    %v5222 = vunpack.c.h.b16 %v3690
    %v5223 = vunpack.c.l.b16 %v3691
    %v5224 = vunpack.c.h.b16 %v3691
    %v5225 = vunpack.c.l.b16 %v3692
    %v5226 = vunpack.c.h.b16 %v3692
    %v5227 = vunpack.c.l.b16 %v3693
    %v5228 = vunpack.c.h.b16 %v3693
    %v5229 = vunpack.c.l.b16 %v3694
    %v5230 = vunpack.c.h.b16 %v3694
    %v5231 = vunpack.c.l.b16 %v3695
    %v5232 = vunpack.c.h.b16 %v3695
    %v5233 = vunpack.c.l.b16 %v3696
    %v5234 = vunpack.c.h.b16 %v3696
    %v5235 = vunpack.c.l.b16 %v3697
    %v5236 = vunpack.c.h.b16 %v3697
    %v5237 = vunpack.c.l.b16 %v3698
    %v5238 = vunpack.c.h.b16 %v3698
    %v5239 = vunpack.c.l.b16 %v3699
    %v5240 = vunpack.c.h.b16 %v3699
    %v5241 = vunpack.c.l.b16 %v3700
    %v5242 = vunpack.c.h.b16 %v3700
    %v5243 = vunpack.c.l.b16 %v3701
    %v5244 = vunpack.c.h.b16 %v3701
    %v5245 = vunpack.c.l.b16 %v3702
    %v5246 = vunpack.c.h.b16 %v3702
    %v5247 = vunpack.c.l.b16 %v3703
    %v5248 = vunpack.c.h.b16 %v3703
    %v5249 = vunpack.c.l.b16 %v3704
    %v5250 = vunpack.c.h.b16 %v3704
    %v5251 = vunpack.c.l.b16 %v3705
    %v5252 = vunpack.c.h.b16 %v3705
    %v5253 = vunpack.c.l.b16 %v3706
    %v5254 = vunpack.c.h.b16 %v3706
    %v5255 = vunpack.c.l.b16 %v3707
    %v5256 = vunpack.c.h.b16 %v3707
    %v5257 = vunpack.c.l.b16 %v3708
    %v5258 = vunpack.c.h.b16 %v3708
    %v5259 = vunpack.c.l.b16 %v3709
    %v5260 = vunpack.c.h.b16 %v3709
    %v5261 = vunpack.c.l.b16 %v3710
    %v5262 = vunpack.c.h.b16 %v3710
    %v5263 = vunpack.c.l.b16 %v3711
    %v5264 = vunpack.c.h.b16 %v3711
    %v5265 = vunpack.c.l.b16 %v3712
    %v5266 = vunpack.c.h.b16 %v3712
    %v5267 = vunpack.c.l.b16 %v3713
    %v5268 = vunpack.c.h.b16 %v3713
    %v5269 = vunpack.c.l.b16 %v3714
    %v5270 = vunpack.c.h.b16 %v3714
    %v5271 = vunpack.c.l.b16 %v3715
    %v5272 = vunpack.c.h.b16 %v3715
    %v5273 = vunpack.c.l.b16 %v3716
    %v5274 = vunpack.c.h.b16 %v3716
    %v5275 = vunpack.c.l.b16 %v3717
    %v5276 = vunpack.c.h.b16 %v3717
    %v5277 = vunpack.c.l.b16 %v3718
    %v5278 = vunpack.c.h.b16 %v3718
    %v5279 = vunpack.c.l.b16 %v3719
    %v5280 = vunpack.c.h.b16 %v3719
    %v5281 = vunpack.c.l.b16 %v3720
    %v5282 = vunpack.c.h.b16 %v3720
    %v5283 = vunpack.c.l.b16 %v3721
    %v5284 = vunpack.c.h.b16 %v3721
    %v5285 = vunpack.c.l.b16 %v3722
    %v5286 = vunpack.c.h.b16 %v3722
    %v5287 = vunpack.c.l.b16 %v3723
    %v5288 = vunpack.c.h.b16 %v3723
    %v5289 = vunpack.c.l.b16 %v3724
    %v5290 = vunpack.c.h.b16 %v3724
    %v5291 = vunpack.c.l.b16 %v3725
    %v5292 = vunpack.c.h.b16 %v3725
    %v5293 = vunpack.c.l.b16 %v3726
    %v5294 = vunpack.c.h.b16 %v3726
    %v5295 = vunpack.c.l.b16 %v3727
    %v5296 = vunpack.c.h.b16 %v3727
    %v5297 = vunpack.c.l.b16 %v3728
    %v5298 = vunpack.c.h.b16 %v3728
    %v5299 = vunpack.c.l.b16 %v3729
    %v5300 = vunpack.c.h.b16 %v3729
    %v5301 = vunpack.c.l.b16 %v3730
    %v5302 = vunpack.c.h.b16 %v3730
    %v5303 = vunpack.c.l.b16 %v3731
    %v5304 = vunpack.c.h.b16 %v3731
    %v5305 = vunpack.c.l.b16 %v3732
    %v5306 = vunpack.c.h.b16 %v3732
    %v5307 = vunpack.c.l.b16 %v3733
    %v5308 = vunpack.c.h.b16 %v3733
    %v5309 = vunpack.c.l.b16 %v3734
    %v5310 = vunpack.c.h.b16 %v3734
    %v5311 = vunpack.c.l.b16 %v3735
    %v5312 = vunpack.c.h.b16 %v3735
    %v5313 = vunpack.c.l.b16 %v3736
    %v5314 = vunpack.c.h.b16 %v3736
    %v5315 = vpack.c.b16 %v4299, %v4291
    %v5316 = vpack.c.b16 %v4300, %v4292
    %v5317 = vpack.c.b16 %v4301, %v4293
    %v5318 = vpack.c.b16 %v4302, %v4294
    %v5319 = vpack.c.b16 %v4303, %v4295
    %v5320 = vpack.c.b16 %v4304, %v4296
    %v5321 = vpack.c.b16 %v4305, %v4297
    %v5322 = vpack.c.b16 %v4306, %v4298
    %v5323 = vpack.c.b16 %v4315, %v4307
    %v5324 = vpack.c.b16 %v4316, %v4308
    %v5325 = vpack.c.b16 %v4317, %v4309
    %v5326 = vpack.c.b16 %v4318, %v4310
    %v5327 = vpack.c.b16 %v4319, %v4311
    %v5328 = vpack.c.b16 %v4320, %v4312
    %v5329 = vpack.c.b16 %v4321, %v4313
    %v5330 = vpack.c.b16 %v4322, %v4314
    %v5331 = vpack.c.b16 %v4331, %v4323
    %v5332 = vpack.c.b16 %v4332, %v4324
    %v5333 = vpack.c.b16 %v4333, %v4325
    %v5334 = vpack.c.b16 %v4334, %v4326
    %v5335 = vpack.c.b16 %v4335, %v4327
    %v5336 = vpack.c.b16 %v4336, %v4328
    %v5337 = vpack.c.b16 %v4337, %v4329
    %v5338 = vpack.c.b16 %v4338, %v4330
    %v5339 = vpack.c.b16 %v4347, %v4339
    %v5340 = vpack.c.b16 %v4348, %v4340
    %v5341 = vpack.c.b16 %v4349, %v4341
    %v5342 = vpack.c.b16 %v4350, %v4342
    %v5343 = vpack.c.b16 %v4351, %v4343
    %v5344 = vpack.c.b16 %v4352, %v4344
    %v5345 = vpack.c.b16 %v4353, %v4345
    %v5346 = vpack.c.b16 %v4354, %v4346
    %v5347 = vpack.c.b16 %v4363, %v4355
    %v5348 = vpack.c.b16 %v4364, %v4356
    %v5349 = vpack.c.b16 %v4365, %v4357
    %v5350 = vpack.c.b16 %v4366, %v4358
    %v5351 = vpack.c.b16 %v4367, %v4359
    %v5352 = vpack.c.b16 %v4368, %v4360
    %v5353 = vpack.c.b16 %v4369, %v4361
    %v5354 = vpack.c.b16 %v4370, %v4362
    %v5355 = vpack.c.b16 %v4379, %v4371
    %v5356 = vpack.c.b16 %v4380, %v4372
    %v5357 = vpack.c.b16 %v4381, %v4373
    %v5358 = vpack.c.b16 %v4382, %v4374
    %v5359 = vpack.c.b16 %v4383, %v4375
    %v5360 = vpack.c.b16 %v4384, %v4376
    %v5361 = vpack.c.b16 %v4385, %v4377
    %v5362 = vpack.c.b16 %v4386, %v4378
    %v5363 = vpack.c.b16 %v4395, %v4387
    %v5364 = vpack.c.b16 %v4396, %v4388
    %v5365 = vpack.c.b16 %v4397, %v4389
    %v5366 = vpack.c.b16 %v4398, %v4390
    %v5367 = vpack.c.b16 %v4399, %v4391
    %v5368 = vpack.c.b16 %v4400, %v4392
    %v5369 = vpack.c.b16 %v4401, %v4393
    %v5370 = vpack.c.b16 %v4402, %v4394
    %v5371 = vpack.c.b16 %v4411, %v4403
    %v5372 = vpack.c.b16 %v4412, %v4404
    %v5373 = vpack.c.b16 %v4413, %v4405
    %v5374 = vpack.c.b16 %v4414, %v4406
    %v5375 = vpack.c.b16 %v4415, %v4407
    %v5376 = vpack.c.b16 %v4416, %v4408
    %v5377 = vpack.c.b16 %v4417, %v4409
    %v5378 = vpack.c.b16 %v4418, %v4410
    %v5379 = vpack.c.b16 %v4427, %v4419
    %v5380 = vpack.c.b16 %v4428, %v4420
    %v5381 = vpack.c.b16 %v4429, %v4421
    %v5382 = vpack.c.b16 %v4430, %v4422
    %v5383 = vpack.c.b16 %v4431, %v4423
    %v5384 = vpack.c.b16 %v4432, %v4424
    %v5385 = vpack.c.b16 %v4433, %v4425
    %v5386 = vpack.c.b16 %v4434, %v4426
    %v5387 = vpack.c.b16 %v4443, %v4435
    %v5388 = vpack.c.b16 %v4444, %v4436
    %v5389 = vpack.c.b16 %v4445, %v4437
    %v5390 = vpack.c.b16 %v4446, %v4438
    %v5391 = vpack.c.b16 %v4447, %v4439
    %v5392 = vpack.c.b16 %v4448, %v4440
    %v5393 = vpack.c.b16 %v4449, %v4441
    %v5394 = vpack.c.b16 %v4450, %v4442
    %v5395 = vpack.c.b16 %v4459, %v4451
    %v5396 = vpack.c.b16 %v4460, %v4452
    %v5397 = vpack.c.b16 %v4461, %v4453
    %v5398 = vpack.c.b16 %v4462, %v4454
    %v5399 = vpack.c.b16 %v4463, %v4455
    %v5400 = vpack.c.b16 %v4464, %v4456
    %v5401 = vpack.c.b16 %v4465, %v4457
    %v5402 = vpack.c.b16 %v4466, %v4458
    %v5403 = vpack.c.b16 %v4475, %v4467
    %v5404 = vpack.c.b16 %v4476, %v4468
    %v5405 = vpack.c.b16 %v4477, %v4469
    %v5406 = vpack.c.b16 %v4478, %v4470
    %v5407 = vpack.c.b16 %v4479, %v4471
    %v5408 = vpack.c.b16 %v4480, %v4472
    %v5409 = vpack.c.b16 %v4481, %v4473
    %v5410 = vpack.c.b16 %v4482, %v4474
    %v5411 = vpack.c.b16 %v4491, %v4483
    %v5412 = vpack.c.b16 %v4492, %v4484
    %v5413 = vpack.c.b16 %v4493, %v4485
    %v5414 = vpack.c.b16 %v4494, %v4486
    %v5415 = vpack.c.b16 %v4495, %v4487
    %v5416 = vpack.c.b16 %v4496, %v4488
    %v5417 = vpack.c.b16 %v4497, %v4489
    %v5418 = vpack.c.b16 %v4498, %v4490
    %v5419 = vpack.c.b16 %v4507, %v4499
    %v5420 = vpack.c.b16 %v4508, %v4500
    %v5421 = vpack.c.b16 %v4509, %v4501
    %v5422 = vpack.c.b16 %v4510, %v4502
    %v5423 = vpack.c.b16 %v4511, %v4503
    %v5424 = vpack.c.b16 %v4512, %v4504
    %v5425 = vpack.c.b16 %v4513, %v4505
    %v5426 = vpack.c.b16 %v4514, %v4506
    %v5427 = vpack.c.b16 %v4523, %v4515
    %v5428 = vpack.c.b16 %v4524, %v4516
    %v5429 = vpack.c.b16 %v4525, %v4517
    %v5430 = vpack.c.b16 %v4526, %v4518
    %v5431 = vpack.c.b16 %v4527, %v4519
    %v5432 = vpack.c.b16 %v4528, %v4520
    %v5433 = vpack.c.b16 %v4529, %v4521
    %v5434 = vpack.c.b16 %v4530, %v4522
    %v5435 = vpack.c.b16 %v4539, %v4531
    %v5436 = vpack.c.b16 %v4540, %v4532
    %v5437 = vpack.c.b16 %v4541, %v4533
    %v5438 = vpack.c.b16 %v4542, %v4534
    %v5439 = vpack.c.b16 %v4543, %v4535
    %v5440 = vpack.c.b16 %v4544, %v4536
    %v5441 = vpack.c.b16 %v4545, %v4537
    %v5442 = vpack.c.b16 %v4546, %v4538
    %v5443 = vpack.c.b16 %v4555, %v4547
    %v5444 = vpack.c.b16 %v4556, %v4548
    %v5445 = vpack.c.b16 %v4557, %v4549
    %v5446 = vpack.c.b16 %v4558, %v4550
    %v5447 = vpack.c.b16 %v4559, %v4551
    %v5448 = vpack.c.b16 %v4560, %v4552
    %v5449 = vpack.c.b16 %v4561, %v4553
    %v5450 = vpack.c.b16 %v4562, %v4554
    %v5451 = vpack.c.b16 %v4571, %v4563
    %v5452 = vpack.c.b16 %v4572, %v4564
    %v5453 = vpack.c.b16 %v4573, %v4565
    %v5454 = vpack.c.b16 %v4574, %v4566
    %v5455 = vpack.c.b16 %v4575, %v4567
    %v5456 = vpack.c.b16 %v4576, %v4568
    %v5457 = vpack.c.b16 %v4577, %v4569
    %v5458 = vpack.c.b16 %v4578, %v4570
    %v5459 = vpack.c.b16 %v4587, %v4579
    %v5460 = vpack.c.b16 %v4588, %v4580
    %v5461 = vpack.c.b16 %v4589, %v4581
    %v5462 = vpack.c.b16 %v4590, %v4582
    %v5463 = vpack.c.b16 %v4591, %v4583
    %v5464 = vpack.c.b16 %v4592, %v4584
    %v5465 = vpack.c.b16 %v4593, %v4585
    %v5466 = vpack.c.b16 %v4594, %v4586
    %v5467 = vpack.c.b16 %v4603, %v4595
    %v5468 = vpack.c.b16 %v4604, %v4596
    %v5469 = vpack.c.b16 %v4605, %v4597
    %v5470 = vpack.c.b16 %v4606, %v4598
    %v5471 = vpack.c.b16 %v4607, %v4599
    %v5472 = vpack.c.b16 %v4608, %v4600
    %v5473 = vpack.c.b16 %v4609, %v4601
    %v5474 = vpack.c.b16 %v4610, %v4602
    %v5475 = vpack.c.b16 %v4619, %v4611
    %v5476 = vpack.c.b16 %v4620, %v4612
    %v5477 = vpack.c.b16 %v4621, %v4613
    %v5478 = vpack.c.b16 %v4622, %v4614
    %v5479 = vpack.c.b16 %v4623, %v4615
    %v5480 = vpack.c.b16 %v4624, %v4616
    %v5481 = vpack.c.b16 %v4625, %v4617
    %v5482 = vpack.c.b16 %v4626, %v4618
    %v5483 = vpack.c.b16 %v4635, %v4627
    %v5484 = vpack.c.b16 %v4636, %v4628
    %v5485 = vpack.c.b16 %v4637, %v4629
    %v5486 = vpack.c.b16 %v4638, %v4630
    %v5487 = vpack.c.b16 %v4639, %v4631
    %v5488 = vpack.c.b16 %v4640, %v4632
    %v5489 = vpack.c.b16 %v4641, %v4633
    %v5490 = vpack.c.b16 %v4642, %v4634
    %v5491 = vpack.c.b16 %v4651, %v4643
    %v5492 = vpack.c.b16 %v4652, %v4644
    %v5493 = vpack.c.b16 %v4653, %v4645
    %v5494 = vpack.c.b16 %v4654, %v4646
    %v5495 = vpack.c.b16 %v4655, %v4647
    %v5496 = vpack.c.b16 %v4656, %v4648
    %v5497 = vpack.c.b16 %v4657, %v4649
    %v5498 = vpack.c.b16 %v4658, %v4650
    %v5499 = vpack.c.b16 %v4667, %v4659
    %v5500 = vpack.c.b16 %v4668, %v4660
    %v5501 = vpack.c.b16 %v4669, %v4661
    %v5502 = vpack.c.b16 %v4670, %v4662
    %v5503 = vpack.c.b16 %v4671, %v4663
    %v5504 = vpack.c.b16 %v4672, %v4664
    %v5505 = vpack.c.b16 %v4673, %v4665
    %v5506 = vpack.c.b16 %v4674, %v4666
    %v5507 = vpack.c.b16 %v4683, %v4675
    %v5508 = vpack.c.b16 %v4684, %v4676
    %v5509 = vpack.c.b16 %v4685, %v4677
    %v5510 = vpack.c.b16 %v4686, %v4678
    %v5511 = vpack.c.b16 %v4687, %v4679
    %v5512 = vpack.c.b16 %v4688, %v4680
    %v5513 = vpack.c.b16 %v4689, %v4681
    %v5514 = vpack.c.b16 %v4690, %v4682
    %v5515 = vpack.c.b16 %v4699, %v4691
    %v5516 = vpack.c.b16 %v4700, %v4692
    %v5517 = vpack.c.b16 %v4701, %v4693
    %v5518 = vpack.c.b16 %v4702, %v4694
    %v5519 = vpack.c.b16 %v4703, %v4695
    %v5520 = vpack.c.b16 %v4704, %v4696
    %v5521 = vpack.c.b16 %v4705, %v4697
    %v5522 = vpack.c.b16 %v4706, %v4698
    %v5523 = vpack.c.b16 %v4715, %v4707
    %v5524 = vpack.c.b16 %v4716, %v4708
    %v5525 = vpack.c.b16 %v4717, %v4709
    %v5526 = vpack.c.b16 %v4718, %v4710
    %v5527 = vpack.c.b16 %v4719, %v4711
    %v5528 = vpack.c.b16 %v4720, %v4712
    %v5529 = vpack.c.b16 %v4721, %v4713
    %v5530 = vpack.c.b16 %v4722, %v4714
    %v5531 = vpack.c.b16 %v4731, %v4723
    %v5532 = vpack.c.b16 %v4732, %v4724
    %v5533 = vpack.c.b16 %v4733, %v4725
    %v5534 = vpack.c.b16 %v4734, %v4726
    %v5535 = vpack.c.b16 %v4735, %v4727
    %v5536 = vpack.c.b16 %v4736, %v4728
    %v5537 = vpack.c.b16 %v4737, %v4729
    %v5538 = vpack.c.b16 %v4738, %v4730
    %v5539 = vpack.c.b16 %v4747, %v4739
    %v5540 = vpack.c.b16 %v4748, %v4740
    %v5541 = vpack.c.b16 %v4749, %v4741
    %v5542 = vpack.c.b16 %v4750, %v4742
    %v5543 = vpack.c.b16 %v4751, %v4743
    %v5544 = vpack.c.b16 %v4752, %v4744
    %v5545 = vpack.c.b16 %v4753, %v4745
    %v5546 = vpack.c.b16 %v4754, %v4746
    %v5547 = vpack.c.b16 %v4763, %v4755
    %v5548 = vpack.c.b16 %v4764, %v4756
    %v5549 = vpack.c.b16 %v4765, %v4757
    %v5550 = vpack.c.b16 %v4766, %v4758
    %v5551 = vpack.c.b16 %v4767, %v4759
    %v5552 = vpack.c.b16 %v4768, %v4760
    %v5553 = vpack.c.b16 %v4769, %v4761
    %v5554 = vpack.c.b16 %v4770, %v4762
    %v5555 = vpack.c.b16 %v4779, %v4771
    %v5556 = vpack.c.b16 %v4780, %v4772
    %v5557 = vpack.c.b16 %v4781, %v4773
    %v5558 = vpack.c.b16 %v4782, %v4774
    %v5559 = vpack.c.b16 %v4783, %v4775
    %v5560 = vpack.c.b16 %v4784, %v4776
    %v5561 = vpack.c.b16 %v4785, %v4777
    %v5562 = vpack.c.b16 %v4786, %v4778
    %v5563 = vpack.c.b16 %v4795, %v4787
    %v5564 = vpack.c.b16 %v4796, %v4788
    %v5565 = vpack.c.b16 %v4797, %v4789
    %v5566 = vpack.c.b16 %v4798, %v4790
    %v5567 = vpack.c.b16 %v4799, %v4791
    %v5568 = vpack.c.b16 %v4800, %v4792
    %v5569 = vpack.c.b16 %v4801, %v4793
    %v5570 = vpack.c.b16 %v4802, %v4794
    %v5571 = vpack.c.b16 %v4811, %v4803
    %v5572 = vpack.c.b16 %v4812, %v4804
    %v5573 = vpack.c.b16 %v4813, %v4805
    %v5574 = vpack.c.b16 %v4814, %v4806
    %v5575 = vpack.c.b16 %v4815, %v4807
    %v5576 = vpack.c.b16 %v4816, %v4808
    %v5577 = vpack.c.b16 %v4817, %v4809
    %v5578 = vpack.c.b16 %v4818, %v4810
    %v5579 = vpack.c.b16 %v4827, %v4819
    %v5580 = vpack.c.b16 %v4828, %v4820
    %v5581 = vpack.c.b16 %v4829, %v4821
    %v5582 = vpack.c.b16 %v4830, %v4822
    %v5583 = vpack.c.b16 %v4831, %v4823
    %v5584 = vpack.c.b16 %v4832, %v4824
    %v5585 = vpack.c.b16 %v4833, %v4825
    %v5586 = vpack.c.b16 %v4834, %v4826
    %v5587 = vpack.c.b16 %v4843, %v4835
    %v5588 = vpack.c.b16 %v4844, %v4836
    %v5589 = vpack.c.b16 %v4845, %v4837
    %v5590 = vpack.c.b16 %v4846, %v4838
    %v5591 = vpack.c.b16 %v4847, %v4839
    %v5592 = vpack.c.b16 %v4848, %v4840
    %v5593 = vpack.c.b16 %v4849, %v4841
    %v5594 = vpack.c.b16 %v4850, %v4842
    %v5595 = vpack.c.b16 %v4859, %v4851
    %v5596 = vpack.c.b16 %v4860, %v4852
    %v5597 = vpack.c.b16 %v4861, %v4853
    %v5598 = vpack.c.b16 %v4862, %v4854
    %v5599 = vpack.c.b16 %v4863, %v4855
    %v5600 = vpack.c.b16 %v4864, %v4856
    %v5601 = vpack.c.b16 %v4865, %v4857
    %v5602 = vpack.c.b16 %v4866, %v4858
    %v5603 = vpack.c.b16 %v4875, %v4867
    %v5604 = vpack.c.b16 %v4876, %v4868
    %v5605 = vpack.c.b16 %v4877, %v4869
    %v5606 = vpack.c.b16 %v4878, %v4870
    %v5607 = vpack.c.b16 %v4879, %v4871
    %v5608 = vpack.c.b16 %v4880, %v4872
    %v5609 = vpack.c.b16 %v4881, %v4873
    %v5610 = vpack.c.b16 %v4882, %v4874
    %v5611 = vpack.c.b16 %v4891, %v4883
    %v5612 = vpack.c.b16 %v4892, %v4884
    %v5613 = vpack.c.b16 %v4893, %v4885
    %v5614 = vpack.c.b16 %v4894, %v4886
    %v5615 = vpack.c.b16 %v4895, %v4887
    %v5616 = vpack.c.b16 %v4896, %v4888
    %v5617 = vpack.c.b16 %v4897, %v4889
    %v5618 = vpack.c.b16 %v4898, %v4890
    %v5619 = vpack.c.b16 %v4907, %v4899
    %v5620 = vpack.c.b16 %v4908, %v4900
    %v5621 = vpack.c.b16 %v4909, %v4901
    %v5622 = vpack.c.b16 %v4910, %v4902
    %v5623 = vpack.c.b16 %v4911, %v4903
    %v5624 = vpack.c.b16 %v4912, %v4904
    %v5625 = vpack.c.b16 %v4913, %v4905
    %v5626 = vpack.c.b16 %v4914, %v4906
    %v5627 = vpack.c.b16 %v4923, %v4915
    %v5628 = vpack.c.b16 %v4924, %v4916
    %v5629 = vpack.c.b16 %v4925, %v4917
    %v5630 = vpack.c.b16 %v4926, %v4918
    %v5631 = vpack.c.b16 %v4927, %v4919
    %v5632 = vpack.c.b16 %v4928, %v4920
    %v5633 = vpack.c.b16 %v4929, %v4921
    %v5634 = vpack.c.b16 %v4930, %v4922
    %v5635 = vpack.c.b16 %v4939, %v4931
    %v5636 = vpack.c.b16 %v4940, %v4932
    %v5637 = vpack.c.b16 %v4941, %v4933
    %v5638 = vpack.c.b16 %v4942, %v4934
    %v5639 = vpack.c.b16 %v4943, %v4935
    %v5640 = vpack.c.b16 %v4944, %v4936
    %v5641 = vpack.c.b16 %v4945, %v4937
    %v5642 = vpack.c.b16 %v4946, %v4938
    %v5643 = vpack.c.b16 %v4955, %v4947
    %v5644 = vpack.c.b16 %v4956, %v4948
    %v5645 = vpack.c.b16 %v4957, %v4949
    %v5646 = vpack.c.b16 %v4958, %v4950
    %v5647 = vpack.c.b16 %v4959, %v4951
    %v5648 = vpack.c.b16 %v4960, %v4952
    %v5649 = vpack.c.b16 %v4961, %v4953
    %v5650 = vpack.c.b16 %v4962, %v4954
    %v5651 = vpack.c.b16 %v4971, %v4963
    %v5652 = vpack.c.b16 %v4972, %v4964
    %v5653 = vpack.c.b16 %v4973, %v4965
    %v5654 = vpack.c.b16 %v4974, %v4966
    %v5655 = vpack.c.b16 %v4975, %v4967
    %v5656 = vpack.c.b16 %v4976, %v4968
    %v5657 = vpack.c.b16 %v4977, %v4969
    %v5658 = vpack.c.b16 %v4978, %v4970
    %v5659 = vpack.c.b16 %v4987, %v4979
    %v5660 = vpack.c.b16 %v4988, %v4980
    %v5661 = vpack.c.b16 %v4989, %v4981
    %v5662 = vpack.c.b16 %v4990, %v4982
    %v5663 = vpack.c.b16 %v4991, %v4983
    %v5664 = vpack.c.b16 %v4992, %v4984
    %v5665 = vpack.c.b16 %v4993, %v4985
    %v5666 = vpack.c.b16 %v4994, %v4986
    %v5667 = vpack.c.b16 %v5003, %v4995
    %v5668 = vpack.c.b16 %v5004, %v4996
    %v5669 = vpack.c.b16 %v5005, %v4997
    %v5670 = vpack.c.b16 %v5006, %v4998
    %v5671 = vpack.c.b16 %v5007, %v4999
    %v5672 = vpack.c.b16 %v5008, %v5000
    %v5673 = vpack.c.b16 %v5009, %v5001
    %v5674 = vpack.c.b16 %v5010, %v5002
    %v5675 = vpack.c.b16 %v5019, %v5011
    %v5676 = vpack.c.b16 %v5020, %v5012
    %v5677 = vpack.c.b16 %v5021, %v5013
    %v5678 = vpack.c.b16 %v5022, %v5014
    %v5679 = vpack.c.b16 %v5023, %v5015
    %v5680 = vpack.c.b16 %v5024, %v5016
    %v5681 = vpack.c.b16 %v5025, %v5017
    %v5682 = vpack.c.b16 %v5026, %v5018
    %v5683 = vpack.c.b16 %v5035, %v5027
    %v5684 = vpack.c.b16 %v5036, %v5028
    %v5685 = vpack.c.b16 %v5037, %v5029
    %v5686 = vpack.c.b16 %v5038, %v5030
    %v5687 = vpack.c.b16 %v5039, %v5031
    %v5688 = vpack.c.b16 %v5040, %v5032
    %v5689 = vpack.c.b16 %v5041, %v5033
    %v5690 = vpack.c.b16 %v5042, %v5034
    %v5691 = vpack.c.b16 %v5051, %v5043
    %v5692 = vpack.c.b16 %v5052, %v5044
    %v5693 = vpack.c.b16 %v5053, %v5045
    %v5694 = vpack.c.b16 %v5054, %v5046
    %v5695 = vpack.c.b16 %v5055, %v5047
    %v5696 = vpack.c.b16 %v5056, %v5048
    %v5697 = vpack.c.b16 %v5057, %v5049
    %v5698 = vpack.c.b16 %v5058, %v5050
    %v5699 = vpack.c.b16 %v5067, %v5059
    %v5700 = vpack.c.b16 %v5068, %v5060
    %v5701 = vpack.c.b16 %v5069, %v5061
    %v5702 = vpack.c.b16 %v5070, %v5062
    %v5703 = vpack.c.b16 %v5071, %v5063
    %v5704 = vpack.c.b16 %v5072, %v5064
    %v5705 = vpack.c.b16 %v5073, %v5065
    %v5706 = vpack.c.b16 %v5074, %v5066
    %v5707 = vpack.c.b16 %v5083, %v5075
    %v5708 = vpack.c.b16 %v5084, %v5076
    %v5709 = vpack.c.b16 %v5085, %v5077
    %v5710 = vpack.c.b16 %v5086, %v5078
    %v5711 = vpack.c.b16 %v5087, %v5079
    %v5712 = vpack.c.b16 %v5088, %v5080
    %v5713 = vpack.c.b16 %v5089, %v5081
    %v5714 = vpack.c.b16 %v5090, %v5082
    %v5715 = vpack.c.b16 %v5099, %v5091
    %v5716 = vpack.c.b16 %v5100, %v5092
    %v5717 = vpack.c.b16 %v5101, %v5093
    %v5718 = vpack.c.b16 %v5102, %v5094
    %v5719 = vpack.c.b16 %v5103, %v5095
    %v5720 = vpack.c.b16 %v5104, %v5096
    %v5721 = vpack.c.b16 %v5105, %v5097
    %v5722 = vpack.c.b16 %v5106, %v5098
    %v5723 = vpack.c.b16 %v5115, %v5107
    %v5724 = vpack.c.b16 %v5116, %v5108
    %v5725 = vpack.c.b16 %v5117, %v5109
    %v5726 = vpack.c.b16 %v5118, %v5110
    %v5727 = vpack.c.b16 %v5119, %v5111
    %v5728 = vpack.c.b16 %v5120, %v5112
    %v5729 = vpack.c.b16 %v5121, %v5113
    %v5730 = vpack.c.b16 %v5122, %v5114
    %v5731 = vpack.c.b16 %v5131, %v5123
    %v5732 = vpack.c.b16 %v5132, %v5124
    %v5733 = vpack.c.b16 %v5133, %v5125
    %v5734 = vpack.c.b16 %v5134, %v5126
    %v5735 = vpack.c.b16 %v5135, %v5127
    %v5736 = vpack.c.b16 %v5136, %v5128
    %v5737 = vpack.c.b16 %v5137, %v5129
    %v5738 = vpack.c.b16 %v5138, %v5130
    %v5739 = vpack.c.b16 %v5147, %v5139
    %v5740 = vpack.c.b16 %v5148, %v5140
    %v5741 = vpack.c.b16 %v5149, %v5141
    %v5742 = vpack.c.b16 %v5150, %v5142
    %v5743 = vpack.c.b16 %v5151, %v5143
    %v5744 = vpack.c.b16 %v5152, %v5144
    %v5745 = vpack.c.b16 %v5153, %v5145
    %v5746 = vpack.c.b16 %v5154, %v5146
    %v5747 = vpack.c.b16 %v5163, %v5155
    %v5748 = vpack.c.b16 %v5164, %v5156
    %v5749 = vpack.c.b16 %v5165, %v5157
    %v5750 = vpack.c.b16 %v5166, %v5158
    %v5751 = vpack.c.b16 %v5167, %v5159
    %v5752 = vpack.c.b16 %v5168, %v5160
    %v5753 = vpack.c.b16 %v5169, %v5161
    %v5754 = vpack.c.b16 %v5170, %v5162
    %v5755 = vpack.c.b16 %v5179, %v5171
    %v5756 = vpack.c.b16 %v5180, %v5172
    %v5757 = vpack.c.b16 %v5181, %v5173
    %v5758 = vpack.c.b16 %v5182, %v5174
    %v5759 = vpack.c.b16 %v5183, %v5175
    %v5760 = vpack.c.b16 %v5184, %v5176
    %v5761 = vpack.c.b16 %v5185, %v5177
    %v5762 = vpack.c.b16 %v5186, %v5178
    %v5763 = vpack.c.b16 %v5195, %v5187
    %v5764 = vpack.c.b16 %v5196, %v5188
    %v5765 = vpack.c.b16 %v5197, %v5189
    %v5766 = vpack.c.b16 %v5198, %v5190
    %v5767 = vpack.c.b16 %v5199, %v5191
    %v5768 = vpack.c.b16 %v5200, %v5192
    %v5769 = vpack.c.b16 %v5201, %v5193
    %v5770 = vpack.c.b16 %v5202, %v5194
    %v5771 = vpack.c.b16 %v5211, %v5203
    %v5772 = vpack.c.b16 %v5212, %v5204
    %v5773 = vpack.c.b16 %v5213, %v5205
    %v5774 = vpack.c.b16 %v5214, %v5206
    %v5775 = vpack.c.b16 %v5215, %v5207
    %v5776 = vpack.c.b16 %v5216, %v5208
    %v5777 = vpack.c.b16 %v5217, %v5209
    %v5778 = vpack.c.b16 %v5218, %v5210
    %v5779 = vpack.c.b16 %v5227, %v5219
    %v5780 = vpack.c.b16 %v5228, %v5220
    %v5781 = vpack.c.b16 %v5229, %v5221
    %v5782 = vpack.c.b16 %v5230, %v5222
    %v5783 = vpack.c.b16 %v5231, %v5223
    %v5784 = vpack.c.b16 %v5232, %v5224
    %v5785 = vpack.c.b16 %v5233, %v5225
    %v5786 = vpack.c.b16 %v5234, %v5226
    %v5787 = vpack.c.b16 %v5243, %v5235
    %v5788 = vpack.c.b16 %v5244, %v5236
    %v5789 = vpack.c.b16 %v5245, %v5237
    %v5790 = vpack.c.b16 %v5246, %v5238
    %v5791 = vpack.c.b16 %v5247, %v5239
    %v5792 = vpack.c.b16 %v5248, %v5240
    %v5793 = vpack.c.b16 %v5249, %v5241
    %v5794 = vpack.c.b16 %v5250, %v5242
    %v5795 = vpack.c.b16 %v5259, %v5251
    %v5796 = vpack.c.b16 %v5260, %v5252
    %v5797 = vpack.c.b16 %v5261, %v5253
    %v5798 = vpack.c.b16 %v5262, %v5254
    %v5799 = vpack.c.b16 %v5263, %v5255
    %v5800 = vpack.c.b16 %v5264, %v5256
    %v5801 = vpack.c.b16 %v5265, %v5257
    %v5802 = vpack.c.b16 %v5266, %v5258
    %v5803 = vpack.c.b16 %v5275, %v5267
    %v5804 = vpack.c.b16 %v5276, %v5268
    %v5805 = vpack.c.b16 %v5277, %v5269
    %v5806 = vpack.c.b16 %v5278, %v5270
    %v5807 = vpack.c.b16 %v5279, %v5271
    %v5808 = vpack.c.b16 %v5280, %v5272
    %v5809 = vpack.c.b16 %v5281, %v5273
    %v5810 = vpack.c.b16 %v5282, %v5274
    %v5811 = vpack.c.b16 %v5291, %v5283
    %v5812 = vpack.c.b16 %v5292, %v5284
    %v5813 = vpack.c.b16 %v5293, %v5285
    %v5814 = vpack.c.b16 %v5294, %v5286
    %v5815 = vpack.c.b16 %v5295, %v5287
    %v5816 = vpack.c.b16 %v5296, %v5288
    %v5817 = vpack.c.b16 %v5297, %v5289
    %v5818 = vpack.c.b16 %v5298, %v5290
    %v5819 = vpack.c.b16 %v5307, %v5299
    %v5820 = vpack.c.b16 %v5308, %v5300
    %v5821 = vpack.c.b16 %v5309, %v5301
    %v5822 = vpack.c.b16 %v5310, %v5302
    %v5823 = vpack.c.b16 %v5311, %v5303
    %v5824 = vpack.c.b16 %v5312, %v5304
    %v5825 = vpack.c.b16 %v5313, %v5305
    %v5826 = vpack.c.b16 %v5314, %v5306
    %6339 = vmatprep.subr.bf16.mxu0 %v5316
    %6340 = vmatpush1.bf16.msra.mxu0 %v5315
    %6341 = vmatprep.subr.bf16.mxu0 %v5324
    %6342 = vmatpush1.bf16.msra.mxu0 %v5323
    %6343 = vmatprep.subr.bf16.mxu0 %v5332
    %6344 = vmatpush1.bf16.msra.mxu0 %v5331
    %6345 = vmatprep.subr.bf16.mxu0 %v5340
    %6346 = vmatpush1.bf16.msra.mxu0 %v5339
    %6347 = vmatprep.subr.bf16.mxu0 %v5348
    %6348 = vmatpush1.bf16.msra.mxu0 %v5347
    %6349 = vmatprep.subr.bf16.mxu0 %v5356
    %6350 = vmatpush1.bf16.msra.mxu0 %v5355
    %6351 = vmatprep.subr.bf16.mxu0 %v5364
    %6352 = vmatpush1.bf16.msra.mxu0 %v5363
    %6353 = vmatprep.subr.bf16.mxu0 %v5372
    %6354 = vmatpush1.bf16.msra.mxu0 %v5371
    %6355 = vmatprep.subr.bf16.mxu0 %v5380
    %6356 = vmatpush1.bf16.msra.mxu0 %v5379
    %6357 = vmatprep.subr.bf16.mxu0 %v5388
    %6358 = vmatpush1.bf16.msra.mxu0 %v5387
    %6359 = vmatprep.subr.bf16.mxu0 %v5396
    %6360 = vmatpush1.bf16.msra.mxu0 %v5395
    %6361 = vmatprep.subr.bf16.mxu0 %v5404
    %6362 = vmatpush1.bf16.msra.mxu0 %v5403
    %6363 = vmatprep.subr.bf16.mxu0 %v5412
    %6364 = vmatpush1.bf16.msra.mxu0 %v5411
    %6365 = vmatprep.subr.bf16.mxu0 %v5420
    %6366 = vmatpush1.bf16.msra.mxu0 %v5419
    %6367 = vmatprep.subr.bf16.mxu0 %v5428
    %6368 = vmatpush1.bf16.msra.mxu0 %v5427
    %6369 = vmatprep.subr.bf16.mxu0 %v5436
    %6370 = vmatpush1.bf16.msra.mxu0 %v5435
    %6371 = vmatprep.mubr.bf16.mxu0 %v3218
    %6372 = vmatmul.mubr.bf16.gmra.mrb[0].mxu0 %v3217
    %v6373 = vpop.f32.mrb[0].mxu0
    %v6374 = vadd.f32 %v3742, %v6373
    %v6375 = vpop.f32.mrb[0].mxu0
    %v6376 = vadd.f32 %v3746, %v6375
    %v6377 = vpop.f32.mrb[0].mxu0
    %v6378 = vpop.f32.mrb[0].mxu0
    %6379 = vdwg.mxu0
    %6380 = vmatprep.subr.bf16.mxu0 %v5444
    %6381 = vmatpush1.bf16.msra.mxu0 %v5443
    %6382 = vmatprep.subr.bf16.mxu0 %v5452
    %6383 = vmatpush1.bf16.msra.mxu0 %v5451
    %6384 = vmatprep.subr.bf16.mxu0 %v5460
    %6385 = vmatpush1.bf16.msra.mxu0 %v5459
    %6386 = vmatprep.subr.bf16.mxu0 %v5468
    %6387 = vmatpush1.bf16.msra.mxu0 %v5467
    %6388 = vmatprep.subr.bf16.mxu0 %v5476
    %6389 = vmatpush1.bf16.msra.mxu0 %v5475
    %6390 = vmatprep.subr.bf16.mxu0 %v5484
    %6391 = vmatpush1.bf16.msra.mxu0 %v5483
    %6392 = vmatprep.subr.bf16.mxu0 %v5492
    %6393 = vmatpush1.bf16.msra.mxu0 %v5491
    %6394 = vmatprep.subr.bf16.mxu0 %v5500
    %6395 = vmatpush1.bf16.msra.mxu0 %v5499
    %6396 = vmatprep.subr.bf16.mxu0 %v5508
    %6397 = vmatpush1.bf16.msra.mxu0 %v5507
    %6398 = vmatprep.subr.bf16.mxu0 %v5516
    %6399 = vmatpush1.bf16.msra.mxu0 %v5515
    %6400 = vmatprep.subr.bf16.mxu0 %v5524
    %6401 = vmatpush1.bf16.msra.mxu0 %v5523
    %6402 = vmatprep.subr.bf16.mxu0 %v5532
    %6403 = vmatpush1.bf16.msra.mxu0 %v5531
    %6404 = vmatprep.subr.bf16.mxu0 %v5540
    %6405 = vmatpush1.bf16.msra.mxu0 %v5539
    %6406 = vmatprep.subr.bf16.mxu0 %v5548
    %6407 = vmatpush1.bf16.msra.mxu0 %v5547
    %6408 = vmatprep.subr.bf16.mxu0 %v5556
    %6409 = vmatpush1.bf16.msra.mxu0 %v5555
    %6410 = vmatprep.subr.bf16.mxu0 %v5564
    %6411 = vmatpush1.bf16.msra.mxu0 %v5563
    %6412 = vmatprep.mubr.bf16.mxu0 %v3220
    %6413 = vmatmul.mubr.bf16.gmra.mrb[0].mxu0 %v3219
    %v6414 = vpop.f32.mrb[0].mxu0
    %v6415 = vadd.f32 %v6374, %v6414
    %v6416 = vpop.f32.mrb[0].mxu0
    %v6417 = vadd.f32 %v6376, %v6416
    %v6418 = vpop.f32.mrb[0].mxu0
    %v6419 = vpop.f32.mrb[0].mxu0
    %6420 = vdwg.mxu0
    %6421 = vmatprep.subr.bf16.mxu0 %v5572
    %6422 = vmatpush1.bf16.msra.mxu0 %v5571
    %6423 = vmatprep.subr.bf16.mxu0 %v5580
    %6424 = vmatpush1.bf16.msra.mxu0 %v5579
    %6425 = vmatprep.subr.bf16.mxu0 %v5588
    %6426 = vmatpush1.bf16.msra.mxu0 %v5587
    %6427 = vmatprep.subr.bf16.mxu0 %v5596
    %6428 = vmatpush1.bf16.msra.mxu0 %v5595
    %6429 = vmatprep.subr.bf16.mxu0 %v5604
    %6430 = vmatpush1.bf16.msra.mxu0 %v5603
    %6431 = vmatprep.subr.bf16.mxu0 %v5612
    %6432 = vmatpush1.bf16.msra.mxu0 %v5611
    %6433 = vmatprep.subr.bf16.mxu0 %v5620
    %6434 = vmatpush1.bf16.msra.mxu0 %v5619
    %6435 = vmatprep.subr.bf16.mxu0 %v5628
    %6436 = vmatpush1.bf16.msra.mxu0 %v5627
    %6437 = vmatprep.subr.bf16.mxu0 %v5636
    %6438 = vmatpush1.bf16.msra.mxu0 %v5635
    %6439 = vmatprep.subr.bf16.mxu0 %v5644
    %6440 = vmatpush1.bf16.msra.mxu0 %v5643
    %6441 = vmatprep.subr.bf16.mxu0 %v5652
    %6442 = vmatpush1.bf16.msra.mxu0 %v5651
    %6443 = vmatprep.subr.bf16.mxu0 %v5660
    %6444 = vmatpush1.bf16.msra.mxu0 %v5659
    %6445 = vmatprep.subr.bf16.mxu0 %v5668
    %6446 = vmatpush1.bf16.msra.mxu0 %v5667
    %6447 = vmatprep.subr.bf16.mxu0 %v5676
    %6448 = vmatpush1.bf16.msra.mxu0 %v5675
    %6449 = vmatprep.subr.bf16.mxu0 %v5684
    %6450 = vmatpush1.bf16.msra.mxu0 %v5683
    %6451 = vmatprep.subr.bf16.mxu0 %v5692
    %6452 = vmatpush1.bf16.msra.mxu0 %v5691
    %6453 = vmatprep.mubr.bf16.mxu0 %v3222
    %6454 = vmatmul.mubr.bf16.gmra.mrb[0].mxu0 %v3221
    %v6455 = vpop.f32.mrb[0].mxu0
    %v6456 = vadd.f32 %v6415, %v6455
    %v6457 = vpop.f32.mrb[0].mxu0
    %v6458 = vadd.f32 %v6417, %v6457
    %v6459 = vpop.f32.mrb[0].mxu0
    %v6460 = vpop.f32.mrb[0].mxu0
    %6461 = vdwg.mxu0
    %6462 = vmatprep.subr.bf16.mxu0 %v5700
    %6463 = vmatpush1.bf16.msra.mxu0 %v5699
    %6464 = vmatprep.subr.bf16.mxu0 %v5708
    %6465 = vmatpush1.bf16.msra.mxu0 %v5707
    %6466 = vmatprep.subr.bf16.mxu0 %v5716
    %6467 = vmatpush1.bf16.msra.mxu0 %v5715
    %6468 = vmatprep.subr.bf16.mxu0 %v5724
    %6469 = vmatpush1.bf16.msra.mxu0 %v5723
    %6470 = vmatprep.subr.bf16.mxu0 %v5732
    %6471 = vmatpush1.bf16.msra.mxu0 %v5731
    %6472 = vmatprep.subr.bf16.mxu0 %v5740
    %6473 = vmatpush1.bf16.msra.mxu0 %v5739
    %6474 = vmatprep.subr.bf16.mxu0 %v5748
    %6475 = vmatpush1.bf16.msra.mxu0 %v5747
    %6476 = vmatprep.subr.bf16.mxu0 %v5756
    %6477 = vmatpush1.bf16.msra.mxu0 %v5755
    %6478 = vmatprep.subr.bf16.mxu0 %v5764
    %6479 = vmatpush1.bf16.msra.mxu0 %v5763
    %6480 = vmatprep.subr.bf16.mxu0 %v5772
    %6481 = vmatpush1.bf16.msra.mxu0 %v5771
    %6482 = vmatprep.subr.bf16.mxu0 %v5780
    %6483 = vmatpush1.bf16.msra.mxu0 %v5779
    %6484 = vmatprep.subr.bf16.mxu0 %v5788
    %6485 = vmatpush1.bf16.msra.mxu0 %v5787
    %6486 = vmatprep.subr.bf16.mxu0 %v5796
    %6487 = vmatpush1.bf16.msra.mxu0 %v5795
    %6488 = vmatprep.subr.bf16.mxu0 %v5804
    %6489 = vmatpush1.bf16.msra.mxu0 %v5803
    %6490 = vmatprep.subr.bf16.mxu0 %v5812
    %6491 = vmatpush1.bf16.msra.mxu0 %v5811
    %6492 = vmatprep.subr.bf16.mxu0 %v5820
    %6493 = vmatpush1.bf16.msra.mxu0 %v5819
    %6494 = vmatprep.mubr.bf16.mxu0 %v3224
    %6495 = vmatmul.mubr.bf16.gmra.mrb[0].mxu0 %v3223
    %v6496 = vpop.f32.mrb[0].mxu0
    %v6497 = vadd.f32 %v6456, %v6496
    %v6498 = vpop.f32.mrb[0].mxu0
    %v6499 = vadd.f32 %v6458, %v6498
    %v6500 = vpop.f32.mrb[0].mxu0
    %v6501 = vpop.f32.mrb[0].mxu0
    %6502 = vdwg.mxu0
    %6503 = vmatprep.subr.bf16.mxu0 %v5318
    %6504 = vmatpush1.bf16.msra.mxu0 %v5317
    %6505 = vmatprep.subr.bf16.mxu0 %v5326
    %6506 = vmatpush1.bf16.msra.mxu0 %v5325
    %6507 = vmatprep.subr.bf16.mxu0 %v5334
    %6508 = vmatpush1.bf16.msra.mxu0 %v5333
    %6509 = vmatprep.subr.bf16.mxu0 %v5342
    %6510 = vmatpush1.bf16.msra.mxu0 %v5341
    %6511 = vmatprep.subr.bf16.mxu0 %v5350
    %6512 = vmatpush1.bf16.msra.mxu0 %v5349
    %6513 = vmatprep.subr.bf16.mxu0 %v5358
    %6514 = vmatpush1.bf16.msra.mxu0 %v5357
    %6515 = vmatprep.subr.bf16.mxu0 %v5366
    %6516 = vmatpush1.bf16.msra.mxu0 %v5365
    %6517 = vmatprep.subr.bf16.mxu0 %v5374
    %6518 = vmatpush1.bf16.msra.mxu0 %v5373
    %6519 = vmatprep.subr.bf16.mxu0 %v5382
    %6520 = vmatpush1.bf16.msra.mxu0 %v5381
    %6521 = vmatprep.subr.bf16.mxu0 %v5390
    %6522 = vmatpush1.bf16.msra.mxu0 %v5389
    %6523 = vmatprep.subr.bf16.mxu0 %v5398
    %6524 = vmatpush1.bf16.msra.mxu0 %v5397
    %6525 = vmatprep.subr.bf16.mxu0 %v5406
    %6526 = vmatpush1.bf16.msra.mxu0 %v5405
    %6527 = vmatprep.subr.bf16.mxu0 %v5414
    %6528 = vmatpush1.bf16.msra.mxu0 %v5413
    %6529 = vmatprep.subr.bf16.mxu0 %v5422
    %6530 = vmatpush1.bf16.msra.mxu0 %v5421
    %6531 = vmatprep.subr.bf16.mxu0 %v5430
    %6532 = vmatpush1.bf16.msra.mxu0 %v5429
    %6533 = vmatprep.subr.bf16.mxu0 %v5438
    %6534 = vmatpush1.bf16.msra.mxu0 %v5437
    %6535 = vmatprep.mubr.bf16.mxu0 %v3218
    %6536 = vmatmul.mubr.bf16.gmra.mrb[0].mxu0 %v3217
    %v6537 = vpop.f32.mrb[0].mxu0
    %v6538 = vadd.f32 %v3750, %v6537
    %v6539 = vpop.f32.mrb[0].mxu0
    %v6540 = vadd.f32 %v3754, %v6539
    %v6541 = vpop.f32.mrb[0].mxu0
    %v6542 = vpop.f32.mrb[0].mxu0
    %6543 = vdwg.mxu0
    %6544 = vmatprep.subr.bf16.mxu0 %v5446
    %6545 = vmatpush1.bf16.msra.mxu0 %v5445
    %6546 = vmatprep.subr.bf16.mxu0 %v5454
    %6547 = vmatpush1.bf16.msra.mxu0 %v5453
    %6548 = vmatprep.subr.bf16.mxu0 %v5462
    %6549 = vmatpush1.bf16.msra.mxu0 %v5461
    %6550 = vmatprep.subr.bf16.mxu0 %v5470
    %6551 = vmatpush1.bf16.msra.mxu0 %v5469
    %6552 = vmatprep.subr.bf16.mxu0 %v5478
    %6553 = vmatpush1.bf16.msra.mxu0 %v5477
    %6554 = vmatprep.subr.bf16.mxu0 %v5486
    %6555 = vmatpush1.bf16.msra.mxu0 %v5485
    %6556 = vmatprep.subr.bf16.mxu0 %v5494
    %6557 = vmatpush1.bf16.msra.mxu0 %v5493
    %6558 = vmatprep.subr.bf16.mxu0 %v5502
    %6559 = vmatpush1.bf16.msra.mxu0 %v5501
    %6560 = vmatprep.subr.bf16.mxu0 %v5510
    %6561 = vmatpush1.bf16.msra.mxu0 %v5509
    %6562 = vmatprep.subr.bf16.mxu0 %v5518
    %6563 = vmatpush1.bf16.msra.mxu0 %v5517
    %6564 = vmatprep.subr.bf16.mxu0 %v5526
    %6565 = vmatpush1.bf16.msra.mxu0 %v5525
    %6566 = vmatprep.subr.bf16.mxu0 %v5534
    %6567 = vmatpush1.bf16.msra.mxu0 %v5533
    %6568 = vmatprep.subr.bf16.mxu0 %v5542
    %6569 = vmatpush1.bf16.msra.mxu0 %v5541
    %6570 = vmatprep.subr.bf16.mxu0 %v5550
    %6571 = vmatpush1.bf16.msra.mxu0 %v5549
    %6572 = vmatprep.subr.bf16.mxu0 %v5558
    %6573 = vmatpush1.bf16.msra.mxu0 %v5557
    %6574 = vmatprep.subr.bf16.mxu0 %v5566
    %6575 = vmatpush1.bf16.msra.mxu0 %v5565
    %6576 = vmatprep.mubr.bf16.mxu0 %v3220
    %6577 = vmatmul.mubr.bf16.gmra.mrb[0].mxu0 %v3219
    %v6578 = vpop.f32.mrb[0].mxu0
    %v6579 = vadd.f32 %v6538, %v6578
    %v6580 = vpop.f32.mrb[0].mxu0
    %v6581 = vadd.f32 %v6540, %v6580
    %v6582 = vpop.f32.mrb[0].mxu0
    %v6583 = vpop.f32.mrb[0].mxu0
    %6584 = vdwg.mxu0
    %6585 = vmatprep.subr.bf16.mxu0 %v5574
    %6586 = vmatpush1.bf16.msra.mxu0 %v5573
    %6587 = vmatprep.subr.bf16.mxu0 %v5582
    %6588 = vmatpush1.bf16.msra.mxu0 %v5581
    %6589 = vmatprep.subr.bf16.mxu0 %v5590
    %6590 = vmatpush1.bf16.msra.mxu0 %v5589
    %6591 = vmatprep.subr.bf16.mxu0 %v5598
    %6592 = vmatpush1.bf16.msra.mxu0 %v5597
    %6593 = vmatprep.subr.bf16.mxu0 %v5606
    %6594 = vmatpush1.bf16.msra.mxu0 %v5605
    %6595 = vmatprep.subr.bf16.mxu0 %v5614
    %6596 = vmatpush1.bf16.msra.mxu0 %v5613
    %6597 = vmatprep.subr.bf16.mxu0 %v5622
    %6598 = vmatpush1.bf16.msra.mxu0 %v5621
    %6599 = vmatprep.subr.bf16.mxu0 %v5630
    %6600 = vmatpush1.bf16.msra.mxu0 %v5629
    %6601 = vmatprep.subr.bf16.mxu0 %v5638
    %6602 = vmatpush1.bf16.msra.mxu0 %v5637
    %6603 = vmatprep.subr.bf16.mxu0 %v5646
    %6604 = vmatpush1.bf16.msra.mxu0 %v5645
    %6605 = vmatprep.subr.bf16.mxu0 %v5654
    %6606 = vmatpush1.bf16.msra.mxu0 %v5653
    %6607 = vmatprep.subr.bf16.mxu0 %v5662
    %6608 = vmatpush1.bf16.msra.mxu0 %v5661
    %6609 = vmatprep.subr.bf16.mxu0 %v5670
    %6610 = vmatpush1.bf16.msra.mxu0 %v5669
    %6611 = vmatprep.subr.bf16.mxu0 %v5678
    %6612 = vmatpush1.bf16.msra.mxu0 %v5677
    %6613 = vmatprep.subr.bf16.mxu0 %v5686
    %6614 = vmatpush1.bf16.msra.mxu0 %v5685
    %6615 = vmatprep.subr.bf16.mxu0 %v5694
    %6616 = vmatpush1.bf16.msra.mxu0 %v5693
    %6617 = vmatprep.mubr.bf16.mxu0 %v3222
    %6618 = vmatmul.mubr.bf16.gmra.mrb[0].mxu0 %v3221
    %v6619 = vpop.f32.mrb[0].mxu0
    %v6620 = vadd.f32 %v6579, %v6619
    %v6621 = vpop.f32.mrb[0].mxu0
    %v6622 = vadd.f32 %v6581, %v6621
    %v6623 = vpop.f32.mrb[0].mxu0
    %v6624 = vpop.f32.mrb[0].mxu0
    %6625 = vdwg.mxu0
    %6626 = vmatprep.subr.bf16.mxu0 %v5702
    %6627 = vmatpush1.bf16.msra.mxu0 %v5701
    %6628 = vmatprep.subr.bf16.mxu0 %v5710
    %6629 = vmatpush1.bf16.msra.mxu0 %v5709
    %6630 = vmatprep.subr.bf16.mxu0 %v5718
    %6631 = vmatpush1.bf16.msra.mxu0 %v5717
    %6632 = vmatprep.subr.bf16.mxu0 %v5726
    %6633 = vmatpush1.bf16.msra.mxu0 %v5725
    %6634 = vmatprep.subr.bf16.mxu0 %v5734
    %6635 = vmatpush1.bf16.msra.mxu0 %v5733
    %6636 = vmatprep.subr.bf16.mxu0 %v5742
    %6637 = vmatpush1.bf16.msra.mxu0 %v5741
    %6638 = vmatprep.subr.bf16.mxu0 %v5750
    %6639 = vmatpush1.bf16.msra.mxu0 %v5749
    %6640 = vmatprep.subr.bf16.mxu0 %v5758
    %6641 = vmatpush1.bf16.msra.mxu0 %v5757
    %6642 = vmatprep.subr.bf16.mxu0 %v5766
    %6643 = vmatpush1.bf16.msra.mxu0 %v5765
    %6644 = vmatprep.subr.bf16.mxu0 %v5774
    %6645 = vmatpush1.bf16.msra.mxu0 %v5773
    %6646 = vmatprep.subr.bf16.mxu0 %v5782
    %6647 = vmatpush1.bf16.msra.mxu0 %v5781
    %6648 = vmatprep.subr.bf16.mxu0 %v5790
    %6649 = vmatpush1.bf16.msra.mxu0 %v5789
    %6650 = vmatprep.subr.bf16.mxu0 %v5798
    %6651 = vmatpush1.bf16.msra.mxu0 %v5797
    %6652 = vmatprep.subr.bf16.mxu0 %v5806
    %6653 = vmatpush1.bf16.msra.mxu0 %v5805
    %6654 = vmatprep.subr.bf16.mxu0 %v5814
    %6655 = vmatpush1.bf16.msra.mxu0 %v5813
    %6656 = vmatprep.subr.bf16.mxu0 %v5822
    %6657 = vmatpush1.bf16.msra.mxu0 %v5821
    %6658 = vmatprep.mubr.bf16.mxu0 %v3224
    %6659 = vmatmul.mubr.bf16.gmra.mrb[0].mxu0 %v3223
    %v6660 = vpop.f32.mrb[0].mxu0
    %v6661 = vadd.f32 %v6620, %v6660
    %v6662 = vpop.f32.mrb[0].mxu0
    %v6663 = vadd.f32 %v6622, %v6662
    %v6664 = vpop.f32.mrb[0].mxu0
    %v6665 = vpop.f32.mrb[0].mxu0
    %6666 = vdwg.mxu0
    %6667 = vmatprep.subr.bf16.mxu0 %v5320
    %6668 = vmatpush1.bf16.msra.mxu0 %v5319
    %6669 = vmatprep.subr.bf16.mxu0 %v5328
    %6670 = vmatpush1.bf16.msra.mxu0 %v5327
    %6671 = vmatprep.subr.bf16.mxu0 %v5336
    %6672 = vmatpush1.bf16.msra.mxu0 %v5335
    %6673 = vmatprep.subr.bf16.mxu0 %v5344
    %6674 = vmatpush1.bf16.msra.mxu0 %v5343
    %6675 = vmatprep.subr.bf16.mxu0 %v5352
    %6676 = vmatpush1.bf16.msra.mxu0 %v5351
    %6677 = vmatprep.subr.bf16.mxu0 %v5360
    %6678 = vmatpush1.bf16.msra.mxu0 %v5359
    %6679 = vmatprep.subr.bf16.mxu0 %v5368
    %6680 = vmatpush1.bf16.msra.mxu0 %v5367
    %6681 = vmatprep.subr.bf16.mxu0 %v5376
    %6682 = vmatpush1.bf16.msra.mxu0 %v5375
    %6683 = vmatprep.subr.bf16.mxu0 %v5384
    %6684 = vmatpush1.bf16.msra.mxu0 %v5383
    %6685 = vmatprep.subr.bf16.mxu0 %v5392
    %6686 = vmatpush1.bf16.msra.mxu0 %v5391
    %6687 = vmatprep.subr.bf16.mxu0 %v5400
    %6688 = vmatpush1.bf16.msra.mxu0 %v5399
    %6689 = vmatprep.subr.bf16.mxu0 %v5408
    %6690 = vmatpush1.bf16.msra.mxu0 %v5407
    %6691 = vmatprep.subr.bf16.mxu0 %v5416
    %6692 = vmatpush1.bf16.msra.mxu0 %v5415
    %6693 = vmatprep.subr.bf16.mxu0 %v5424
    %6694 = vmatpush1.bf16.msra.mxu0 %v5423
    %6695 = vmatprep.subr.bf16.mxu0 %v5432
    %6696 = vmatpush1.bf16.msra.mxu0 %v5431
    %6697 = vmatprep.subr.bf16.mxu0 %v5440
    %6698 = vmatpush1.bf16.msra.mxu0 %v5439
    %6699 = vmatprep.mubr.bf16.mxu0 %v3218
    %6700 = vmatmul.mubr.bf16.gmra.mrb[0].mxu0 %v3217
    %v6701 = vpop.f32.mrb[0].mxu0
    %v6702 = vadd.f32 %v3758, %v6701
    %v6703 = vpop.f32.mrb[0].mxu0
    %v6704 = vadd.f32 %v3762, %v6703
    %v6705 = vpop.f32.mrb[0].mxu0
    %v6706 = vpop.f32.mrb[0].mxu0
    %6707 = vdwg.mxu0
    %6708 = vmatprep.subr.bf16.mxu0 %v5448
    %6709 = vmatpush1.bf16.msra.mxu0 %v5447
    %6710 = vmatprep.subr.bf16.mxu0 %v5456
    %6711 = vmatpush1.bf16.msra.mxu0 %v5455
    %6712 = vmatprep.subr.bf16.mxu0 %v5464
    %6713 = vmatpush1.bf16.msra.mxu0 %v5463
    %6714 = vmatprep.subr.bf16.mxu0 %v5472
    %6715 = vmatpush1.bf16.msra.mxu0 %v5471
    %6716 = vmatprep.subr.bf16.mxu0 %v5480
    %6717 = vmatpush1.bf16.msra.mxu0 %v5479
    %6718 = vmatprep.subr.bf16.mxu0 %v5488
    %6719 = vmatpush1.bf16.msra.mxu0 %v5487
    %6720 = vmatprep.subr.bf16.mxu0 %v5496
    %6721 = vmatpush1.bf16.msra.mxu0 %v5495
    %6722 = vmatprep.subr.bf16.mxu0 %v5504
    %6723 = vmatpush1.bf16.msra.mxu0 %v5503
    %6724 = vmatprep.subr.bf16.mxu0 %v5512
    %6725 = vmatpush1.bf16.msra.mxu0 %v5511
    %6726 = vmatprep.subr.bf16.mxu0 %v5520
    %6727 = vmatpush1.bf16.msra.mxu0 %v5519
    %6728 = vmatprep.subr.bf16.mxu0 %v5528
    %6729 = vmatpush1.bf16.msra.mxu0 %v5527
    %6730 = vmatprep.subr.bf16.mxu0 %v5536
    %6731 = vmatpush1.bf16.msra.mxu0 %v5535
    %6732 = vmatprep.subr.bf16.mxu0 %v5544
    %6733 = vmatpush1.bf16.msra.mxu0 %v5543
    %6734 = vmatprep.subr.bf16.mxu0 %v5552
    %6735 = vmatpush1.bf16.msra.mxu0 %v5551
    %6736 = vmatprep.subr.bf16.mxu0 %v5560
    %6737 = vmatpush1.bf16.msra.mxu0 %v5559
    %6738 = vmatprep.subr.bf16.mxu0 %v5568
    %6739 = vmatpush1.bf16.msra.mxu0 %v5567
    %6740 = vmatprep.mubr.bf16.mxu0 %v3220
    %6741 = vmatmul.mubr.bf16.gmra.mrb[0].mxu0 %v3219
    %v6742 = vpop.f32.mrb[0].mxu0
    %v6743 = vadd.f32 %v6702, %v6742
    %v6744 = vpop.f32.mrb[0].mxu0
    %v6745 = vadd.f32 %v6704, %v6744
    %v6746 = vpop.f32.mrb[0].mxu0
    %v6747 = vpop.f32.mrb[0].mxu0
    %6748 = vdwg.mxu0
    %6749 = vmatprep.subr.bf16.mxu0 %v5576
    %6750 = vmatpush1.bf16.msra.mxu0 %v5575
    %6751 = vmatprep.subr.bf16.mxu0 %v5584
    %6752 = vmatpush1.bf16.msra.mxu0 %v5583
    %6753 = vmatprep.subr.bf16.mxu0 %v5592
    %6754 = vmatpush1.bf16.msra.mxu0 %v5591
    %6755 = vmatprep.subr.bf16.mxu0 %v5600
    %6756 = vmatpush1.bf16.msra.mxu0 %v5599
    %6757 = vmatprep.subr.bf16.mxu0 %v5608
    %6758 = vmatpush1.bf16.msra.mxu0 %v5607
    %6759 = vmatprep.subr.bf16.mxu0 %v5616
    %6760 = vmatpush1.bf16.msra.mxu0 %v5615
    %6761 = vmatprep.subr.bf16.mxu0 %v5624
    %6762 = vmatpush1.bf16.msra.mxu0 %v5623
    %6763 = vmatprep.subr.bf16.mxu0 %v5632
    %6764 = vmatpush1.bf16.msra.mxu0 %v5631
    %6765 = vmatprep.subr.bf16.mxu0 %v5640
    %6766 = vmatpush1.bf16.msra.mxu0 %v5639
    %6767 = vmatprep.subr.bf16.mxu0 %v5648
    %6768 = vmatpush1.bf16.msra.mxu0 %v5647
    %6769 = vmatprep.subr.bf16.mxu0 %v5656
    %6770 = vmatpush1.bf16.msra.mxu0 %v5655
    %6771 = vmatprep.subr.bf16.mxu0 %v5664
    %6772 = vmatpush1.bf16.msra.mxu0 %v5663
    %6773 = vmatprep.subr.bf16.mxu0 %v5672
    %6774 = vmatpush1.bf16.msra.mxu0 %v5671
    %6775 = vmatprep.subr.bf16.mxu0 %v5680
    %6776 = vmatpush1.bf16.msra.mxu0 %v5679
    %6777 = vmatprep.subr.bf16.mxu0 %v5688
    %6778 = vmatpush1.bf16.msra.mxu0 %v5687
    %6779 = vmatprep.subr.bf16.mxu0 %v5696
    %6780 = vmatpush1.bf16.msra.mxu0 %v5695
    %6781 = vmatprep.mubr.bf16.mxu0 %v3222
    %6782 = vmatmul.mubr.bf16.gmra.mrb[0].mxu0 %v3221
    %v6783 = vpop.f32.mrb[0].mxu0
    %v6784 = vadd.f32 %v6743, %v6783
    %v6785 = vpop.f32.mrb[0].mxu0
    %v6786 = vadd.f32 %v6745, %v6785
    %v6787 = vpop.f32.mrb[0].mxu0
    %v6788 = vpop.f32.mrb[0].mxu0
    %6789 = vdwg.mxu0
    %6790 = vmatprep.subr.bf16.mxu0 %v5704
    %6791 = vmatpush1.bf16.msra.mxu0 %v5703
    %6792 = vmatprep.subr.bf16.mxu0 %v5712
    %6793 = vmatpush1.bf16.msra.mxu0 %v5711
    %6794 = vmatprep.subr.bf16.mxu0 %v5720
    %6795 = vmatpush1.bf16.msra.mxu0 %v5719
    %6796 = vmatprep.subr.bf16.mxu0 %v5728
    %6797 = vmatpush1.bf16.msra.mxu0 %v5727
    %6798 = vmatprep.subr.bf16.mxu0 %v5736
    %6799 = vmatpush1.bf16.msra.mxu0 %v5735
    %6800 = vmatprep.subr.bf16.mxu0 %v5744
    %6801 = vmatpush1.bf16.msra.mxu0 %v5743
    %6802 = vmatprep.subr.bf16.mxu0 %v5752
    %6803 = vmatpush1.bf16.msra.mxu0 %v5751
    %6804 = vmatprep.subr.bf16.mxu0 %v5760
    %6805 = vmatpush1.bf16.msra.mxu0 %v5759
    %6806 = vmatprep.subr.bf16.mxu0 %v5768
    %6807 = vmatpush1.bf16.msra.mxu0 %v5767
    %6808 = vmatprep.subr.bf16.mxu0 %v5776
    %6809 = vmatpush1.bf16.msra.mxu0 %v5775
    %6810 = vmatprep.subr.bf16.mxu0 %v5784
    %6811 = vmatpush1.bf16.msra.mxu0 %v5783
    %6812 = vmatprep.subr.bf16.mxu0 %v5792
    %6813 = vmatpush1.bf16.msra.mxu0 %v5791
    %6814 = vmatprep.subr.bf16.mxu0 %v5800
    %6815 = vmatpush1.bf16.msra.mxu0 %v5799
    %6816 = vmatprep.subr.bf16.mxu0 %v5808
    %6817 = vmatpush1.bf16.msra.mxu0 %v5807
    %6818 = vmatprep.subr.bf16.mxu0 %v5816
    %6819 = vmatpush1.bf16.msra.mxu0 %v5815
    %6820 = vmatprep.subr.bf16.mxu0 %v5824
    %6821 = vmatpush1.bf16.msra.mxu0 %v5823
    %6822 = vmatprep.mubr.bf16.mxu0 %v3224
    %6823 = vmatmul.mubr.bf16.gmra.mrb[0].mxu0 %v3223
    %v6824 = vpop.f32.mrb[0].mxu0
    %v6825 = vadd.f32 %v6784, %v6824
    %v6826 = vpop.f32.mrb[0].mxu0
    %v6827 = vadd.f32 %v6786, %v6826
    %v6828 = vpop.f32.mrb[0].mxu0
    %v6829 = vpop.f32.mrb[0].mxu0
    %6830 = vdwg.mxu0
    %6831 = vmatprep.subr.bf16.mxu0 %v5322
    %6832 = vmatpush1.bf16.msra.mxu0 %v5321
    %6833 = vmatprep.subr.bf16.mxu0 %v5330
    %6834 = vmatpush1.bf16.msra.mxu0 %v5329
    %6835 = vmatprep.subr.bf16.mxu0 %v5338
    %6836 = vmatpush1.bf16.msra.mxu0 %v5337
    %6837 = vmatprep.subr.bf16.mxu0 %v5346
    %6838 = vmatpush1.bf16.msra.mxu0 %v5345
    %6839 = vmatprep.subr.bf16.mxu0 %v5354
    %6840 = vmatpush1.bf16.msra.mxu0 %v5353
    %6841 = vmatprep.subr.bf16.mxu0 %v5362
    %6842 = vmatpush1.bf16.msra.mxu0 %v5361
    %6843 = vmatprep.subr.bf16.mxu0 %v5370
    %6844 = vmatpush1.bf16.msra.mxu0 %v5369
    %6845 = vmatprep.subr.bf16.mxu0 %v5378
    %6846 = vmatpush1.bf16.msra.mxu0 %v5377
    %6847 = vmatprep.subr.bf16.mxu0 %v5386
    %6848 = vmatpush1.bf16.msra.mxu0 %v5385
    %6849 = vmatprep.subr.bf16.mxu0 %v5394
    %6850 = vmatpush1.bf16.msra.mxu0 %v5393
    %6851 = vmatprep.subr.bf16.mxu0 %v5402
    %6852 = vmatpush1.bf16.msra.mxu0 %v5401
    %6853 = vmatprep.subr.bf16.mxu0 %v5410
    %6854 = vmatpush1.bf16.msra.mxu0 %v5409
    %6855 = vmatprep.subr.bf16.mxu0 %v5418
    %6856 = vmatpush1.bf16.msra.mxu0 %v5417
    %6857 = vmatprep.subr.bf16.mxu0 %v5426
    %6858 = vmatpush1.bf16.msra.mxu0 %v5425
    %6859 = vmatprep.subr.bf16.mxu0 %v5434
    %6860 = vmatpush1.bf16.msra.mxu0 %v5433
    %6861 = vmatprep.subr.bf16.mxu0 %v5442
    %6862 = vmatpush1.bf16.msra.mxu0 %v5441
    %6863 = vmatprep.mubr.bf16.mxu0 %v3218
    %6864 = vmatmul.mubr.bf16.gmra.mrb[0].mxu0 %v3217
    %v6865 = vpop.f32.mrb[0].mxu0
    %v6866 = vadd.f32 %v3766, %v6865
    %v6867 = vpop.f32.mrb[0].mxu0
    %v6868 = vadd.f32 %v3770, %v6867
    %v6869 = vpop.f32.mrb[0].mxu0
    %v6870 = vpop.f32.mrb[0].mxu0
    %6871 = vdwg.mxu0
    %6872 = vmatprep.subr.bf16.mxu0 %v5450
    %6873 = vmatpush1.bf16.msra.mxu0 %v5449
    %6874 = vmatprep.subr.bf16.mxu0 %v5458
    %6875 = vmatpush1.bf16.msra.mxu0 %v5457
    %6876 = vmatprep.subr.bf16.mxu0 %v5466
    %6877 = vmatpush1.bf16.msra.mxu0 %v5465
    %6878 = vmatprep.subr.bf16.mxu0 %v5474
    %6879 = vmatpush1.bf16.msra.mxu0 %v5473
    %6880 = vmatprep.subr.bf16.mxu0 %v5482
    %6881 = vmatpush1.bf16.msra.mxu0 %v5481
    %6882 = vmatprep.subr.bf16.mxu0 %v5490
    %6883 = vmatpush1.bf16.msra.mxu0 %v5489
    %6884 = vmatprep.subr.bf16.mxu0 %v5498
    %6885 = vmatpush1.bf16.msra.mxu0 %v5497
    %6886 = vmatprep.subr.bf16.mxu0 %v5506
    %6887 = vmatpush1.bf16.msra.mxu0 %v5505
    %6888 = vmatprep.subr.bf16.mxu0 %v5514
    %6889 = vmatpush1.bf16.msra.mxu0 %v5513
    %6890 = vmatprep.subr.bf16.mxu0 %v5522
    %6891 = vmatpush1.bf16.msra.mxu0 %v5521
    %6892 = vmatprep.subr.bf16.mxu0 %v5530
    %6893 = vmatpush1.bf16.msra.mxu0 %v5529
    %6894 = vmatprep.subr.bf16.mxu0 %v5538
    %6895 = vmatpush1.bf16.msra.mxu0 %v5537
    %6896 = vmatprep.subr.bf16.mxu0 %v5546
    %6897 = vmatpush1.bf16.msra.mxu0 %v5545
    %6898 = vmatprep.subr.bf16.mxu0 %v5554
    %6899 = vmatpush1.bf16.msra.mxu0 %v5553
    %6900 = vmatprep.subr.bf16.mxu0 %v5562
    %6901 = vmatpush1.bf16.msra.mxu0 %v5561
    %6902 = vmatprep.subr.bf16.mxu0 %v5570
    %6903 = vmatpush1.bf16.msra.mxu0 %v5569
    %6904 = vmatprep.mubr.bf16.mxu0 %v3220
    %6905 = vmatmul.mubr.bf16.gmra.mrb[0].mxu0 %v3219
    %v6906 = vpop.f32.mrb[0].mxu0
    %v6907 = vadd.f32 %v6866, %v6906
    %v6908 = vpop.f32.mrb[0].mxu0
    %v6909 = vadd.f32 %v6868, %v6908
    %v6910 = vpop.f32.mrb[0].mxu0
    %v6911 = vpop.f32.mrb[0].mxu0
    %6912 = vdwg.mxu0
    %6913 = vmatprep.subr.bf16.mxu0 %v5578
    %6914 = vmatpush1.bf16.msra.mxu0 %v5577
    %6915 = vmatprep.subr.bf16.mxu0 %v5586
    %6916 = vmatpush1.bf16.msra.mxu0 %v5585
    %6917 = vmatprep.subr.bf16.mxu0 %v5594
    %6918 = vmatpush1.bf16.msra.mxu0 %v5593
    %6919 = vmatprep.subr.bf16.mxu0 %v5602
    %6920 = vmatpush1.bf16.msra.mxu0 %v5601
    %6921 = vmatprep.subr.bf16.mxu0 %v5610
    %6922 = vmatpush1.bf16.msra.mxu0 %v5609
    %6923 = vmatprep.subr.bf16.mxu0 %v5618
    %6924 = vmatpush1.bf16.msra.mxu0 %v5617
    %6925 = vmatprep.subr.bf16.mxu0 %v5626
    %6926 = vmatpush1.bf16.msra.mxu0 %v5625
    %6927 = vmatprep.subr.bf16.mxu0 %v5634
    %6928 = vmatpush1.bf16.msra.mxu0 %v5633
    %6929 = vmatprep.subr.bf16.mxu0 %v5642
    %6930 = vmatpush1.bf16.msra.mxu0 %v5641
    %6931 = vmatprep.subr.bf16.mxu0 %v5650
    %6932 = vmatpush1.bf16.msra.mxu0 %v5649
    %6933 = vmatprep.subr.bf16.mxu0 %v5658
    %6934 = vmatpush1.bf16.msra.mxu0 %v5657
    %6935 = vmatprep.subr.bf16.mxu0 %v5666
    %6936 = vmatpush1.bf16.msra.mxu0 %v5665
    %6937 = vmatprep.subr.bf16.mxu0 %v5674
    %6938 = vmatpush1.bf16.msra.mxu0 %v5673
    %6939 = vmatprep.subr.bf16.mxu0 %v5682
    %6940 = vmatpush1.bf16.msra.mxu0 %v5681
    %6941 = vmatprep.subr.bf16.mxu0 %v5690
    %6942 = vmatpush1.bf16.msra.mxu0 %v5689
    %6943 = vmatprep.subr.bf16.mxu0 %v5698
    %6944 = vmatpush1.bf16.msra.mxu0 %v5697
    %6945 = vmatprep.mubr.bf16.mxu0 %v3222
    %6946 = vmatmul.mubr.bf16.gmra.mrb[0].mxu0 %v3221
    %v6947 = vpop.f32.mrb[0].mxu0
    %v6948 = vadd.f32 %v6907, %v6947
    %v6949 = vpop.f32.mrb[0].mxu0
    %v6950 = vadd.f32 %v6909, %v6949
    %v6951 = vpop.f32.mrb[0].mxu0
    %v6952 = vpop.f32.mrb[0].mxu0
    %6953 = vdwg.mxu0
    %6954 = vmatprep.subr.bf16.mxu0 %v5706
    %6955 = vmatpush1.bf16.msra.mxu0 %v5705
    %6956 = vmatprep.subr.bf16.mxu0 %v5714
    %6957 = vmatpush1.bf16.msra.mxu0 %v5713
    %6958 = vmatprep.subr.bf16.mxu0 %v5722
    %6959 = vmatpush1.bf16.msra.mxu0 %v5721
    %6960 = vmatprep.subr.bf16.mxu0 %v5730
    %6961 = vmatpush1.bf16.msra.mxu0 %v5729
    %6962 = vmatprep.subr.bf16.mxu0 %v5738
    %6963 = vmatpush1.bf16.msra.mxu0 %v5737
    %6964 = vmatprep.subr.bf16.mxu0 %v5746
    %6965 = vmatpush1.bf16.msra.mxu0 %v5745
    %6966 = vmatprep.subr.bf16.mxu0 %v5754
    %6967 = vmatpush1.bf16.msra.mxu0 %v5753
    %6968 = vmatprep.subr.bf16.mxu0 %v5762
    %6969 = vmatpush1.bf16.msra.mxu0 %v5761
    %6970 = vmatprep.subr.bf16.mxu0 %v5770
    %6971 = vmatpush1.bf16.msra.mxu0 %v5769
    %6972 = vmatprep.subr.bf16.mxu0 %v5778
    %6973 = vmatpush1.bf16.msra.mxu0 %v5777
    %6974 = vmatprep.subr.bf16.mxu0 %v5786
    %6975 = vmatpush1.bf16.msra.mxu0 %v5785
    %6976 = vmatprep.subr.bf16.mxu0 %v5794
    %6977 = vmatpush1.bf16.msra.mxu0 %v5793
    %6978 = vmatprep.subr.bf16.mxu0 %v5802
    %6979 = vmatpush1.bf16.msra.mxu0 %v5801
    %6980 = vmatprep.subr.bf16.mxu0 %v5810
    %6981 = vmatpush1.bf16.msra.mxu0 %v5809
    %6982 = vmatprep.subr.bf16.mxu0 %v5818
    %6983 = vmatpush1.bf16.msra.mxu0 %v5817
    %6984 = vmatprep.subr.bf16.mxu0 %v5826
    %6985 = vmatpush1.bf16.msra.mxu0 %v5825
    %6986 = vmatprep.mubr.bf16.mxu0 %v3224
    %6987 = vmatmul.mubr.bf16.gmra.mrb[0].mxu0 %v3223
    %v6988 = vpop.f32.mrb[0].mxu0
    %v6989 = vadd.f32 %v6948, %v6988
    %v6990 = vpop.f32.mrb[0].mxu0
    %v6991 = vadd.f32 %v6950, %v6990
    %v6992 = vpop.f32.mrb[0].mxu0
    %v6993 = vpop.f32.mrb[0].mxu0
    %6994 = vdwg.mxu0
    %v6995 = vmax.f32 %v6497, 0.0
    %v6996 = vmax.f32 %v6499, 0.0
    %v6997 = vmax.f32 %v6661, 0.0
    %v6998 = vmax.f32 %v6663, 0.0
    %v6999 = vmax.f32 %v6825, 0.0
    %v7000 = vmax.f32 %v6827, 0.0
    %v7001 = vmax.f32 %v6989, 0.0
    %v7002 = vmax.f32 %v6991, 0.0
    %v7003 = vpack.c.bf16 %v6995, %v6995
    %v7004 = vpack.c.bf16 %v6996, %v6996
    %v7005 = vpack.c.bf16 %v6997, %v6997
    %v7006 = vpack.c.bf16 %v6998, %v6998
    %v7007 = vpack.c.bf16 %v6999, %v6999
    %v7008 = vpack.c.bf16 %v7000, %v7000
    %v7009 = vpack.c.bf16 %v7001, %v7001
    %v7010 = vpack.c.bf16 %v7002, %v7002
    %v7011 = vld [vmem:[#allocation10] sm:$0xf]
    %v7012 = vld [vmem:[#allocation10 + $0x4] sm:$0xf]
    %v7013 = vld [vmem:[#allocation10 + $0x8] sm:$0xf]
    %v7014 = vld [vmem:[#allocation10 + $0xc] sm:$0xf]
    %v7015 = vld [vmem:[#allocation10 + $0x10] sm:$0xf]
    %v7016 = vld [vmem:[#allocation10 + $0x14] sm:$0xf]
    %v7017 = vld [vmem:[#allocation10 + $0x18] sm:$0xf]
    %v7018 = vld [vmem:[#allocation10 + $0x1c] sm:$0xf]
    %v7019 = vld [vmem:[#allocation10 + $0x20] sm:$0xf]
    %v7020 = vld [vmem:[#allocation10 + $0x24] sm:$0xf]
    %v7021 = vld [vmem:[#allocation10 + $0x28] sm:$0xf]
    %v7022 = vld [vmem:[#allocation10 + $0x2c] sm:$0xf]
    %v7023 = vld [vmem:[#allocation10 + $0x30] sm:$0xf]
    %v7024 = vld [vmem:[#allocation10 + $0x34] sm:$0xf]
    %v7025 = vld [vmem:[#allocation10 + $0x38] sm:$0xf]
    %v7026 = vld [vmem:[#allocation10 + $0x3c] sm:$0xf]
    %v7027 = vld [vmem:[#allocation10 + $0x40] sm:$0xf]
    %v7028 = vld [vmem:[#allocation10 + $0x44] sm:$0xf]
    %v7029 = vld [vmem:[#allocation10 + $0x48] sm:$0xf]
    %v7030 = vld [vmem:[#allocation10 + $0x4c] sm:$0xf]
    %v7031 = vld [vmem:[#allocation10 + $0x50] sm:$0xf]
    %v7032 = vld [vmem:[#allocation10 + $0x54] sm:$0xf]
    %v7033 = vld [vmem:[#allocation10 + $0x58] sm:$0xf]
    %v7034 = vld [vmem:[#allocation10 + $0x5c] sm:$0xf]
    %v7035 = vld [vmem:[#allocation10 + $0x60] sm:$0xf]
    %v7036 = vld [vmem:[#allocation10 + $0x64] sm:$0xf]
    %v7037 = vld [vmem:[#allocation10 + $0x68] sm:$0xf]
    %v7038 = vld [vmem:[#allocation10 + $0x6c] sm:$0xf]
    %v7039 = vld [vmem:[#allocation10 + $0x70] sm:$0xf]
    %v7040 = vld [vmem:[#allocation10 + $0x74] sm:$0xf]
    %v7041 = vld [vmem:[#allocation10 + $0x78] sm:$0xf]
    %v7042 = vld [vmem:[#allocation10 + $0x7c] sm:$0xf]
    %v7043 = vld [vmem:[#allocation10 + $0x80] sm:$0xf]
    %v7044 = vld [vmem:[#allocation10 + $0x84] sm:$0xf]
    %v7045 = vld [vmem:[#allocation10 + $0x88] sm:$0xf]
    %v7046 = vld [vmem:[#allocation10 + $0x8c] sm:$0xf]
    %v7047 = vld [vmem:[#allocation10 + $0x90] sm:$0xf]
    %v7048 = vld [vmem:[#allocation10 + $0x94] sm:$0xf]
    %v7049 = vld [vmem:[#allocation10 + $0x98] sm:$0xf]
    %v7050 = vld [vmem:[#allocation10 + $0x9c] sm:$0xf]
    %v7051 = vld [vmem:[#allocation10 + $0xa0] sm:$0xf]
    %v7052 = vld [vmem:[#allocation10 + $0xa4] sm:$0xf]
    %v7053 = vld [vmem:[#allocation10 + $0xa8] sm:$0xf]
    %v7054 = vld [vmem:[#allocation10 + $0xac] sm:$0xf]
    %v7055 = vld [vmem:[#allocation10 + $0xb0] sm:$0xf]
    %v7056 = vld [vmem:[#allocation10 + $0xb4] sm:$0xf]
    %v7057 = vld [vmem:[#allocation10 + $0xb8] sm:$0xf]
    %v7058 = vld [vmem:[#allocation10 + $0xbc] sm:$0xf]
    %v7059 = vld [vmem:[#allocation10 + $0xc0] sm:$0xf]
    %v7060 = vld [vmem:[#allocation10 + $0xc4] sm:$0xf]
    %v7061 = vld [vmem:[#allocation10 + $0xc8] sm:$0xf]
    %v7062 = vld [vmem:[#allocation10 + $0xcc] sm:$0xf]
    %v7063 = vld [vmem:[#allocation10 + $0xd0] sm:$0xf]
    %v7064 = vld [vmem:[#allocation10 + $0xd4] sm:$0xf]
    %v7065 = vld [vmem:[#allocation10 + $0xd8] sm:$0xf]
    %v7066 = vld [vmem:[#allocation10 + $0xdc] sm:$0xf]
    %v7067 = vld [vmem:[#allocation10 + $0xe0] sm:$0xf]
    %v7068 = vld [vmem:[#allocation10 + $0xe4] sm:$0xf]
    %v7069 = vld [vmem:[#allocation10 + $0xe8] sm:$0xf]
    %v7070 = vld [vmem:[#allocation10 + $0xec] sm:$0xf]
    %v7071 = vld [vmem:[#allocation10 + $0xf0] sm:$0xf]
    %v7072 = vld [vmem:[#allocation10 + $0xf4] sm:$0xf]
    %v7073 = vld [vmem:[#allocation10 + $0xf8] sm:$0xf]
    %v7074 = vld [vmem:[#allocation10 + $0xfc] sm:$0xf]
    %v7075 = vld [vmem:[#allocation10 + $0x100] sm:$0xf]
    %v7076 = vld [vmem:[#allocation10 + $0x104] sm:$0xf]
    %v7077 = vld [vmem:[#allocation10 + $0x108] sm:$0xf]
    %v7078 = vld [vmem:[#allocation10 + $0x10c] sm:$0xf]
    %v7079 = vld [vmem:[#allocation10 + $0x110] sm:$0xf]
    %v7080 = vld [vmem:[#allocation10 + $0x114] sm:$0xf]
    %v7081 = vld [vmem:[#allocation10 + $0x118] sm:$0xf]
    %v7082 = vld [vmem:[#allocation10 + $0x11c] sm:$0xf]
    %v7083 = vld [vmem:[#allocation10 + $0x120] sm:$0xf]
    %v7084 = vld [vmem:[#allocation10 + $0x124] sm:$0xf]
    %v7085 = vld [vmem:[#allocation10 + $0x128] sm:$0xf]
    %v7086 = vld [vmem:[#allocation10 + $0x12c] sm:$0xf]
    %v7087 = vld [vmem:[#allocation10 + $0x130] sm:$0xf]
    %v7088 = vld [vmem:[#allocation10 + $0x134] sm:$0xf]
    %v7089 = vld [vmem:[#allocation10 + $0x138] sm:$0xf]
    %v7090 = vld [vmem:[#allocation10 + $0x13c] sm:$0xf]
    %v7091 = vld [vmem:[#allocation10 + $0x140] sm:$0xf]
    %v7092 = vld [vmem:[#allocation10 + $0x144] sm:$0xf]
    %v7093 = vld [vmem:[#allocation10 + $0x148] sm:$0xf]
    %v7094 = vld [vmem:[#allocation10 + $0x14c] sm:$0xf]
    %v7095 = vld [vmem:[#allocation10 + $0x150] sm:$0xf]
    %v7096 = vld [vmem:[#allocation10 + $0x154] sm:$0xf]
    %v7097 = vld [vmem:[#allocation10 + $0x158] sm:$0xf]
    %v7098 = vld [vmem:[#allocation10 + $0x15c] sm:$0xf]
    %v7099 = vld [vmem:[#allocation10 + $0x160] sm:$0xf]
    %v7100 = vld [vmem:[#allocation10 + $0x164] sm:$0xf]
    %v7101 = vld [vmem:[#allocation10 + $0x168] sm:$0xf]
    %v7102 = vld [vmem:[#allocation10 + $0x16c] sm:$0xf]
    %v7103 = vld [vmem:[#allocation10 + $0x170] sm:$0xf]
    %v7104 = vld [vmem:[#allocation10 + $0x174] sm:$0xf]
    %v7105 = vld [vmem:[#allocation10 + $0x178] sm:$0xf]
    %v7106 = vld [vmem:[#allocation10 + $0x17c] sm:$0xf]
    %v7107 = vld [vmem:[#allocation10 + $0x180] sm:$0xf]
    %v7108 = vld [vmem:[#allocation10 + $0x184] sm:$0xf]
    %v7109 = vld [vmem:[#allocation10 + $0x188] sm:$0xf]
    %v7110 = vld [vmem:[#allocation10 + $0x18c] sm:$0xf]
    %v7111 = vld [vmem:[#allocation10 + $0x190] sm:$0xf]
    %v7112 = vld [vmem:[#allocation10 + $0x194] sm:$0xf]
    %v7113 = vld [vmem:[#allocation10 + $0x198] sm:$0xf]
    %v7114 = vld [vmem:[#allocation10 + $0x19c] sm:$0xf]
    %v7115 = vld [vmem:[#allocation10 + $0x1a0] sm:$0xf]
    %v7116 = vld [vmem:[#allocation10 + $0x1a4] sm:$0xf]
    %v7117 = vld [vmem:[#allocation10 + $0x1a8] sm:$0xf]
    %v7118 = vld [vmem:[#allocation10 + $0x1ac] sm:$0xf]
    %v7119 = vld [vmem:[#allocation10 + $0x1b0] sm:$0xf]
    %v7120 = vld [vmem:[#allocation10 + $0x1b4] sm:$0xf]
    %v7121 = vld [vmem:[#allocation10 + $0x1b8] sm:$0xf]
    %v7122 = vld [vmem:[#allocation10 + $0x1bc] sm:$0xf]
    %v7123 = vld [vmem:[#allocation10 + $0x1c0] sm:$0xf]
    %v7124 = vld [vmem:[#allocation10 + $0x1c4] sm:$0xf]
    %v7125 = vld [vmem:[#allocation10 + $0x1c8] sm:$0xf]
    %v7126 = vld [vmem:[#allocation10 + $0x1cc] sm:$0xf]
    %v7127 = vld [vmem:[#allocation10 + $0x1d0] sm:$0xf]
    %v7128 = vld [vmem:[#allocation10 + $0x1d4] sm:$0xf]
    %v7129 = vld [vmem:[#allocation10 + $0x1d8] sm:$0xf]
    %v7130 = vld [vmem:[#allocation10 + $0x1dc] sm:$0xf]
    %v7131 = vld [vmem:[#allocation10 + $0x1e0] sm:$0xf]
    %v7132 = vld [vmem:[#allocation10 + $0x1e4] sm:$0xf]
    %v7133 = vld [vmem:[#allocation10 + $0x1e8] sm:$0xf]
    %v7134 = vld [vmem:[#allocation10 + $0x1ec] sm:$0xf]
    %v7135 = vld [vmem:[#allocation10 + $0x1f0] sm:$0xf]
    %v7136 = vld [vmem:[#allocation10 + $0x1f4] sm:$0xf]
    %v7137 = vld [vmem:[#allocation10 + $0x1f8] sm:$0xf]
    %v7138 = vld [vmem:[#allocation10 + $0x1fc] sm:$0xf]
    %v7139 = vld [vmem:[#allocation11] sm:$0x1]
    %v7141 = vlaneseq
    %v7142 = vshrl.u32 %v7141, 7
    %v7143 = vsub.s32 0, %v7142
    %v7144 = vrot.slane %v7139, %v7143
    %v7274 = vunpack.c.l.b16 %v7011
    %v7275 = vunpack.c.l.b16 %v7012
    %v7276 = vunpack.c.l.b16 %v7013
    %v7277 = vunpack.c.l.b16 %v7014
    %v7278 = vunpack.c.l.b16 %v7015
    %v7279 = vunpack.c.l.b16 %v7016
    %v7280 = vunpack.c.l.b16 %v7017
    %v7281 = vunpack.c.l.b16 %v7018
    %v7282 = vunpack.c.l.b16 %v7019
    %v7283 = vunpack.c.l.b16 %v7020
    %v7284 = vunpack.c.l.b16 %v7021
    %v7285 = vunpack.c.l.b16 %v7022
    %v7286 = vunpack.c.l.b16 %v7023
    %v7287 = vunpack.c.l.b16 %v7024
    %v7288 = vunpack.c.l.b16 %v7025
    %v7289 = vunpack.c.l.b16 %v7026
    %v7290 = vunpack.c.l.b16 %v7027
    %v7291 = vunpack.c.l.b16 %v7028
    %v7292 = vunpack.c.l.b16 %v7029
    %v7293 = vunpack.c.l.b16 %v7030
    %v7294 = vunpack.c.l.b16 %v7031
    %v7295 = vunpack.c.l.b16 %v7032
    %v7296 = vunpack.c.l.b16 %v7033
    %v7297 = vunpack.c.l.b16 %v7034
    %v7298 = vunpack.c.l.b16 %v7035
    %v7299 = vunpack.c.l.b16 %v7036
    %v7300 = vunpack.c.l.b16 %v7037
    %v7301 = vunpack.c.l.b16 %v7038
    %v7302 = vunpack.c.l.b16 %v7039
    %v7303 = vunpack.c.l.b16 %v7040
    %v7304 = vunpack.c.l.b16 %v7041
    %v7305 = vunpack.c.l.b16 %v7042
    %v7306 = vunpack.c.l.b16 %v7043
    %v7307 = vunpack.c.l.b16 %v7044
    %v7308 = vunpack.c.l.b16 %v7045
    %v7309 = vunpack.c.l.b16 %v7046
    %v7310 = vunpack.c.l.b16 %v7047
    %v7311 = vunpack.c.l.b16 %v7048
    %v7312 = vunpack.c.l.b16 %v7049
    %v7313 = vunpack.c.l.b16 %v7050
    %v7314 = vunpack.c.l.b16 %v7051
    %v7315 = vunpack.c.l.b16 %v7052
    %v7316 = vunpack.c.l.b16 %v7053
    %v7317 = vunpack.c.l.b16 %v7054
    %v7318 = vunpack.c.l.b16 %v7055
    %v7319 = vunpack.c.l.b16 %v7056
    %v7320 = vunpack.c.l.b16 %v7057
    %v7321 = vunpack.c.l.b16 %v7058
    %v7322 = vunpack.c.l.b16 %v7059
    %v7323 = vunpack.c.l.b16 %v7060
    %v7324 = vunpack.c.l.b16 %v7061
    %v7325 = vunpack.c.l.b16 %v7062
    %v7326 = vunpack.c.l.b16 %v7063
    %v7327 = vunpack.c.l.b16 %v7064
    %v7328 = vunpack.c.l.b16 %v7065
    %v7329 = vunpack.c.l.b16 %v7066
    %v7330 = vunpack.c.l.b16 %v7067
    %v7331 = vunpack.c.l.b16 %v7068
    %v7332 = vunpack.c.l.b16 %v7069
    %v7333 = vunpack.c.l.b16 %v7070
    %v7334 = vunpack.c.l.b16 %v7071
    %v7335 = vunpack.c.l.b16 %v7072
    %v7336 = vunpack.c.l.b16 %v7073
    %v7337 = vunpack.c.l.b16 %v7074
    %v7338 = vunpack.c.l.b16 %v7075
    %v7339 = vunpack.c.l.b16 %v7076
    %v7340 = vunpack.c.l.b16 %v7077
    %v7341 = vunpack.c.l.b16 %v7078
    %v7342 = vunpack.c.l.b16 %v7079
    %v7343 = vunpack.c.l.b16 %v7080
    %v7344 = vunpack.c.l.b16 %v7081
    %v7345 = vunpack.c.l.b16 %v7082
    %v7346 = vunpack.c.l.b16 %v7083
    %v7347 = vunpack.c.l.b16 %v7084
    %v7348 = vunpack.c.l.b16 %v7085
    %v7349 = vunpack.c.l.b16 %v7086
    %v7350 = vunpack.c.l.b16 %v7087
    %v7351 = vunpack.c.l.b16 %v7088
    %v7352 = vunpack.c.l.b16 %v7089
    %v7353 = vunpack.c.l.b16 %v7090
    %v7354 = vunpack.c.l.b16 %v7091
    %v7355 = vunpack.c.l.b16 %v7092
    %v7356 = vunpack.c.l.b16 %v7093
    %v7357 = vunpack.c.l.b16 %v7094
    %v7358 = vunpack.c.l.b16 %v7095
    %v7359 = vunpack.c.l.b16 %v7096
    %v7360 = vunpack.c.l.b16 %v7097
    %v7361 = vunpack.c.l.b16 %v7098
    %v7362 = vunpack.c.l.b16 %v7099
    %v7363 = vunpack.c.l.b16 %v7100
    %v7364 = vunpack.c.l.b16 %v7101
    %v7365 = vunpack.c.l.b16 %v7102
    %v7366 = vunpack.c.l.b16 %v7103
    %v7367 = vunpack.c.l.b16 %v7104
    %v7368 = vunpack.c.l.b16 %v7105
    %v7369 = vunpack.c.l.b16 %v7106
    %v7370 = vunpack.c.l.b16 %v7107
    %v7371 = vunpack.c.l.b16 %v7108
    %v7372 = vunpack.c.l.b16 %v7109
    %v7373 = vunpack.c.l.b16 %v7110
    %v7374 = vunpack.c.l.b16 %v7111
    %v7375 = vunpack.c.l.b16 %v7112
    %v7376 = vunpack.c.l.b16 %v7113
    %v7377 = vunpack.c.l.b16 %v7114
    %v7378 = vunpack.c.l.b16 %v7115
    %v7379 = vunpack.c.l.b16 %v7116
    %v7380 = vunpack.c.l.b16 %v7117
    %v7381 = vunpack.c.l.b16 %v7118
    %v7382 = vunpack.c.l.b16 %v7119
    %v7383 = vunpack.c.l.b16 %v7120
    %v7384 = vunpack.c.l.b16 %v7121
    %v7385 = vunpack.c.l.b16 %v7122
    %v7386 = vunpack.c.l.b16 %v7123
    %v7387 = vunpack.c.l.b16 %v7124
    %v7388 = vunpack.c.l.b16 %v7125
    %v7389 = vunpack.c.l.b16 %v7126
    %v7390 = vunpack.c.l.b16 %v7127
    %v7391 = vunpack.c.l.b16 %v7128
    %v7392 = vunpack.c.l.b16 %v7129
    %v7393 = vunpack.c.l.b16 %v7130
    %v7394 = vunpack.c.l.b16 %v7131
    %v7395 = vunpack.c.l.b16 %v7132
    %v7396 = vunpack.c.l.b16 %v7133
    %v7397 = vunpack.c.l.b16 %v7134
    %v7398 = vunpack.c.l.b16 %v7135
    %v7399 = vunpack.c.l.b16 %v7136
    %v7400 = vunpack.c.l.b16 %v7137
    %v7401 = vunpack.c.l.b16 %v7138
    %v7402 = vpack.c.b16 %v7275, %v7274
    %v7403 = vpack.c.b16 %v7277, %v7276
    %v7404 = vpack.c.b16 %v7279, %v7278
    %v7405 = vpack.c.b16 %v7281, %v7280
    %v7406 = vpack.c.b16 %v7283, %v7282
    %v7407 = vpack.c.b16 %v7285, %v7284
    %v7408 = vpack.c.b16 %v7287, %v7286
    %v7409 = vpack.c.b16 %v7289, %v7288
    %v7410 = vpack.c.b16 %v7291, %v7290
    %v7411 = vpack.c.b16 %v7293, %v7292
    %v7412 = vpack.c.b16 %v7295, %v7294
    %v7413 = vpack.c.b16 %v7297, %v7296
    %v7414 = vpack.c.b16 %v7299, %v7298
    %v7415 = vpack.c.b16 %v7301, %v7300
    %v7416 = vpack.c.b16 %v7303, %v7302
    %v7417 = vpack.c.b16 %v7305, %v7304
    %v7418 = vpack.c.b16 %v7307, %v7306
    %v7419 = vpack.c.b16 %v7309, %v7308
    %v7420 = vpack.c.b16 %v7311, %v7310
    %v7421 = vpack.c.b16 %v7313, %v7312
    %v7422 = vpack.c.b16 %v7315, %v7314
    %v7423 = vpack.c.b16 %v7317, %v7316
    %v7424 = vpack.c.b16 %v7319, %v7318
    %v7425 = vpack.c.b16 %v7321, %v7320
    %v7426 = vpack.c.b16 %v7323, %v7322
    %v7427 = vpack.c.b16 %v7325, %v7324
    %v7428 = vpack.c.b16 %v7327, %v7326
    %v7429 = vpack.c.b16 %v7329, %v7328
    %v7430 = vpack.c.b16 %v7331, %v7330
    %v7431 = vpack.c.b16 %v7333, %v7332
    %v7432 = vpack.c.b16 %v7335, %v7334
    %v7433 = vpack.c.b16 %v7337, %v7336
    %v7434 = vpack.c.b16 %v7339, %v7338
    %v7435 = vpack.c.b16 %v7341, %v7340
    %v7436 = vpack.c.b16 %v7343, %v7342
    %v7437 = vpack.c.b16 %v7345, %v7344
    %v7438 = vpack.c.b16 %v7347, %v7346
    %v7439 = vpack.c.b16 %v7349, %v7348
    %v7440 = vpack.c.b16 %v7351, %v7350
    %v7441 = vpack.c.b16 %v7353, %v7352
    %v7442 = vpack.c.b16 %v7355, %v7354
    %v7443 = vpack.c.b16 %v7357, %v7356
    %v7444 = vpack.c.b16 %v7359, %v7358
    %v7445 = vpack.c.b16 %v7361, %v7360
    %v7446 = vpack.c.b16 %v7363, %v7362
    %v7447 = vpack.c.b16 %v7365, %v7364
    %v7448 = vpack.c.b16 %v7367, %v7366
    %v7449 = vpack.c.b16 %v7369, %v7368
    %v7450 = vpack.c.b16 %v7371, %v7370
    %v7451 = vpack.c.b16 %v7373, %v7372
    %v7452 = vpack.c.b16 %v7375, %v7374
    %v7453 = vpack.c.b16 %v7377, %v7376
    %v7454 = vpack.c.b16 %v7379, %v7378
    %v7455 = vpack.c.b16 %v7381, %v7380
    %v7456 = vpack.c.b16 %v7383, %v7382
    %v7457 = vpack.c.b16 %v7385, %v7384
    %v7458 = vpack.c.b16 %v7387, %v7386
    %v7459 = vpack.c.b16 %v7389, %v7388
    %v7460 = vpack.c.b16 %v7391, %v7390
    %v7461 = vpack.c.b16 %v7393, %v7392
    %v7462 = vpack.c.b16 %v7395, %v7394
    %v7463 = vpack.c.b16 %v7397, %v7396
    %v7464 = vpack.c.b16 %v7399, %v7398
    %v7465 = vpack.c.b16 %v7401, %v7400
    %7530 = vmatprep.subr.bf16.mxu0 0
    %7531 = vmatpush1.bf16.msra.mxu0 %v7402
    %7532 = vmatprep.subr.bf16.mxu0 0
    %7533 = vmatpush1.bf16.msra.mxu0 %v7403
    %7534 = vmatprep.subr.bf16.mxu0 0
    %7535 = vmatpush1.bf16.msra.mxu0 %v7404
    %7536 = vmatprep.subr.bf16.mxu0 0
    %7537 = vmatpush1.bf16.msra.mxu0 %v7405
    %7538 = vmatprep.subr.bf16.mxu0 0
    %7539 = vmatpush1.bf16.msra.mxu0 %v7406
    %7540 = vmatprep.subr.bf16.mxu0 0
    %7541 = vmatpush1.bf16.msra.mxu0 %v7407
    %7542 = vmatprep.subr.bf16.mxu0 0
    %7543 = vmatpush1.bf16.msra.mxu0 %v7408
    %7544 = vmatprep.subr.bf16.mxu0 0
    %7545 = vmatpush1.bf16.msra.mxu0 %v7409
    %7546 = vmatprep.subr.bf16.mxu0 0
    %7547 = vmatpush1.bf16.msra.mxu0 %v7410
    %7548 = vmatprep.subr.bf16.mxu0 0
    %7549 = vmatpush1.bf16.msra.mxu0 %v7411
    %7550 = vmatprep.subr.bf16.mxu0 0
    %7551 = vmatpush1.bf16.msra.mxu0 %v7412
    %7552 = vmatprep.subr.bf16.mxu0 0
    %7553 = vmatpush1.bf16.msra.mxu0 %v7413
    %7554 = vmatprep.subr.bf16.mxu0 0
    %7555 = vmatpush1.bf16.msra.mxu0 %v7414
    %7556 = vmatprep.subr.bf16.mxu0 0
    %7557 = vmatpush1.bf16.msra.mxu0 %v7415
    %7558 = vmatprep.subr.bf16.mxu0 0
    %7559 = vmatpush1.bf16.msra.mxu0 %v7416
    %7560 = vmatprep.subr.bf16.mxu0 0
    %7561 = vmatpush1.bf16.msra.mxu0 %v7417
    %7562 = vmatprep.mubr.bf16.mxu0 %v7004
    %7563 = vmatmul.mubr.bf16.gmra.mrb[0].mxu0 %v7003
    %v7564 = vpop.f32.mrb[0].mxu0
    %v7565 = vadd.f32 %v7144, %v7564
    %v7566 = vpop.f32.mrb[0].mxu0
    %v7567 = vpop.f32.mrb[0].mxu0
    %v7568 = vpop.f32.mrb[0].mxu0
    %7569 = vdwg.mxu0
    %7570 = vmatprep.subr.bf16.mxu0 0
    %7571 = vmatpush1.bf16.msra.mxu0 %v7418
    %7572 = vmatprep.subr.bf16.mxu0 0
    %7573 = vmatpush1.bf16.msra.mxu0 %v7419
    %7574 = vmatprep.subr.bf16.mxu0 0
    %7575 = vmatpush1.bf16.msra.mxu0 %v7420
    %7576 = vmatprep.subr.bf16.mxu0 0
    %7577 = vmatpush1.bf16.msra.mxu0 %v7421
    %7578 = vmatprep.subr.bf16.mxu0 0
    %7579 = vmatpush1.bf16.msra.mxu0 %v7422
    %7580 = vmatprep.subr.bf16.mxu0 0
    %7581 = vmatpush1.bf16.msra.mxu0 %v7423
    %7582 = vmatprep.subr.bf16.mxu0 0
    %7583 = vmatpush1.bf16.msra.mxu0 %v7424
    %7584 = vmatprep.subr.bf16.mxu0 0
    %7585 = vmatpush1.bf16.msra.mxu0 %v7425
    %7586 = vmatprep.subr.bf16.mxu0 0
    %7587 = vmatpush1.bf16.msra.mxu0 %v7426
    %7588 = vmatprep.subr.bf16.mxu0 0
    %7589 = vmatpush1.bf16.msra.mxu0 %v7427
    %7590 = vmatprep.subr.bf16.mxu0 0
    %7591 = vmatpush1.bf16.msra.mxu0 %v7428
    %7592 = vmatprep.subr.bf16.mxu0 0
    %7593 = vmatpush1.bf16.msra.mxu0 %v7429
    %7594 = vmatprep.subr.bf16.mxu0 0
    %7595 = vmatpush1.bf16.msra.mxu0 %v7430
    %7596 = vmatprep.subr.bf16.mxu0 0
    %7597 = vmatpush1.bf16.msra.mxu0 %v7431
    %7598 = vmatprep.subr.bf16.mxu0 0
    %7599 = vmatpush1.bf16.msra.mxu0 %v7432
    %7600 = vmatprep.subr.bf16.mxu0 0
    %7601 = vmatpush1.bf16.msra.mxu0 %v7433
    %7602 = vmatprep.mubr.bf16.mxu0 %v7006
    %7603 = vmatmul.mubr.bf16.gmra.mrb[0].mxu0 %v7005
    %v7604 = vpop.f32.mrb[0].mxu0
    %v7605 = vadd.f32 %v7565, %v7604
    %v7606 = vpop.f32.mrb[0].mxu0
    %v7607 = vpop.f32.mrb[0].mxu0
    %v7608 = vpop.f32.mrb[0].mxu0
    %7609 = vdwg.mxu0
    %7610 = vmatprep.subr.bf16.mxu0 0
    %7611 = vmatpush1.bf16.msra.mxu0 %v7434
    %7612 = vmatprep.subr.bf16.mxu0 0
    %7613 = vmatpush1.bf16.msra.mxu0 %v7435
    %7614 = vmatprep.subr.bf16.mxu0 0
    %7615 = vmatpush1.bf16.msra.mxu0 %v7436
    %7616 = vmatprep.subr.bf16.mxu0 0
    %7617 = vmatpush1.bf16.msra.mxu0 %v7437
    %7618 = vmatprep.subr.bf16.mxu0 0
    %7619 = vmatpush1.bf16.msra.mxu0 %v7438
    %7620 = vmatprep.subr.bf16.mxu0 0
    %7621 = vmatpush1.bf16.msra.mxu0 %v7439
    %7622 = vmatprep.subr.bf16.mxu0 0
    %7623 = vmatpush1.bf16.msra.mxu0 %v7440
    %7624 = vmatprep.subr.bf16.mxu0 0
    %7625 = vmatpush1.bf16.msra.mxu0 %v7441
    %7626 = vmatprep.subr.bf16.mxu0 0
    %7627 = vmatpush1.bf16.msra.mxu0 %v7442
    %7628 = vmatprep.subr.bf16.mxu0 0
    %7629 = vmatpush1.bf16.msra.mxu0 %v7443
    %7630 = vmatprep.subr.bf16.mxu0 0
    %7631 = vmatpush1.bf16.msra.mxu0 %v7444
    %7632 = vmatprep.subr.bf16.mxu0 0
    %7633 = vmatpush1.bf16.msra.mxu0 %v7445
    %7634 = vmatprep.subr.bf16.mxu0 0
    %7635 = vmatpush1.bf16.msra.mxu0 %v7446
    %7636 = vmatprep.subr.bf16.mxu0 0
    %7637 = vmatpush1.bf16.msra.mxu0 %v7447
    %7638 = vmatprep.subr.bf16.mxu0 0
    %7639 = vmatpush1.bf16.msra.mxu0 %v7448
    %7640 = vmatprep.subr.bf16.mxu0 0
    %7641 = vmatpush1.bf16.msra.mxu0 %v7449
    %7642 = vmatprep.mubr.bf16.mxu0 %v7008
    %7643 = vmatmul.mubr.bf16.gmra.mrb[0].mxu0 %v7007
    %v7644 = vpop.f32.mrb[0].mxu0
    %v7645 = vadd.f32 %v7605, %v7644
    %v7646 = vpop.f32.mrb[0].mxu0
    %v7647 = vpop.f32.mrb[0].mxu0
    %v7648 = vpop.f32.mrb[0].mxu0
    %7649 = vdwg.mxu0
    %7650 = vmatprep.subr.bf16.mxu0 0
    %7651 = vmatpush1.bf16.msra.mxu0 %v7450
    %7652 = vmatprep.subr.bf16.mxu0 0
    %7653 = vmatpush1.bf16.msra.mxu0 %v7451
    %7654 = vmatprep.subr.bf16.mxu0 0
    %7655 = vmatpush1.bf16.msra.mxu0 %v7452
    %7656 = vmatprep.subr.bf16.mxu0 0
    %7657 = vmatpush1.bf16.msra.mxu0 %v7453
    %7658 = vmatprep.subr.bf16.mxu0 0
    %7659 = vmatpush1.bf16.msra.mxu0 %v7454
    %7660 = vmatprep.subr.bf16.mxu0 0
    %7661 = vmatpush1.bf16.msra.mxu0 %v7455
    %7662 = vmatprep.subr.bf16.mxu0 0
    %7663 = vmatpush1.bf16.msra.mxu0 %v7456
    %7664 = vmatprep.subr.bf16.mxu0 0
    %7665 = vmatpush1.bf16.msra.mxu0 %v7457
    %7666 = vmatprep.subr.bf16.mxu0 0
    %7667 = vmatpush1.bf16.msra.mxu0 %v7458
    %7668 = vmatprep.subr.bf16.mxu0 0
    %7669 = vmatpush1.bf16.msra.mxu0 %v7459
    %7670 = vmatprep.subr.bf16.mxu0 0
    %7671 = vmatpush1.bf16.msra.mxu0 %v7460
    %7672 = vmatprep.subr.bf16.mxu0 0
    %7673 = vmatpush1.bf16.msra.mxu0 %v7461
    %7674 = vmatprep.subr.bf16.mxu0 0
    %7675 = vmatpush1.bf16.msra.mxu0 %v7462
    %7676 = vmatprep.subr.bf16.mxu0 0
    %7677 = vmatpush1.bf16.msra.mxu0 %v7463
    %7678 = vmatprep.subr.bf16.mxu0 0
    %7679 = vmatpush1.bf16.msra.mxu0 %v7464
    %7680 = vmatprep.subr.bf16.mxu0 0
    %7681 = vmatpush1.bf16.msra.mxu0 %v7465
    %7682 = vmatprep.mubr.bf16.mxu0 %v7010
    %7683 = vmatmul.mubr.bf16.gmra.mrb[0].mxu0 %v7009
    %v7684 = vpop.f32.mrb[0].mxu0
    %v7685 = vadd.f32 %v7645, %v7684
    %v7686 = vpop.f32.mrb[0].mxu0
    %v7687 = vpop.f32.mrb[0].mxu0
    %v7688 = vpop.f32.mrb[0].mxu0
    %7689 = vdwg.mxu0
    %v7690 = vmax.f32 %v7685, 0.0
    %7691 = vst [vmem:[#allocation13] sm:$0x3] %v7690
    // Predicated region
    $region54: #{mlp_forward.1} parent=1 // pred_check
      _
    $region55: #{mlp_forward.1} parent=1 // pred_check_branch
      %7693 = sbr.rel (0) target = $region57
    $region56: #{mlp_forward.1} parent=1 // pred_region
      %s7695 = ssub.s32 32, 32
      %7696 = vsyncadd [#allocation4], %s7695
      %s7698 = sshll.u32 [#allocation13], 4
      %s7699 = int_to_ptr.vmem [resolvable:$true] %s7698
      %7701 = dma.vmem_to_hbm [thread:$0]  %s7699, 32, %s7, [#allocation4]
    $region57: #{mlp_forward.1} parent=1 // pred_fallthru
      _
    // Predicated region
    $region58: #{mlp_forward.1} parent=1 // pred_check
      _
    $region59: #{mlp_forward.1} parent=1 // pred_check_branch
      %7703 = sbr.rel (0) target = $region61
    $region60: #{mlp_forward.1} parent=1 // pred_region
      %7704 = dma.done [#allocation4], 32
    $region61: #{mlp_forward.1} parent=1 // pred_fallthru
      _
    %7705 = vsyncpa [#allocation3], 1
    %7706 = vsyncpa [#allocation6], 1
    %7707 = vsyncpa [#allocation9], 1
    %7708 = vsyncpa [#allocation12], 1
    %7709 = vsyncpa [#allocation4], 1

</llo_original>
